<compile_context>
chip_gen: v7x
topology: tpu7x:2x2x1
jax: 0.10.0
libtpu: 0.0.40
codegen_flags: <defaults>
</compile_context>

<pallas_src>
import functools
import math

import jax
import jax.numpy as jnp
from jax import lax
from jax.experimental import pallas as pl
from jax.experimental.pallas import tpu as pltpu

LANES = 128
SUBLANES = 8


def _matpow(r, p):
    """r**p for static int p >= 1, binary exponentiation, unrolled at trace time."""
    result = None
    base = r
    while p > 0:
        if p & 1:
            result = base if result is None else jnp.dot(
                result, base, preferred_element_type=jnp.float32)
        p >>= 1
        if p > 0:
            base = jnp.dot(base, base, preferred_element_type=jnp.float32)
    return result


def propagator_kernel(dt_ref, n0_ref, m_ref, out_ref, *, substeps):
    """Single invocation integrates ALL observed-time intervals.

    Layout: y is an (8, 128) f32 tile; row 0 holds the flattened (clone, pop)
    state zero-padded to 128 lanes, rows 1..7 stay zero.  m_ref is the fused
    (128, 128) generator M = block_diag(K1^2*mask) + diag(K2 - rowsum), so one
    derivative evaluation is a single MXU matmul.  Each interval applies the
    exact `substeps`-step RK4 propagator R**substeps built from dt_ref[i].
    """
    num_intervals = out_ref.shape[0]

    m = m_ref[...]                       # (128,128) fused generator, read once

    # 128x128 identity built on the VPU (iota compare) — avoids an extra input DMA.
    row = lax.broadcasted_iota(jnp.int32, (LANES, LANES), 0)
    col = lax.broadcasted_iota(jnp.int32, (LANES, LANES), 1)
    eye = (row == col).astype(jnp.float32)

    y = n0_ref[...]                      # (8,128) carried state, lives in vregs

    # Intervals are inherently sequential (state carry); unrolled at trace time.
    for i in range(num_intervals):
        h = dt_ref[i]                    # per-substep step size (SMEM scalar read)
        b = h * m
        b2 = jnp.dot(b, b, preferred_element_type=jnp.float32)
        b3 = jnp.dot(b2, b, preferred_element_type=jnp.float32)
        b4 = jnp.dot(b3, b, preferred_element_type=jnp.float32)
        # One RK4 substep of a linear autonomous ODE is exactly y <- y @ r.
        r = eye + b + 0.5 * b2 + (1.0 / 6.0) * b3 + (1.0 / 24.0) * b4
        # `substeps` RK4 substeps == one multiply by r**substeps (binary exponentiation).
        p = _matpow(r, substeps)
        y = jnp.dot(y, p, preferred_element_type=jnp.float32)
        out_ref[i] = y                   # single lane-dense (8,128) store per interval


def ode_solve(N0, t_observed, K1, K2, mask, substeps=20):
    """Returns trajectory of shape (len(t_observed), C, P); out[0] == N0."""
    C, P = N0.shape
    T = t_observed.shape[0]
    n = C * P
    assert n <= LANES, "block-diagonal packing requires num_clones*num_pops <= 128"
    assert T >= 2
    num_intervals = T - 1

    # ---- Hoisted, solve-invariant precompute (plain JAX, runs once) ----------
    A = jnp.square(K1) * mask[None, :, :]            # (C, P, P) inflow rates
    lin = K2 - jnp.sum(A, axis=2)                    # (C, P) self term - outflow rate

    # Fused block-diagonal generator with the linear term folded onto the diagonal.
    blk = jax.scipy.linalg.block_diag(*A) + jnp.diag(lin.reshape(-1))   # (C*P, C*P)
    m_big = jnp.zeros((LANES, LANES), jnp.float32).at[:n, :n].set(blk)

    n0_tile = jnp.zeros((SUBLANES, LANES), jnp.float32).at[0, :n].set(N0.reshape(-1))

    dts = ((t_observed[1:] - t_observed[:-1]) / float(substeps)).astype(jnp.float32)

    kernel = functools.partial(propagator_kernel, substeps=substeps)

    out = pl.pallas_call(
        kernel,
        out_shape=jax.ShapeDtypeStruct((num_intervals, SUBLANES, LANES), jnp.float32),
        grid_spec=pltpu.PrefetchScalarGridSpec(
            num_scalar_prefetch=0,
            grid=(1,),
            in_specs=[
                pl.BlockSpec(memory_space=pltpu.MemorySpace.SMEM),   # dts (T-1,)
                pl.BlockSpec(memory_space=pltpu.MemorySpace.VMEM),   # N0 tile (8,128)
                pl.BlockSpec(memory_space=pltpu.MemorySpace.VMEM),   # fused M (128,128)
            ],
            out_specs=pl.BlockSpec((num_intervals, SUBLANES, LANES),
                                   lambda i: (0, 0, 0)),
        ),
        compiler_params=pltpu.CompilerParams(dimension_semantics=("arbitrary",)),
    )(dts, n0_tile, m_big)

    traj_body = out[:, 0, :n].reshape(num_intervals, C, P)
    return jnp.concatenate([N0[None], traj_body], axis=0)


# ---------------- pure-JAX reference (explicit fixed-step RK4) ---------------
def _deriv_ref(y, A, lin):
    return jnp.einsum("ci,cij->cj", y, A) + y * lin


def ode_solve_reference(N0, t_observed, K1, K2, mask, substeps=20):
    A = jnp.square(K1) * mask[None, :, :]
    lin = K2 - jnp.sum(A, axis=2)
    ys = [N0]
    y = N0
    for i in range(t_observed.shape[0] - 1):
        dt = (t_observed[i + 1] - t_observed[i]) / float(substeps)
        for _ in range(substeps):
            k1 = _deriv_ref(y, A, lin)
            k2 = _deriv_ref(y + 0.5 * dt * k1, A, lin)
            k3 = _deriv_ref(y + 0.5 * dt * k2, A, lin)
            k4 = _deriv_ref(y + dt * k3, A, lin)
            y = y + (dt / 6.0) * (k1 + 2.0 * k2 + 2.0 * k3 + k4)
        ys.append(y)
    return jnp.stack(ys, axis=0)


def init_params(key, num_clones, num_pops):
    """Deterministic stand-in for ODEBlock.get_const (kaiming_uniform, a=sqrt(5))."""
    k1_key, k2_key = jax.random.split(key)
    # kaiming_uniform_(a=sqrt(5)) bound = sqrt(6 / ((1+a^2)*fan_in)) = 1/sqrt(fan_in)
    bound = 1.0 / math.sqrt(num_pops)
    # K1: per-clone (P_out, P_in) weight, transposed and stacked, divided by 2 -> (C, P, P)
    K1 = jax.random.uniform(
        k1_key, (num_clones, num_pops, num_pops), jnp.float32, -bound, bound) / 2.0
    # K2: per-clone (1, P) weight, transposed/stacked -> (C, P, 1); squeeze to (C, P)
    K2 = jax.random.uniform(
        k2_key, (num_clones, num_pops, 1), jnp.float32, -bound, bound) / 2.0
    K2 = K2[..., 0]
    return K1, K2


if __name__ == "__main__":
    num_clones, num_pops = 7, 11

    key = jax.random.PRNGKey(0)
    p_key, y_key = jax.random.split(key)

    K1, K2 = init_params(p_key, num_clones, num_pops)
    # PAGA constraint L: upper off-diagonal binary mask (deterministic).
    L = jnp.triu(jnp.ones((num_pops, num_pops), jnp.float32), k=1)

    # N0: initial cell counts per (clone, population).
    N0 = jax.random.uniform(y_key, (num_clones, num_pops), jnp.float32, 0.0, 1.0)
    t_observed = jnp.array([0.0, 1.0, 2.0, 3.0], dtype=jnp.float32)

    solve = jax.jit(functools.partial(ode_solve, K1=K1, K2=K2, mask=L, substeps=20))
    traj = solve(N0, t_observed)
    jax.block_until_ready(traj)

    # Sanity check against an unfused pure-JAX fixed-step RK4 of the same derivative.
    ref_solve = jax.jit(
        functools.partial(ode_solve_reference, K1=K1, K2=K2, mask=L, substeps=20))
    ref = ref_solve(N0, t_observed)
    jax.block_until_ready(ref)
    err = float(jnp.max(jnp.abs(traj - ref)))

    assert traj.shape == (t_observed.shape[0], num_clones, num_pops)
    assert traj.dtype == jnp.float32
    assert bool(jnp.all(jnp.isfinite(traj)))
    assert err < 1e-2, f"mismatch vs reference: {err}"
    print("KERNEL_OK")
</pallas_src>

<mosaic_0001>
module attributes {stable_mosaic.version = 11 : i64} {
  func.func @propagator_kernel(%arg0: i32, %arg1: memref<3xf32, #tpu.memory_space<smem>>, %arg2: memref<8x128xf32, #tpu.memory_space<vmem>>, %arg3: memref<128x128xf32, #tpu.memory_space<vmem>>, %arg4: memref<3x8x128xf32, #tpu.memory_space<vmem>>) attributes {dimension_semantics = [#tpu.dimension_semantics<arbitrary>], iteration_bounds = array<i64: 1>, scalar_prefetch = 0 : i64, scratch_operands = 0 : i64, tpu.core_type = #tpu.core_type<tc>, window_params = [{transform_indices = @transform_0, window_bounds = array<i64: 3>}, {pipeline_mode = #tpu.pipeline_mode<synchronous>, transform_indices = @transform_1, window_bounds = array<i64: 8, 128>}, {pipeline_mode = #tpu.pipeline_mode<synchronous>, transform_indices = @transform_2, window_bounds = array<i64: 128, 128>}, {pipeline_mode = #tpu.pipeline_mode<synchronous>, transform_indices = @transform_3, window_bounds = array<i64: 3, 8, 128>}]} {
    %c0 = arith.constant 0 : index
    %c0_0 = arith.constant 0 : index
    %0 = vector.load %arg3[%c0, %c0_0] : memref<128x128xf32, #tpu.memory_space<vmem>>, vector<128x128xf32>
    %1 = tpu.iota {dimensions = array<i32: 0>} : vector<128x128xi32>
    %2 = tpu.iota {dimensions = array<i32: 1>} : vector<128x128xi32>
    %3 = arith.cmpi eq, %1, %2 : vector<128x128xi32>
    %4 = arith.extui %3 : vector<128x128xi1> to vector<128x128xi32>
    %5 = arith.sitofp %4 : vector<128x128xi32> to vector<128x128xf32>
    %c0_1 = arith.constant 0 : index
    %c0_2 = arith.constant 0 : index
    %6 = vector.load %arg2[%c0_1, %c0_2] : memref<8x128xf32, #tpu.memory_space<vmem>>, vector<8x128xf32>
    %c0_3 = arith.constant 0 : index
    %7 = memref.load %arg1[%c0_3] : memref<3xf32, #tpu.memory_space<smem>>
    %8 = vector.broadcast %7 : f32 to vector<128x128xf32>
    %9 = arith.mulf %8, %0 : vector<128x128xf32>
    %cst = arith.constant dense<0.000000e+00> : vector<128x128xf32>
    %10 = tpu.matmul %9, %9, %cst {dimension_numbers = #tpu.dot_dimension_numbers<[1], [0], [0], [1], [0, 0, 1, 1], [], []>} : vector<128x128xf32>, vector<128x128xf32>, vector<128x128xf32> -> vector<128x128xf32>
    %cst_4 = arith.constant dense<0.000000e+00> : vector<128x128xf32>
    %11 = tpu.matmul %10, %9, %cst_4 {dimension_numbers = #tpu.dot_dimension_numbers<[1], [0], [0], [1], [0, 0, 1, 1], [], []>} : vector<128x128xf32>, vector<128x128xf32>, vector<128x128xf32> -> vector<128x128xf32>
    %cst_5 = arith.constant dense<0.000000e+00> : vector<128x128xf32>
    %12 = tpu.matmul %11, %9, %cst_5 {dimension_numbers = #tpu.dot_dimension_numbers<[1], [0], [0], [1], [0, 0, 1, 1], [], []>} : vector<128x128xf32>, vector<128x128xf32>, vector<128x128xf32> -> vector<128x128xf32>
    %13 = arith.addf %5, %9 : vector<128x128xf32>
    %cst_6 = arith.constant 5.000000e-01 : f32
    %14 = vector.broadcast %cst_6 : f32 to vector<128x128xf32>
    %15 = arith.mulf %14, %10 : vector<128x128xf32>
    %16 = arith.addf %13, %15 : vector<128x128xf32>
    %cst_7 = arith.constant 0.166666672 : f32
    %17 = vector.broadcast %cst_7 : f32 to vector<128x128xf32>
    %18 = arith.mulf %17, %11 : vector<128x128xf32>
    %19 = arith.addf %16, %18 : vector<128x128xf32>
    %cst_8 = arith.constant 0.0416666679 : f32
    %20 = vector.broadcast %cst_8 : f32 to vector<128x128xf32>
    %21 = arith.mulf %20, %12 : vector<128x128xf32>
    %22 = arith.addf %19, %21 : vector<128x128xf32>
    %cst_9 = arith.constant dense<0.000000e+00> : vector<128x128xf32>
    %23 = tpu.matmul %22, %22, %cst_9 {dimension_numbers = #tpu.dot_dimension_numbers<[1], [0], [0], [1], [0, 0, 1, 1], [], []>} : vector<128x128xf32>, vector<128x128xf32>, vector<128x128xf32> -> vector<128x128xf32>
    %cst_10 = arith.constant dense<0.000000e+00> : vector<128x128xf32>
    %24 = tpu.matmul %23, %23, %cst_10 {dimension_numbers = #tpu.dot_dimension_numbers<[1], [0], [0], [1], [0, 0, 1, 1], [], []>} : vector<128x128xf32>, vector<128x128xf32>, vector<128x128xf32> -> vector<128x128xf32>
    %cst_11 = arith.constant dense<0.000000e+00> : vector<128x128xf32>
    %25 = tpu.matmul %24, %24, %cst_11 {dimension_numbers = #tpu.dot_dimension_numbers<[1], [0], [0], [1], [0, 0, 1, 1], [], []>} : vector<128x128xf32>, vector<128x128xf32>, vector<128x128xf32> -> vector<128x128xf32>
    %cst_12 = arith.constant dense<0.000000e+00> : vector<128x128xf32>
    %26 = tpu.matmul %25, %25, %cst_12 {dimension_numbers = #tpu.dot_dimension_numbers<[1], [0], [0], [1], [0, 0, 1, 1], [], []>} : vector<128x128xf32>, vector<128x128xf32>, vector<128x128xf32> -> vector<128x128xf32>
    %cst_13 = arith.constant dense<0.000000e+00> : vector<128x128xf32>
    %27 = tpu.matmul %24, %26, %cst_13 {dimension_numbers = #tpu.dot_dimension_numbers<[1], [0], [0], [1], [0, 0, 1, 1], [], []>} : vector<128x128xf32>, vector<128x128xf32>, vector<128x128xf32> -> vector<128x128xf32>
    %cst_14 = arith.constant dense<0.000000e+00> : vector<8x128xf32>
    %28 = tpu.matmul %6, %27, %cst_14 {dimension_numbers = #tpu.dot_dimension_numbers<[1], [0], [0], [1], [0, 0, 1, 1], [], []>} : vector<8x128xf32>, vector<128x128xf32>, vector<8x128xf32> -> vector<8x128xf32>
    %c0_15 = arith.constant 0 : index
    %c0_16 = arith.constant 0 : index
    %c0_17 = arith.constant 0 : index
    %29 = vector.load %arg4[%c0_15, %c0_16, %c0_17] : memref<3x8x128xf32, #tpu.memory_space<vmem>>, vector<1x8x128xf32>
    %30 = vector.shape_cast %29 : vector<1x8x128xf32> to vector<8x128xf32>
    %31 = vector.shape_cast %28 : vector<8x128xf32> to vector<1x8x128xf32>
    tpu.vector_store %arg4[%c0_15, %c0_16, %c0_17], %31 {strides = array<i32>} : memref<3x8x128xf32, #tpu.memory_space<vmem>>, vector<1x8x128xf32>,
    %c1 = arith.constant 1 : index
    %32 = memref.load %arg1[%c1] : memref<3xf32, #tpu.memory_space<smem>>
    %33 = vector.broadcast %32 : f32 to vector<128x128xf32>
    %34 = arith.mulf %33, %0 : vector<128x128xf32>
    %cst_18 = arith.constant dense<0.000000e+00> : vector<128x128xf32>
    %35 = tpu.matmul %34, %34, %cst_18 {dimension_numbers = #tpu.dot_dimension_numbers<[1], [0], [0], [1], [0, 0, 1, 1], [], []>} : vector<128x128xf32>, vector<128x128xf32>, vector<128x128xf32> -> vector<128x128xf32>
    %cst_19 = arith.constant dense<0.000000e+00> : vector<128x128xf32>
    %36 = tpu.matmul %35, %34, %cst_19 {dimension_numbers = #tpu.dot_dimension_numbers<[1], [0], [0], [1], [0, 0, 1, 1], [], []>} : vector<128x128xf32>, vector<128x128xf32>, vector<128x128xf32> -> vector<128x128xf32>
    %cst_20 = arith.constant dense<0.000000e+00> : vector<128x128xf32>
    %37 = tpu.matmul %36, %34, %cst_20 {dimension_numbers = #tpu.dot_dimension_numbers<[1], [0], [0], [1], [0, 0, 1, 1], [], []>} : vector<128x128xf32>, vector<128x128xf32>, vector<128x128xf32> -> vector<128x128xf32>
    %38 = arith.addf %5, %34 : vector<128x128xf32>
    %cst_21 = arith.constant 5.000000e-01 : f32
    %39 = vector.broadcast %cst_21 : f32 to vector<128x128xf32>
    %40 = arith.mulf %39, %35 : vector<128x128xf32>
    %41 = arith.addf %38, %40 : vector<128x128xf32>
    %cst_22 = arith.constant 0.166666672 : f32
    %42 = vector.broadcast %cst_22 : f32 to vector<128x128xf32>
    %43 = arith.mulf %42, %36 : vector<128x128xf32>
    %44 = arith.addf %41, %43 : vector<128x128xf32>
    %cst_23 = arith.constant 0.0416666679 : f32
    %45 = vector.broadcast %cst_23 : f32 to vector<128x128xf32>
    %46 = arith.mulf %45, %37 : vector<128x128xf32>
    %47 = arith.addf %44, %46 : vector<128x128xf32>
    %cst_24 = arith.constant dense<0.000000e+00> : vector<128x128xf32>
    %48 = tpu.matmul %47, %47, %cst_24 {dimension_numbers = #tpu.dot_dimension_numbers<[1], [0], [0], [1], [0, 0, 1, 1], [], []>} : vector<128x128xf32>, vector<128x128xf32>, vector<128x128xf32> -> vector<128x128xf32>
    %cst_25 = arith.constant dense<0.000000e+00> : vector<128x128xf32>
    %49 = tpu.matmul %48, %48, %cst_25 {dimension_numbers = #tpu.dot_dimension_numbers<[1], [0], [0], [1], [0, 0, 1, 1], [], []>} : vector<128x128xf32>, vector<128x128xf32>, vector<128x128xf32> -> vector<128x128xf32>
    %cst_26 = arith.constant dense<0.000000e+00> : vector<128x128xf32>
    %50 = tpu.matmul %49, %49, %cst_26 {dimension_numbers = #tpu.dot_dimension_numbers<[1], [0], [0], [1], [0, 0, 1, 1], [], []>} : vector<128x128xf32>, vector<128x128xf32>, vector<128x128xf32> -> vector<128x128xf32>
    %cst_27 = arith.constant dense<0.000000e+00> : vector<128x128xf32>
    %51 = tpu.matmul %50, %50, %cst_27 {dimension_numbers = #tpu.dot_dimension_numbers<[1], [0], [0], [1], [0, 0, 1, 1], [], []>} : vector<128x128xf32>, vector<128x128xf32>, vector<128x128xf32> -> vector<128x128xf32>
    %cst_28 = arith.constant dense<0.000000e+00> : vector<128x128xf32>
    %52 = tpu.matmul %49, %51, %cst_28 {dimension_numbers = #tpu.dot_dimension_numbers<[1], [0], [0], [1], [0, 0, 1, 1], [], []>} : vector<128x128xf32>, vector<128x128xf32>, vector<128x128xf32> -> vector<128x128xf32>
    %cst_29 = arith.constant dense<0.000000e+00> : vector<8x128xf32>
    %53 = tpu.matmul %28, %52, %cst_29 {dimension_numbers = #tpu.dot_dimension_numbers<[1], [0], [0], [1], [0, 0, 1, 1], [], []>} : vector<8x128xf32>, vector<128x128xf32>, vector<8x128xf32> -> vector<8x128xf32>
    %c1_30 = arith.constant 1 : index
    %c0_31 = arith.constant 0 : index
    %c0_32 = arith.constant 0 : index
    %54 = vector.load %arg4[%c1_30, %c0_31, %c0_32] : memref<3x8x128xf32, #tpu.memory_space<vmem>>, vector<1x8x128xf32>
    %55 = vector.shape_cast %54 : vector<1x8x128xf32> to vector<8x128xf32>
    %56 = vector.shape_cast %53 : vector<8x128xf32> to vector<1x8x128xf32>
    tpu.vector_store %arg4[%c1_30, %c0_31, %c0_32], %56 {strides = array<i32>} : memref<3x8x128xf32, #tpu.memory_space<vmem>>, vector<1x8x128xf32>,
    %c2 = arith.constant 2 : index
    %57 = memref.load %arg1[%c2] : memref<3xf32, #tpu.memory_space<smem>>
    %58 = vector.broadcast %57 : f32 to vector<128x128xf32>
    %59 = arith.mulf %58, %0 : vector<128x128xf32>
    %cst_33 = arith.constant dense<0.000000e+00> : vector<128x128xf32>
    %60 = tpu.matmul %59, %59, %cst_33 {dimension_numbers = #tpu.dot_dimension_numbers<[1], [0], [0], [1], [0, 0, 1, 1], [], []>} : vector<128x128xf32>, vector<128x128xf32>, vector<128x128xf32> -> vector<128x128xf32>
    %cst_34 = arith.constant dense<0.000000e+00> : vector<128x128xf32>
    %61 = tpu.matmul %60, %59, %cst_34 {dimension_numbers = #tpu.dot_dimension_numbers<[1], [0], [0], [1], [0, 0, 1, 1], [], []>} : vector<128x128xf32>, vector<128x128xf32>, vector<128x128xf32> -> vector<128x128xf32>
    %cst_35 = arith.constant dense<0.000000e+00> : vector<128x128xf32>
    %62 = tpu.matmul %61, %59, %cst_35 {dimension_numbers = #tpu.dot_dimension_numbers<[1], [0], [0], [1], [0, 0, 1, 1], [], []>} : vector<128x128xf32>, vector<128x128xf32>, vector<128x128xf32> -> vector<128x128xf32>
    %63 = arith.addf %5, %59 : vector<128x128xf32>
    %cst_36 = arith.constant 5.000000e-01 : f32
    %64 = vector.broadcast %cst_36 : f32 to vector<128x128xf32>
    %65 = arith.mulf %64, %60 : vector<128x128xf32>
    %66 = arith.addf %63, %65 : vector<128x128xf32>
    %cst_37 = arith.constant 0.166666672 : f32
    %67 = vector.broadcast %cst_37 : f32 to vector<128x128xf32>
    %68 = arith.mulf %67, %61 : vector<128x128xf32>
    %69 = arith.addf %66, %68 : vector<128x128xf32>
    %cst_38 = arith.constant 0.0416666679 : f32
    %70 = vector.broadcast %cst_38 : f32 to vector<128x128xf32>
    %71 = arith.mulf %70, %62 : vector<128x128xf32>
    %72 = arith.addf %69, %71 : vector<128x128xf32>
    %cst_39 = arith.constant dense<0.000000e+00> : vector<128x128xf32>
    %73 = tpu.matmul %72, %72, %cst_39 {dimension_numbers = #tpu.dot_dimension_numbers<[1], [0], [0], [1], [0, 0, 1, 1], [], []>} : vector<128x128xf32>, vector<128x128xf32>, vector<128x128xf32> -> vector<128x128xf32>
    %cst_40 = arith.constant dense<0.000000e+00> : vector<128x128xf32>
    %74 = tpu.matmul %73, %73, %cst_40 {dimension_numbers = #tpu.dot_dimension_numbers<[1], [0], [0], [1], [0, 0, 1, 1], [], []>} : vector<128x128xf32>, vector<128x128xf32>, vector<128x128xf32> -> vector<128x128xf32>
    %cst_41 = arith.constant dense<0.000000e+00> : vector<128x128xf32>
    %75 = tpu.matmul %74, %74, %cst_41 {dimension_numbers = #tpu.dot_dimension_numbers<[1], [0], [0], [1], [0, 0, 1, 1], [], []>} : vector<128x128xf32>, vector<128x128xf32>, vector<128x128xf32> -> vector<128x128xf32>
    %cst_42 = arith.constant dense<0.000000e+00> : vector<128x128xf32>
    %76 = tpu.matmul %75, %75, %cst_42 {dimension_numbers = #tpu.dot_dimension_numbers<[1], [0], [0], [1], [0, 0, 1, 1], [], []>} : vector<128x128xf32>, vector<128x128xf32>, vector<128x128xf32> -> vector<128x128xf32>
    %cst_43 = arith.constant dense<0.000000e+00> : vector<128x128xf32>
    %77 = tpu.matmul %74, %76, %cst_43 {dimension_numbers = #tpu.dot_dimension_numbers<[1], [0], [0], [1], [0, 0, 1, 1], [], []>} : vector<128x128xf32>, vector<128x128xf32>, vector<128x128xf32> -> vector<128x128xf32>
    %cst_44 = arith.constant dense<0.000000e+00> : vector<8x128xf32>
    %78 = tpu.matmul %53, %77, %cst_44 {dimension_numbers = #tpu.dot_dimension_numbers<[1], [0], [0], [1], [0, 0, 1, 1], [], []>} : vector<8x128xf32>, vector<128x128xf32>, vector<8x128xf32> -> vector<8x128xf32>
    %c2_45 = arith.constant 2 : index
    %c0_46 = arith.constant 0 : index
    %c0_47 = arith.constant 0 : index
    %79 = vector.load %arg4[%c2_45, %c0_46, %c0_47] : memref<3x8x128xf32, #tpu.memory_space<vmem>>, vector<1x8x128xf32>
    %80 = vector.shape_cast %79 : vector<1x8x128xf32> to vector<8x128xf32>
    %81 = vector.shape_cast %78 : vector<8x128xf32> to vector<1x8x128xf32>
    tpu.vector_store %arg4[%c2_45, %c0_46, %c0_47], %81 {strides = array<i32>} : memref<3x8x128xf32, #tpu.memory_space<vmem>>, vector<1x8x128xf32>,
    return
  }
  func.func @transform_0(%arg0: i32) -> i32 {
    %c0_i32 = arith.constant 0 : i32
    %c0_i32_0 = arith.constant 0 : i32
    return %c0_i32 : i32
  }
  func.func @transform_1(%arg0: i32) -> (i32, i32) {
    %c0_i32 = arith.constant 0 : i32
    %c0_i32_0 = arith.constant 0 : i32
    %c0_i32_1 = arith.constant 0 : i32
    return %c0_i32, %c0_i32_0 : i32, i32
  }
  func.func @transform_2(%arg0: i32) -> (i32, i32) {
    %c0_i32 = arith.constant 0 : i32
    %c0_i32_0 = arith.constant 0 : i32
    %c0_i32_1 = arith.constant 0 : i32
    return %c0_i32, %c0_i32_0 : i32, i32
  }
  func.func @transform_3(%arg0: i32) -> (i32, i32, i32) {
    %c0_i32 = arith.constant 0 : i32
    %c0_i32_0 = arith.constant 0 : i32
    %c0_i32_1 = arith.constant 0 : i32
    %c0_i32_2 = arith.constant 0 : i32
    return %c0_i32, %c0_i32_0, %c0_i32_1 : i32, i32, i32
  }
}

</mosaic_0001>

<llo_original>
// kernel: squeeze.15
$region0: #{squeeze.15}
  %s0 = inlined_call_operand.vmem [shape: f32[3,77], index: 0, kind: input, shape index: {}]
  %s1 = inlined_call_operand.vmem [shape: f32[3,7,11], index: 1, kind: output, shape index: {}]
  $region1: #{squeeze.15} parent=0
    #allocation0 [shape = 'u8[4096]{0}', space=vmem, size = 0x1000, scoped, tag = 'scoped mem for input reshape']
    %s3 = sshllo.u32 0, 4
    %v4 = vld [vmem:[%s0] sm:%s3]
    %5 = vst [vmem:[#allocation0] sm:%s3] %v4
    %v6 = vld [vmem:[#allocation0] sm:$0x7]
    %vm7 = vcmask 89088
    %8 = vst.msk [vmem:[%s1] ss:$8 sm:$0x7] %vm7, %v6
    %v9 = vld [vmem:[#allocation0] sm:$0x7]
    %10 = vrot.lane.b32.xlu0 %v9, 117
    %v11 = vpop.permute.xlu0 %10
    %vm12 = vcmask 89088
    %s13 = scalar_lea.vmem %s1, 1
    %14 = vst.msk [vmem:[%s13] ss:$8 sm:$0x7] %vm12, %v11
    %v15 = vld [vmem:[#allocation0] sm:$0x7]
    %16 = vrot.lane.b32.xlu0 %v15, 106
    %v17 = vpop.permute.xlu0 %16
    %vm18 = vcmask 89088
    %s19 = scalar_lea.vmem %s1, 2
    %20 = vst.msk [vmem:[%s19] ss:$8 sm:$0x7] %vm18, %v17
    %v21 = vld [vmem:[#allocation0] sm:$0x7]
    %22 = vrot.lane.b32.xlu0 %v21, 95
    %v23 = vpop.permute.xlu0 %22
    %vm24 = vcmask 89088
    %s25 = scalar_lea.vmem %s1, 3
    %26 = vst.msk [vmem:[%s25] ss:$8 sm:$0x7] %vm24, %v23
    %v27 = vld [vmem:[#allocation0] sm:$0x7]
    %28 = vrot.lane.b32.xlu0 %v27, 84
    %v29 = vpop.permute.xlu0 %28
    %vm30 = vcmask 89088
    %s31 = scalar_lea.vmem %s1, 4
    %32 = vst.msk [vmem:[%s31] ss:$8 sm:$0x7] %vm30, %v29
    %v33 = vld [vmem:[#allocation0] sm:$0x7]
    %34 = vrot.lane.b32.xlu0 %v33, 73
    %v35 = vpop.permute.xlu0 %34
    %vm36 = vcmask 89088
    %s37 = scalar_lea.vmem %s1, 5
    %38 = vst.msk [vmem:[%s37] ss:$8 sm:$0x7] %vm36, %v35
    %v39 = vld [vmem:[#allocation0] sm:$0x7]
    %40 = vrot.lane.b32.xlu0 %v39, 62
    %v41 = vpop.permute.xlu0 %40
    %vm42 = vcmask 89088
    %s43 = scalar_lea.vmem %s1, 6
    %44 = vst.msk [vmem:[%s43] ss:$8 sm:$0x7] %vm42, %v41

// kernel: ode_solve.1
$region0: #{ode_solve.1}
  #allocation0 [shape = 'u32[]', space=smem, size = 0x4, offset = 0x4, fixed_abs, tag = 'smem constant byte address 0x4 - core index']
  #allocation1 [shape = 'u32[144,128]{1,0:T(1,128)}', space=vmem, size = 0x12000, scoped, tag = 'internal scratch']
  %s0 = inlined_call_operand.vmem [shape: f32[3], index: 0, kind: input, shape index: {}]
  %s1 = inlined_call_operand.vmem [shape: f32[8,128], index: 1, kind: input, shape index: {}]
  %s2 = inlined_call_operand.vmem [shape: f32[128,128], index: 2, kind: input, shape index: {}]
  %s3 = inlined_call_operand.vmem [shape: f32[3,8,128], index: 3, kind: output, shape index: {}]
  %s4 = sld [smem:[#allocation0]]
  $region26: #{ode_solve.1} parent=0
    _
  %s6 = ssub.s32 1, %s4
  %s7 = scalar_select 0, %s6, %s4
  $region1: #{ode_solve.1} parent=0
    #allocation2 [shape = 'u8[512]{0}', space=smem, size = 0x200, scoped, tag = 'input window, operand 0, single buffered']
    #allocation3 [shape = 's32[1]{0}', space=sflag, size = 0x4, scoped, tag = 'scoped memory for ode_solve.1']
    %8 = vsyncpa [#allocation3], 0
    // Predicated region
    $region2: #{ode_solve.1} parent=1 // pred_check
      _
    $region3: #{ode_solve.1} parent=1 // pred_check_branch
      %10 = sbr.rel (0) target = $region5
    $region4: #{ode_solve.1} parent=1 // pred_region
      %s12 = ssub.s32 16, 16
      %13 = vsyncadd [#allocation3], %s12
      %s15 = sshll.u32 %s0, 4
      %s16 = int_to_ptr.vmem [resolvable:$true] %s15
      %18 = dma.vmem_to_smem %s16, 16, [#allocation2], [#allocation3]
    $region5: #{ode_solve.1} parent=1 // pred_fallthru
      _
    // Predicated region
    $region6: #{ode_solve.1} parent=1 // pred_check
      _
    $region7: #{ode_solve.1} parent=1 // pred_check_branch
      %20 = sbr.rel (0) target = $region9
    $region8: #{ode_solve.1} parent=1 // pred_region
      _
    $region9: #{ode_solve.1} parent=1 // pred_fallthru
      _
    // Predicated region
    $region10: #{ode_solve.1} parent=1 // pred_check
      _
    $region11: #{ode_solve.1} parent=1 // pred_check_branch
      %22 = sbr.rel (0) target = $region13
    $region12: #{ode_solve.1} parent=1 // pred_region
      _
    $region13: #{ode_solve.1} parent=1 // pred_fallthru
      _
    // Predicated region
    $region14: #{ode_solve.1} parent=1 // pred_check
      _
    $region15: #{ode_solve.1} parent=1 // pred_check_branch
      %24 = sbr.rel (0) target = $region17
    $region16: #{ode_solve.1} parent=1 // pred_region
      %25 = dma.done [#allocation3], 16
    $region17: #{ode_solve.1} parent=1 // pred_fallthru
      _
    %26 = sfence
    %v27 = vld [vmem:[%s2] sm:$0xff]
    %v28 = vld [vmem:[%s2 + $0x8] sm:$0xff]
    %v29 = vld [vmem:[%s2 + $0x10] sm:$0xff]
    %v30 = vld [vmem:[%s2 + $0x18] sm:$0xff]
    %v31 = vld [vmem:[%s2 + $0x20] sm:$0xff]
    %v32 = vld [vmem:[%s2 + $0x28] sm:$0xff]
    %v33 = vld [vmem:[%s2 + $0x30] sm:$0xff]
    %v34 = vld [vmem:[%s2 + $0x38] sm:$0xff]
    %v35 = vld [vmem:[%s2 + $0x40] sm:$0xff]
    %v36 = vld [vmem:[%s2 + $0x48] sm:$0xff]
    %v37 = vld [vmem:[%s2 + $0x50] sm:$0xff]
    %v38 = vld [vmem:[%s2 + $0x58] sm:$0xff]
    %v39 = vld [vmem:[%s2 + $0x60] sm:$0xff]
    %v40 = vld [vmem:[%s2 + $0x68] sm:$0xff]
    %v41 = vld [vmem:[%s2 + $0x70] sm:$0xff]
    %v42 = vld [vmem:[%s2 + $0x78] sm:$0xff]
    %v43 = vlaneseq
    %v44 = vshrl.u32 %v43, 7
    %v45 = vadd.s32 %v44, 8
    %v46 = vadd.s32 %v44, 16
    %v47 = vadd.s32 %v44, 24
    %v48 = vadd.s32 %v44, 32
    %v49 = vadd.s32 %v44, 40
    %v50 = vadd.s32 %v44, 48
    %v51 = vadd.s32 %v44, 56
    %v52 = vadd.s32 %v44, 64
    %v53 = vadd.s32 %v44, 72
    %v54 = vadd.s32 %v44, 80
    %v55 = vadd.s32 %v44, 88
    %v56 = vadd.s32 %v44, 96
    %v57 = vadd.s32 %v44, 104
    %v58 = vadd.s32 %v44, 112
    %v59 = vadd.s32 %v44, 120
    %v60 = vlaneseq
    %v61 = vand.u32 %v60, 127
    %vm62 = vcmp.eq.s32.totalorder %v44, %v61
    %vm63 = vcmp.eq.s32.totalorder %v45, %v61
    %vm64 = vcmp.eq.s32.totalorder %v46, %v61
    %vm65 = vcmp.eq.s32.totalorder %v47, %v61
    %vm66 = vcmp.eq.s32.totalorder %v48, %v61
    %vm67 = vcmp.eq.s32.totalorder %v49, %v61
    %vm68 = vcmp.eq.s32.totalorder %v50, %v61
    %vm69 = vcmp.eq.s32.totalorder %v51, %v61
    %vm70 = vcmp.eq.s32.totalorder %v52, %v61
    %vm71 = vcmp.eq.s32.totalorder %v53, %v61
    %vm72 = vcmp.eq.s32.totalorder %v54, %v61
    %vm73 = vcmp.eq.s32.totalorder %v55, %v61
    %vm74 = vcmp.eq.s32.totalorder %v56, %v61
    %vm75 = vcmp.eq.s32.totalorder %v57, %v61
    %vm76 = vcmp.eq.s32.totalorder %v58, %v61
    %vm77 = vcmp.eq.s32.totalorder %v59, %v61
    %v78 = vsel %vm62, 1, 0
    %v79 = vsel %vm63, 1, 0
    %v80 = vsel %vm64, 1, 0
    %v81 = vsel %vm65, 1, 0
    %v82 = vsel %vm66, 1, 0
    %v83 = vsel %vm67, 1, 0
    %v84 = vsel %vm68, 1, 0
    %v85 = vsel %vm69, 1, 0
    %v86 = vsel %vm70, 1, 0
    %v87 = vsel %vm71, 1, 0
    %v88 = vsel %vm72, 1, 0
    %v89 = vsel %vm73, 1, 0
    %v90 = vsel %vm74, 1, 0
    %v91 = vsel %vm75, 1, 0
    %v92 = vsel %vm76, 1, 0
    %v93 = vsel %vm77, 1, 0
    %v94 = vcvt.s32.f32 %v78
    %v95 = vcvt.s32.f32 %v79
    %v96 = vcvt.s32.f32 %v80
    %v97 = vcvt.s32.f32 %v81
    %v98 = vcvt.s32.f32 %v82
    %v99 = vcvt.s32.f32 %v83
    %v100 = vcvt.s32.f32 %v84
    %v101 = vcvt.s32.f32 %v85
    %v102 = vcvt.s32.f32 %v86
    %v103 = vcvt.s32.f32 %v87
    %v104 = vcvt.s32.f32 %v88
    %v105 = vcvt.s32.f32 %v89
    %v106 = vcvt.s32.f32 %v90
    %v107 = vcvt.s32.f32 %v91
    %v108 = vcvt.s32.f32 %v92
    %v109 = vcvt.s32.f32 %v93
    %v110 = vld [vmem:[%s1] sm:$0xff]
    %s111 = sld [smem:[#allocation2]]
    %v112 = vstv %s111
    %v113 = vmul.f32 %v112, %v27
    %v114 = vmul.f32 %v112, %v28
    %v115 = vmul.f32 %v112, %v29
    %v116 = vmul.f32 %v112, %v30
    %v117 = vmul.f32 %v112, %v31
    %v118 = vmul.f32 %v112, %v32
    %v119 = vmul.f32 %v112, %v33
    %v120 = vmul.f32 %v112, %v34
    %v121 = vmul.f32 %v112, %v35
    %v122 = vmul.f32 %v112, %v36
    %v123 = vmul.f32 %v112, %v37
    %v124 = vmul.f32 %v112, %v38
    %v125 = vmul.f32 %v112, %v39
    %v126 = vmul.f32 %v112, %v40
    %v127 = vmul.f32 %v112, %v41
    %v128 = vmul.f32 %v112, %v42
    %129 = vmatprep.subr.mxu0 0.0
    %130 = vmatpush1.msra.mxu0 %v113
    %131 = vmatprep.subr.mxu0 0.0
    %132 = vmatpush1.msra.mxu0 %v114
    %133 = vmatprep.subr.mxu0 0.0
    %134 = vmatpush1.msra.mxu0 %v115
    %135 = vmatprep.subr.mxu0 0.0
    %136 = vmatpush1.msra.mxu0 %v116
    %137 = vmatprep.subr.mxu0 0.0
    %138 = vmatpush1.msra.mxu0 %v117
    %139 = vmatprep.subr.mxu0 0.0
    %140 = vmatpush1.msra.mxu0 %v118
    %141 = vmatprep.subr.mxu0 0.0
    %142 = vmatpush1.msra.mxu0 %v119
    %143 = vmatprep.subr.mxu0 0.0
    %144 = vmatpush1.msra.mxu0 %v120
    %145 = vmatprep.subr.mxu0 0.0
    %146 = vmatpush1.msra.mxu0 %v121
    %147 = vmatprep.subr.mxu0 0.0
    %148 = vmatpush1.msra.mxu0 %v122
    %149 = vmatprep.subr.mxu0 0.0
    %150 = vmatpush1.msra.mxu0 %v123
    %151 = vmatprep.subr.mxu0 0.0
    %152 = vmatpush1.msra.mxu0 %v124
    %153 = vmatprep.subr.mxu0 0.0
    %154 = vmatpush1.msra.mxu0 %v125
    %155 = vmatprep.subr.mxu0 0.0
    %156 = vmatpush1.msra.mxu0 %v126
    %157 = vmatprep.subr.mxu0 0.0
    %158 = vmatpush1.msra.mxu0 %v127
    %159 = vmatprep.subr.mxu0 0.0
    %160 = vmatpush1.msra.mxu0 %v128
    %161 = vmatprep.subr.mxu0 0.0
    %162 = vmatpush1.msra.mxu0 0.0
    %163 = vmatprep.subr.mxu0 0.0
    %164 = vmatpush1.msra.mxu0 0.0
    %165 = vmatprep.subr.mxu0 0.0
    %166 = vmatpush1.msra.mxu0 0.0
    %167 = vmatprep.subr.mxu0 0.0
    %168 = vmatpush1.msra.mxu0 0.0
    %169 = vmatprep.subr.mxu0 0.0
    %170 = vmatpush1.msra.mxu0 0.0
    %171 = vmatprep.subr.mxu0 0.0
    %172 = vmatpush1.msra.mxu0 0.0
    %173 = vmatprep.subr.mxu0 0.0
    %174 = vmatpush1.msra.mxu0 0.0
    %175 = vmatprep.subr.mxu0 0.0
    %176 = vmatpush1.msra.mxu0 0.0
    %177 = vmatprep.subr.mxu0 0.0
    %178 = vmatpush1.msra.mxu0 0.0
    %179 = vmatprep.subr.mxu0 0.0
    %180 = vmatpush1.msra.mxu0 0.0
    %181 = vmatprep.subr.mxu0 0.0
    %182 = vmatpush1.msra.mxu0 0.0
    %183 = vmatprep.subr.mxu0 0.0
    %184 = vmatpush1.msra.mxu0 0.0
    %185 = vmatprep.subr.mxu0 0.0
    %186 = vmatpush1.msra.mxu0 0.0
    %187 = vmatprep.subr.mxu0 0.0
    %188 = vmatpush1.msra.mxu0 0.0
    %189 = vmatprep.subr.mxu0 0.0
    %190 = vmatpush1.msra.mxu0 0.0
    %191 = vmatprep.subr.mxu0 0.0
    %192 = vmatpush1.msra.mxu0 0.0
    %193 = vmatprep.mubr.f32.mxu0 0.0
    %194 = vmatmul.mubr.f32.gmra.mrb[0].mxu0 %v113
    %v195 = vpop.f32.mrb[0].mxu0
    %v196 = vadd.f32 0.0, %v195
    %v197 = vpop.f32.mrb[0].mxu0
    %198 = vmatprep.mubr.f32.mxu0 0.0
    %199 = vmatmul.mubr.f32.gmra.mrb[0].mxu0 %v114
    %v200 = vpop.f32.mrb[0].mxu0
    %v201 = vadd.f32 0.0, %v200
    %v202 = vpop.f32.mrb[0].mxu0
    %203 = vmatprep.mubr.f32.mxu0 0.0
    %204 = vmatmul.mubr.f32.gmra.mrb[0].mxu0 %v115
    %v205 = vpop.f32.mrb[0].mxu0
    %v206 = vadd.f32 0.0, %v205
    %v207 = vpop.f32.mrb[0].mxu0
    %208 = vmatprep.mubr.f32.mxu0 0.0
    %209 = vmatmul.mubr.f32.gmra.mrb[0].mxu0 %v116
    %v210 = vpop.f32.mrb[0].mxu0
    %v211 = vadd.f32 0.0, %v210
    %v212 = vpop.f32.mrb[0].mxu0
    %213 = vmatprep.mubr.f32.mxu0 0.0
    %214 = vmatmul.mubr.f32.gmra.mrb[0].mxu0 %v117
    %v215 = vpop.f32.mrb[0].mxu0
    %v216 = vadd.f32 0.0, %v215
    %v217 = vpop.f32.mrb[0].mxu0
    %218 = vmatprep.mubr.f32.mxu0 0.0
    %219 = vmatmul.mubr.f32.gmra.mrb[0].mxu0 %v118
    %v220 = vpop.f32.mrb[0].mxu0
    %v221 = vadd.f32 0.0, %v220
    %v222 = vpop.f32.mrb[0].mxu0
    %223 = vmatprep.mubr.f32.mxu0 0.0
    %224 = vmatmul.mubr.f32.gmra.mrb[0].mxu0 %v119
    %v225 = vpop.f32.mrb[0].mxu0
    %v226 = vadd.f32 0.0, %v225
    %v227 = vpop.f32.mrb[0].mxu0
    %228 = vmatprep.mubr.f32.mxu0 0.0
    %229 = vmatmul.mubr.f32.gmra.mrb[0].mxu0 %v120
    %v230 = vpop.f32.mrb[0].mxu0
    %v231 = vadd.f32 0.0, %v230
    %v232 = vpop.f32.mrb[0].mxu0
    %233 = vmatprep.mubr.f32.mxu0 0.0
    %234 = vmatmul.mubr.f32.gmra.mrb[0].mxu0 %v121
    %v235 = vpop.f32.mrb[0].mxu0
    %v236 = vadd.f32 0.0, %v235
    %v237 = vpop.f32.mrb[0].mxu0
    %238 = vmatprep.mubr.f32.mxu0 0.0
    %239 = vmatmul.mubr.f32.gmra.mrb[0].mxu0 %v122
    %v240 = vpop.f32.mrb[0].mxu0
    %v241 = vadd.f32 0.0, %v240
    %v242 = vpop.f32.mrb[0].mxu0
    %243 = vmatprep.mubr.f32.mxu0 0.0
    %244 = vmatmul.mubr.f32.gmra.mrb[0].mxu0 %v123
    %v245 = vpop.f32.mrb[0].mxu0
    %v246 = vadd.f32 0.0, %v245
    %v247 = vpop.f32.mrb[0].mxu0
    %248 = vmatprep.mubr.f32.mxu0 0.0
    %249 = vmatmul.mubr.f32.gmra.mrb[0].mxu0 %v124
    %v250 = vpop.f32.mrb[0].mxu0
    %v251 = vadd.f32 0.0, %v250
    %v252 = vpop.f32.mrb[0].mxu0
    %253 = vmatprep.mubr.f32.mxu0 0.0
    %254 = vmatmul.mubr.f32.gmra.mrb[0].mxu0 %v125
    %v255 = vpop.f32.mrb[0].mxu0
    %v256 = vadd.f32 0.0, %v255
    %v257 = vpop.f32.mrb[0].mxu0
    %258 = vmatprep.mubr.f32.mxu0 0.0
    %259 = vmatmul.mubr.f32.gmra.mrb[0].mxu0 %v126
    %v260 = vpop.f32.mrb[0].mxu0
    %v261 = vadd.f32 0.0, %v260
    %v262 = vpop.f32.mrb[0].mxu0
    %263 = vmatprep.mubr.f32.mxu0 0.0
    %264 = vmatmul.mubr.f32.gmra.mrb[0].mxu0 %v127
    %v265 = vpop.f32.mrb[0].mxu0
    %v266 = vadd.f32 0.0, %v265
    %v267 = vpop.f32.mrb[0].mxu0
    %268 = vmatprep.mubr.f32.mxu0 0.0
    %269 = vmatmul.mubr.f32.gmra.mrb[0].mxu0 %v128
    %v270 = vpop.f32.mrb[0].mxu0
    %v271 = vadd.f32 0.0, %v270
    %v272 = vpop.f32.mrb[0].mxu0
    %273 = vdwg.mxu0
    %274 = vmatprep.subr.mxu0 0.0
    %275 = vmatpush1.msra.mxu0 %v113
    %276 = vmatprep.subr.mxu0 0.0
    %277 = vmatpush1.msra.mxu0 %v114
    %278 = vmatprep.subr.mxu0 0.0
    %279 = vmatpush1.msra.mxu0 %v115
    %280 = vmatprep.subr.mxu0 0.0
    %281 = vmatpush1.msra.mxu0 %v116
    %282 = vmatprep.subr.mxu0 0.0
    %283 = vmatpush1.msra.mxu0 %v117
    %284 = vmatprep.subr.mxu0 0.0
    %285 = vmatpush1.msra.mxu0 %v118
    %286 = vmatprep.subr.mxu0 0.0
    %287 = vmatpush1.msra.mxu0 %v119
    %288 = vmatprep.subr.mxu0 0.0
    %289 = vmatpush1.msra.mxu0 %v120
    %290 = vmatprep.subr.mxu0 0.0
    %291 = vmatpush1.msra.mxu0 %v121
    %292 = vmatprep.subr.mxu0 0.0
    %293 = vmatpush1.msra.mxu0 %v122
    %294 = vmatprep.subr.mxu0 0.0
    %295 = vmatpush1.msra.mxu0 %v123
    %296 = vmatprep.subr.mxu0 0.0
    %297 = vmatpush1.msra.mxu0 %v124
    %298 = vmatprep.subr.mxu0 0.0
    %299 = vmatpush1.msra.mxu0 %v125
    %300 = vmatprep.subr.mxu0 0.0
    %301 = vmatpush1.msra.mxu0 %v126
    %302 = vmatprep.subr.mxu0 0.0
    %303 = vmatpush1.msra.mxu0 %v127
    %304 = vmatprep.subr.mxu0 0.0
    %305 = vmatpush1.msra.mxu0 %v128
    %306 = vmatprep.subr.mxu0 0.0
    %307 = vmatpush1.msra.mxu0 0.0
    %308 = vmatprep.subr.mxu0 0.0
    %309 = vmatpush1.msra.mxu0 0.0
    %310 = vmatprep.subr.mxu0 0.0
    %311 = vmatpush1.msra.mxu0 0.0
    %312 = vmatprep.subr.mxu0 0.0
    %313 = vmatpush1.msra.mxu0 0.0
    %314 = vmatprep.subr.mxu0 0.0
    %315 = vmatpush1.msra.mxu0 0.0
    %316 = vmatprep.subr.mxu0 0.0
    %317 = vmatpush1.msra.mxu0 0.0
    %318 = vmatprep.subr.mxu0 0.0
    %319 = vmatpush1.msra.mxu0 0.0
    %320 = vmatprep.subr.mxu0 0.0
    %321 = vmatpush1.msra.mxu0 0.0
    %322 = vmatprep.subr.mxu0 0.0
    %323 = vmatpush1.msra.mxu0 0.0
    %324 = vmatprep.subr.mxu0 0.0
    %325 = vmatpush1.msra.mxu0 0.0
    %326 = vmatprep.subr.mxu0 0.0
    %327 = vmatpush1.msra.mxu0 0.0
    %328 = vmatprep.subr.mxu0 0.0
    %329 = vmatpush1.msra.mxu0 0.0
    %330 = vmatprep.subr.mxu0 0.0
    %331 = vmatpush1.msra.mxu0 0.0
    %332 = vmatprep.subr.mxu0 0.0
    %333 = vmatpush1.msra.mxu0 0.0
    %334 = vmatprep.subr.mxu0 0.0
    %335 = vmatpush1.msra.mxu0 0.0
    %336 = vmatprep.subr.mxu0 0.0
    %337 = vmatpush1.msra.mxu0 0.0
    %338 = vmatprep.mubr.f32.mxu0 0.0
    %339 = vmatmul.mubr.f32.gmra.mrb[0].mxu0 %v196
    %v340 = vpop.f32.mrb[0].mxu0
    %v341 = vadd.f32 0.0, %v340
    %v342 = vpop.f32.mrb[0].mxu0
    %343 = vmatprep.mubr.f32.mxu0 0.0
    %344 = vmatmul.mubr.f32.gmra.mrb[0].mxu0 %v201
    %v345 = vpop.f32.mrb[0].mxu0
    %v346 = vadd.f32 0.0, %v345
    %v347 = vpop.f32.mrb[0].mxu0
    %348 = vmatprep.mubr.f32.mxu0 0.0
    %349 = vmatmul.mubr.f32.gmra.mrb[0].mxu0 %v206
    %v350 = vpop.f32.mrb[0].mxu0
    %v351 = vadd.f32 0.0, %v350
    %v352 = vpop.f32.mrb[0].mxu0
    %353 = vmatprep.mubr.f32.mxu0 0.0
    %354 = vmatmul.mubr.f32.gmra.mrb[0].mxu0 %v211
    %v355 = vpop.f32.mrb[0].mxu0
    %v356 = vadd.f32 0.0, %v355
    %v357 = vpop.f32.mrb[0].mxu0
    %358 = vmatprep.mubr.f32.mxu0 0.0
    %359 = vmatmul.mubr.f32.gmra.mrb[0].mxu0 %v216
    %v360 = vpop.f32.mrb[0].mxu0
    %v361 = vadd.f32 0.0, %v360
    %v362 = vpop.f32.mrb[0].mxu0
    %363 = vmatprep.mubr.f32.mxu0 0.0
    %364 = vmatmul.mubr.f32.gmra.mrb[0].mxu0 %v221
    %v365 = vpop.f32.mrb[0].mxu0
    %v366 = vadd.f32 0.0, %v365
    %v367 = vpop.f32.mrb[0].mxu0
    %368 = vmatprep.mubr.f32.mxu0 0.0
    %369 = vmatmul.mubr.f32.gmra.mrb[0].mxu0 %v226
    %v370 = vpop.f32.mrb[0].mxu0
    %v371 = vadd.f32 0.0, %v370
    %v372 = vpop.f32.mrb[0].mxu0
    %373 = vmatprep.mubr.f32.mxu0 0.0
    %374 = vmatmul.mubr.f32.gmra.mrb[0].mxu0 %v231
    %v375 = vpop.f32.mrb[0].mxu0
    %v376 = vadd.f32 0.0, %v375
    %v377 = vpop.f32.mrb[0].mxu0
    %378 = vmatprep.mubr.f32.mxu0 0.0
    %379 = vmatmul.mubr.f32.gmra.mrb[0].mxu0 %v236
    %v380 = vpop.f32.mrb[0].mxu0
    %v381 = vadd.f32 0.0, %v380
    %v382 = vpop.f32.mrb[0].mxu0
    %383 = vmatprep.mubr.f32.mxu0 0.0
    %384 = vmatmul.mubr.f32.gmra.mrb[0].mxu0 %v241
    %v385 = vpop.f32.mrb[0].mxu0
    %v386 = vadd.f32 0.0, %v385
    %v387 = vpop.f32.mrb[0].mxu0
    %388 = vmatprep.mubr.f32.mxu0 0.0
    %389 = vmatmul.mubr.f32.gmra.mrb[0].mxu0 %v246
    %v390 = vpop.f32.mrb[0].mxu0
    %v391 = vadd.f32 0.0, %v390
    %v392 = vpop.f32.mrb[0].mxu0
    %393 = vmatprep.mubr.f32.mxu0 0.0
    %394 = vmatmul.mubr.f32.gmra.mrb[0].mxu0 %v251
    %v395 = vpop.f32.mrb[0].mxu0
    %v396 = vadd.f32 0.0, %v395
    %v397 = vpop.f32.mrb[0].mxu0
    %398 = vmatprep.mubr.f32.mxu0 0.0
    %399 = vmatmul.mubr.f32.gmra.mrb[0].mxu0 %v256
    %v400 = vpop.f32.mrb[0].mxu0
    %v401 = vadd.f32 0.0, %v400
    %v402 = vpop.f32.mrb[0].mxu0
    %403 = vmatprep.mubr.f32.mxu0 0.0
    %404 = vmatmul.mubr.f32.gmra.mrb[0].mxu0 %v261
    %v405 = vpop.f32.mrb[0].mxu0
    %v406 = vadd.f32 0.0, %v405
    %v407 = vpop.f32.mrb[0].mxu0
    %408 = vmatprep.mubr.f32.mxu0 0.0
    %409 = vmatmul.mubr.f32.gmra.mrb[0].mxu0 %v266
    %v410 = vpop.f32.mrb[0].mxu0
    %v411 = vadd.f32 0.0, %v410
    %v412 = vpop.f32.mrb[0].mxu0
    %413 = vmatprep.mubr.f32.mxu0 0.0
    %414 = vmatmul.mubr.f32.gmra.mrb[0].mxu0 %v271
    %v415 = vpop.f32.mrb[0].mxu0
    %v416 = vadd.f32 0.0, %v415
    %v417 = vpop.f32.mrb[0].mxu0
    %418 = vdwg.mxu0
    %419 = vmatprep.subr.mxu0 0.0
    %420 = vmatpush1.msra.mxu0 %v113
    %421 = vmatprep.subr.mxu0 0.0
    %422 = vmatpush1.msra.mxu0 %v114
    %423 = vmatprep.subr.mxu0 0.0
    %424 = vmatpush1.msra.mxu0 %v115
    %425 = vmatprep.subr.mxu0 0.0
    %426 = vmatpush1.msra.mxu0 %v116
    %427 = vmatprep.subr.mxu0 0.0
    %428 = vmatpush1.msra.mxu0 %v117
    %429 = vmatprep.subr.mxu0 0.0
    %430 = vmatpush1.msra.mxu0 %v118
    %431 = vmatprep.subr.mxu0 0.0
    %432 = vmatpush1.msra.mxu0 %v119
    %433 = vmatprep.subr.mxu0 0.0
    %434 = vmatpush1.msra.mxu0 %v120
    %435 = vmatprep.subr.mxu0 0.0
    %436 = vmatpush1.msra.mxu0 %v121
    %437 = vmatprep.subr.mxu0 0.0
    %438 = vmatpush1.msra.mxu0 %v122
    %439 = vmatprep.subr.mxu0 0.0
    %440 = vmatpush1.msra.mxu0 %v123
    %441 = vmatprep.subr.mxu0 0.0
    %442 = vmatpush1.msra.mxu0 %v124
    %443 = vmatprep.subr.mxu0 0.0
    %444 = vmatpush1.msra.mxu0 %v125
    %445 = vmatprep.subr.mxu0 0.0
    %446 = vmatpush1.msra.mxu0 %v126
    %447 = vmatprep.subr.mxu0 0.0
    %448 = vmatpush1.msra.mxu0 %v127
    %449 = vmatprep.subr.mxu0 0.0
    %450 = vmatpush1.msra.mxu0 %v128
    %451 = vmatprep.subr.mxu0 0.0
    %452 = vmatpush1.msra.mxu0 0.0
    %453 = vmatprep.subr.mxu0 0.0
    %454 = vmatpush1.msra.mxu0 0.0
    %455 = vmatprep.subr.mxu0 0.0
    %456 = vmatpush1.msra.mxu0 0.0
    %457 = vmatprep.subr.mxu0 0.0
    %458 = vmatpush1.msra.mxu0 0.0
    %459 = vmatprep.subr.mxu0 0.0
    %460 = vmatpush1.msra.mxu0 0.0
    %461 = vmatprep.subr.mxu0 0.0
    %462 = vmatpush1.msra.mxu0 0.0
    %463 = vmatprep.subr.mxu0 0.0
    %464 = vmatpush1.msra.mxu0 0.0
    %465 = vmatprep.subr.mxu0 0.0
    %466 = vmatpush1.msra.mxu0 0.0
    %467 = vmatprep.subr.mxu0 0.0
    %468 = vmatpush1.msra.mxu0 0.0
    %469 = vmatprep.subr.mxu0 0.0
    %470 = vmatpush1.msra.mxu0 0.0
    %471 = vmatprep.subr.mxu0 0.0
    %472 = vmatpush1.msra.mxu0 0.0
    %473 = vmatprep.subr.mxu0 0.0
    %474 = vmatpush1.msra.mxu0 0.0
    %475 = vmatprep.subr.mxu0 0.0
    %476 = vmatpush1.msra.mxu0 0.0
    %477 = vmatprep.subr.mxu0 0.0
    %478 = vmatpush1.msra.mxu0 0.0
    %479 = vmatprep.subr.mxu0 0.0
    %480 = vmatpush1.msra.mxu0 0.0
    %481 = vmatprep.subr.mxu0 0.0
    %482 = vmatpush1.msra.mxu0 0.0
    %483 = vmatprep.mubr.f32.mxu0 0.0
    %484 = vmatmul.mubr.f32.gmra.mrb[0].mxu0 %v341
    %v485 = vpop.f32.mrb[0].mxu0
    %v486 = vadd.f32 0.0, %v485
    %v487 = vpop.f32.mrb[0].mxu0
    %488 = vmatprep.mubr.f32.mxu0 0.0
    %489 = vmatmul.mubr.f32.gmra.mrb[0].mxu0 %v346
    %v490 = vpop.f32.mrb[0].mxu0
    %v491 = vadd.f32 0.0, %v490
    %v492 = vpop.f32.mrb[0].mxu0
    %493 = vmatprep.mubr.f32.mxu0 0.0
    %494 = vmatmul.mubr.f32.gmra.mrb[0].mxu0 %v351
    %v495 = vpop.f32.mrb[0].mxu0
    %v496 = vadd.f32 0.0, %v495
    %v497 = vpop.f32.mrb[0].mxu0
    %498 = vmatprep.mubr.f32.mxu0 0.0
    %499 = vmatmul.mubr.f32.gmra.mrb[0].mxu0 %v356
    %v500 = vpop.f32.mrb[0].mxu0
    %v501 = vadd.f32 0.0, %v500
    %v502 = vpop.f32.mrb[0].mxu0
    %503 = vmatprep.mubr.f32.mxu0 0.0
    %504 = vmatmul.mubr.f32.gmra.mrb[0].mxu0 %v361
    %v505 = vpop.f32.mrb[0].mxu0
    %v506 = vadd.f32 0.0, %v505
    %v507 = vpop.f32.mrb[0].mxu0
    %508 = vmatprep.mubr.f32.mxu0 0.0
    %509 = vmatmul.mubr.f32.gmra.mrb[0].mxu0 %v366
    %v510 = vpop.f32.mrb[0].mxu0
    %v511 = vadd.f32 0.0, %v510
    %v512 = vpop.f32.mrb[0].mxu0
    %513 = vmatprep.mubr.f32.mxu0 0.0
    %514 = vmatmul.mubr.f32.gmra.mrb[0].mxu0 %v371
    %v515 = vpop.f32.mrb[0].mxu0
    %v516 = vadd.f32 0.0, %v515
    %v517 = vpop.f32.mrb[0].mxu0
    %518 = vmatprep.mubr.f32.mxu0 0.0
    %519 = vmatmul.mubr.f32.gmra.mrb[0].mxu0 %v376
    %v520 = vpop.f32.mrb[0].mxu0
    %v521 = vadd.f32 0.0, %v520
    %v522 = vpop.f32.mrb[0].mxu0
    %523 = vmatprep.mubr.f32.mxu0 0.0
    %524 = vmatmul.mubr.f32.gmra.mrb[0].mxu0 %v381
    %v525 = vpop.f32.mrb[0].mxu0
    %v526 = vadd.f32 0.0, %v525
    %v527 = vpop.f32.mrb[0].mxu0
    %528 = vmatprep.mubr.f32.mxu0 0.0
    %529 = vmatmul.mubr.f32.gmra.mrb[0].mxu0 %v386
    %v530 = vpop.f32.mrb[0].mxu0
    %v531 = vadd.f32 0.0, %v530
    %v532 = vpop.f32.mrb[0].mxu0
    %533 = vmatprep.mubr.f32.mxu0 0.0
    %534 = vmatmul.mubr.f32.gmra.mrb[0].mxu0 %v391
    %v535 = vpop.f32.mrb[0].mxu0
    %v536 = vadd.f32 0.0, %v535
    %v537 = vpop.f32.mrb[0].mxu0
    %538 = vmatprep.mubr.f32.mxu0 0.0
    %539 = vmatmul.mubr.f32.gmra.mrb[0].mxu0 %v396
    %v540 = vpop.f32.mrb[0].mxu0
    %v541 = vadd.f32 0.0, %v540
    %v542 = vpop.f32.mrb[0].mxu0
    %543 = vmatprep.mubr.f32.mxu0 0.0
    %544 = vmatmul.mubr.f32.gmra.mrb[0].mxu0 %v401
    %v545 = vpop.f32.mrb[0].mxu0
    %v546 = vadd.f32 0.0, %v545
    %v547 = vpop.f32.mrb[0].mxu0
    %548 = vmatprep.mubr.f32.mxu0 0.0
    %549 = vmatmul.mubr.f32.gmra.mrb[0].mxu0 %v406
    %v550 = vpop.f32.mrb[0].mxu0
    %v551 = vadd.f32 0.0, %v550
    %v552 = vpop.f32.mrb[0].mxu0
    %553 = vmatprep.mubr.f32.mxu0 0.0
    %554 = vmatmul.mubr.f32.gmra.mrb[0].mxu0 %v411
    %v555 = vpop.f32.mrb[0].mxu0
    %v556 = vadd.f32 0.0, %v555
    %v557 = vpop.f32.mrb[0].mxu0
    %558 = vmatprep.mubr.f32.mxu0 0.0
    %559 = vmatmul.mubr.f32.gmra.mrb[0].mxu0 %v416
    %v560 = vpop.f32.mrb[0].mxu0
    %v561 = vadd.f32 0.0, %v560
    %v562 = vpop.f32.mrb[0].mxu0
    %563 = vdwg.mxu0
    %v564 = vadd.f32 %v94, %v113
    %v565 = vadd.f32 %v95, %v114
    %v566 = vadd.f32 %v96, %v115
    %v567 = vadd.f32 %v97, %v116
    %v568 = vadd.f32 %v98, %v117
    %v569 = vadd.f32 %v99, %v118
    %v570 = vadd.f32 %v100, %v119
    %v571 = vadd.f32 %v101, %v120
    %v572 = vadd.f32 %v102, %v121
    %v573 = vadd.f32 %v103, %v122
    %v574 = vadd.f32 %v104, %v123
    %v575 = vadd.f32 %v105, %v124
    %v576 = vadd.f32 %v106, %v125
    %v577 = vadd.f32 %v107, %v126
    %v578 = vadd.f32 %v108, %v127
    %v579 = vadd.f32 %v109, %v128
    %v580 = vmul.f32 %v196, 0.5
    %v581 = vmul.f32 %v201, 0.5
    %v582 = vmul.f32 %v206, 0.5
    %v583 = vmul.f32 %v211, 0.5
    %v584 = vmul.f32 %v216, 0.5
    %v585 = vmul.f32 %v221, 0.5
    %v586 = vmul.f32 %v226, 0.5
    %v587 = vmul.f32 %v231, 0.5
    %v588 = vmul.f32 %v236, 0.5
    %v589 = vmul.f32 %v241, 0.5
    %v590 = vmul.f32 %v246, 0.5
    %v591 = vmul.f32 %v251, 0.5
    %v592 = vmul.f32 %v256, 0.5
    %v593 = vmul.f32 %v261, 0.5
    %v594 = vmul.f32 %v266, 0.5
    %v595 = vmul.f32 %v271, 0.5
    %v596 = vadd.f32 %v564, %v580
    %v597 = vadd.f32 %v565, %v581
    %v598 = vadd.f32 %v566, %v582
    %v599 = vadd.f32 %v567, %v583
    %v600 = vadd.f32 %v568, %v584
    %v601 = vadd.f32 %v569, %v585
    %v602 = vadd.f32 %v570, %v586
    %v603 = vadd.f32 %v571, %v587
    %v604 = vadd.f32 %v572, %v588
    %v605 = vadd.f32 %v573, %v589
    %v606 = vadd.f32 %v574, %v590
    %v607 = vadd.f32 %v575, %v591
    %v608 = vadd.f32 %v576, %v592
    %v609 = vadd.f32 %v577, %v593
    %v610 = vadd.f32 %v578, %v594
    %v611 = vadd.f32 %v579, %v595
    %v612 = vmul.f32 %v341, 0.16666667
    %v613 = vmul.f32 %v346, 0.16666667
    %v614 = vmul.f32 %v351, 0.16666667
    %v615 = vmul.f32 %v356, 0.16666667
    %v616 = vmul.f32 %v361, 0.16666667
    %v617 = vmul.f32 %v366, 0.16666667
    %v618 = vmul.f32 %v371, 0.16666667
    %v619 = vmul.f32 %v376, 0.16666667
    %v620 = vmul.f32 %v381, 0.16666667
    %v621 = vmul.f32 %v386, 0.16666667
    %v622 = vmul.f32 %v391, 0.16666667
    %v623 = vmul.f32 %v396, 0.16666667
    %v624 = vmul.f32 %v401, 0.16666667
    %v625 = vmul.f32 %v406, 0.16666667
    %v626 = vmul.f32 %v411, 0.16666667
    %v627 = vmul.f32 %v416, 0.16666667
    %v628 = vadd.f32 %v596, %v612
    %v629 = vadd.f32 %v597, %v613
    %v630 = vadd.f32 %v598, %v614
    %v631 = vadd.f32 %v599, %v615
    %v632 = vadd.f32 %v600, %v616
    %v633 = vadd.f32 %v601, %v617
    %v634 = vadd.f32 %v602, %v618
    %v635 = vadd.f32 %v603, %v619
    %v636 = vadd.f32 %v604, %v620
    %v637 = vadd.f32 %v605, %v621
    %v638 = vadd.f32 %v606, %v622
    %v639 = vadd.f32 %v607, %v623
    %v640 = vadd.f32 %v608, %v624
    %v641 = vadd.f32 %v609, %v625
    %v642 = vadd.f32 %v610, %v626
    %v643 = vadd.f32 %v611, %v627
    %v644 = vmul.f32 %v486, 0.041666668
    %v645 = vmul.f32 %v491, 0.041666668
    %v646 = vmul.f32 %v496, 0.041666668
    %v647 = vmul.f32 %v501, 0.041666668
    %v648 = vmul.f32 %v506, 0.041666668
    %v649 = vmul.f32 %v511, 0.041666668
    %v650 = vmul.f32 %v516, 0.041666668
    %v651 = vmul.f32 %v521, 0.041666668
    %v652 = vmul.f32 %v526, 0.041666668
    %v653 = vmul.f32 %v531, 0.041666668
    %v654 = vmul.f32 %v536, 0.041666668
    %v655 = vmul.f32 %v541, 0.041666668
    %v656 = vmul.f32 %v546, 0.041666668
    %v657 = vmul.f32 %v551, 0.041666668
    %v658 = vmul.f32 %v556, 0.041666668
    %v659 = vmul.f32 %v561, 0.041666668
    %v660 = vadd.f32 %v628, %v644
    %v661 = vadd.f32 %v629, %v645
    %v662 = vadd.f32 %v630, %v646
    %v663 = vadd.f32 %v631, %v647
    %v664 = vadd.f32 %v632, %v648
    %v665 = vadd.f32 %v633, %v649
    %v666 = vadd.f32 %v634, %v650
    %v667 = vadd.f32 %v635, %v651
    %v668 = vadd.f32 %v636, %v652
    %v669 = vadd.f32 %v637, %v653
    %v670 = vadd.f32 %v638, %v654
    %v671 = vadd.f32 %v639, %v655
    %v672 = vadd.f32 %v640, %v656
    %v673 = vadd.f32 %v641, %v657
    %v674 = vadd.f32 %v642, %v658
    %v675 = vadd.f32 %v643, %v659
    %676 = vmatprep.subr.mxu0 0.0
    %677 = vmatpush1.msra.mxu0 %v660
    %678 = vmatprep.subr.mxu0 0.0
    %679 = vmatpush1.msra.mxu0 %v661
    %680 = vmatprep.subr.mxu0 0.0
    %681 = vmatpush1.msra.mxu0 %v662
    %682 = vmatprep.subr.mxu0 0.0
    %683 = vmatpush1.msra.mxu0 %v663
    %684 = vmatprep.subr.mxu0 0.0
    %685 = vmatpush1.msra.mxu0 %v664
    %686 = vmatprep.subr.mxu0 0.0
    %687 = vmatpush1.msra.mxu0 %v665
    %688 = vmatprep.subr.mxu0 0.0
    %689 = vmatpush1.msra.mxu0 %v666
    %690 = vmatprep.subr.mxu0 0.0
    %691 = vmatpush1.msra.mxu0 %v667
    %692 = vmatprep.subr.mxu0 0.0
    %693 = vmatpush1.msra.mxu0 %v668
    %694 = vmatprep.subr.mxu0 0.0
    %695 = vmatpush1.msra.mxu0 %v669
    %696 = vmatprep.subr.mxu0 0.0
    %697 = vmatpush1.msra.mxu0 %v670
    %698 = vmatprep.subr.mxu0 0.0
    %699 = vmatpush1.msra.mxu0 %v671
    %700 = vmatprep.subr.mxu0 0.0
    %701 = vmatpush1.msra.mxu0 %v672
    %702 = vmatprep.subr.mxu0 0.0
    %703 = vmatpush1.msra.mxu0 %v673
    %704 = vmatprep.subr.mxu0 0.0
    %705 = vmatpush1.msra.mxu0 %v674
    %706 = vmatprep.subr.mxu0 0.0
    %707 = vmatpush1.msra.mxu0 %v675
    %708 = vmatprep.subr.mxu0 0.0
    %709 = vmatpush1.msra.mxu0 0.0
    %710 = vmatprep.subr.mxu0 0.0
    %711 = vmatpush1.msra.mxu0 0.0
    %712 = vmatprep.subr.mxu0 0.0
    %713 = vmatpush1.msra.mxu0 0.0
    %714 = vmatprep.subr.mxu0 0.0
    %715 = vmatpush1.msra.mxu0 0.0
    %716 = vmatprep.subr.mxu0 0.0
    %717 = vmatpush1.msra.mxu0 0.0
    %718 = vmatprep.subr.mxu0 0.0
    %719 = vmatpush1.msra.mxu0 0.0
    %720 = vmatprep.subr.mxu0 0.0
    %721 = vmatpush1.msra.mxu0 0.0
    %722 = vmatprep.subr.mxu0 0.0
    %723 = vmatpush1.msra.mxu0 0.0
    %724 = vmatprep.subr.mxu0 0.0
    %725 = vmatpush1.msra.mxu0 0.0
    %726 = vmatprep.subr.mxu0 0.0
    %727 = vmatpush1.msra.mxu0 0.0
    %728 = vmatprep.subr.mxu0 0.0
    %729 = vmatpush1.msra.mxu0 0.0
    %730 = vmatprep.subr.mxu0 0.0
    %731 = vmatpush1.msra.mxu0 0.0
    %732 = vmatprep.subr.mxu0 0.0
    %733 = vmatpush1.msra.mxu0 0.0
    %734 = vmatprep.subr.mxu0 0.0
    %735 = vmatpush1.msra.mxu0 0.0
    %736 = vmatprep.subr.mxu0 0.0
    %737 = vmatpush1.msra.mxu0 0.0
    %738 = vmatprep.subr.mxu0 0.0
    %739 = vmatpush1.msra.mxu0 0.0
    %740 = vmatprep.mubr.f32.mxu0 0.0
    %741 = vmatmul.mubr.f32.gmra.mrb[0].mxu0 %v660
    %v742 = vpop.f32.mrb[0].mxu0
    %v743 = vadd.f32 0.0, %v742
    %v744 = vpop.f32.mrb[0].mxu0
    %745 = vmatprep.mubr.f32.mxu0 0.0
    %746 = vmatmul.mubr.f32.gmra.mrb[0].mxu0 %v661
    %v747 = vpop.f32.mrb[0].mxu0
    %v748 = vadd.f32 0.0, %v747
    %v749 = vpop.f32.mrb[0].mxu0
    %750 = vmatprep.mubr.f32.mxu0 0.0
    %751 = vmatmul.mubr.f32.gmra.mrb[0].mxu0 %v662
    %v752 = vpop.f32.mrb[0].mxu0
    %v753 = vadd.f32 0.0, %v752
    %v754 = vpop.f32.mrb[0].mxu0
    %755 = vmatprep.mubr.f32.mxu0 0.0
    %756 = vmatmul.mubr.f32.gmra.mrb[0].mxu0 %v663
    %v757 = vpop.f32.mrb[0].mxu0
    %v758 = vadd.f32 0.0, %v757
    %v759 = vpop.f32.mrb[0].mxu0
    %760 = vmatprep.mubr.f32.mxu0 0.0
    %761 = vmatmul.mubr.f32.gmra.mrb[0].mxu0 %v664
    %v762 = vpop.f32.mrb[0].mxu0
    %v763 = vadd.f32 0.0, %v762
    %v764 = vpop.f32.mrb[0].mxu0
    %765 = vmatprep.mubr.f32.mxu0 0.0
    %766 = vmatmul.mubr.f32.gmra.mrb[0].mxu0 %v665
    %v767 = vpop.f32.mrb[0].mxu0
    %v768 = vadd.f32 0.0, %v767
    %v769 = vpop.f32.mrb[0].mxu0
    %770 = vmatprep.mubr.f32.mxu0 0.0
    %771 = vmatmul.mubr.f32.gmra.mrb[0].mxu0 %v666
    %v772 = vpop.f32.mrb[0].mxu0
    %v773 = vadd.f32 0.0, %v772
    %v774 = vpop.f32.mrb[0].mxu0
    %775 = vmatprep.mubr.f32.mxu0 0.0
    %776 = vmatmul.mubr.f32.gmra.mrb[0].mxu0 %v667
    %v777 = vpop.f32.mrb[0].mxu0
    %v778 = vadd.f32 0.0, %v777
    %v779 = vpop.f32.mrb[0].mxu0
    %780 = vmatprep.mubr.f32.mxu0 0.0
    %781 = vmatmul.mubr.f32.gmra.mrb[0].mxu0 %v668
    %v782 = vpop.f32.mrb[0].mxu0
    %v783 = vadd.f32 0.0, %v782
    %v784 = vpop.f32.mrb[0].mxu0
    %785 = vmatprep.mubr.f32.mxu0 0.0
    %786 = vmatmul.mubr.f32.gmra.mrb[0].mxu0 %v669
    %v787 = vpop.f32.mrb[0].mxu0
    %v788 = vadd.f32 0.0, %v787
    %v789 = vpop.f32.mrb[0].mxu0
    %790 = vmatprep.mubr.f32.mxu0 0.0
    %791 = vmatmul.mubr.f32.gmra.mrb[0].mxu0 %v670
    %v792 = vpop.f32.mrb[0].mxu0
    %v793 = vadd.f32 0.0, %v792
    %v794 = vpop.f32.mrb[0].mxu0
    %795 = vmatprep.mubr.f32.mxu0 0.0
    %796 = vmatmul.mubr.f32.gmra.mrb[0].mxu0 %v671
    %v797 = vpop.f32.mrb[0].mxu0
    %v798 = vadd.f32 0.0, %v797
    %v799 = vpop.f32.mrb[0].mxu0
    %800 = vmatprep.mubr.f32.mxu0 0.0
    %801 = vmatmul.mubr.f32.gmra.mrb[0].mxu0 %v672
    %v802 = vpop.f32.mrb[0].mxu0
    %v803 = vadd.f32 0.0, %v802
    %v804 = vpop.f32.mrb[0].mxu0
    %805 = vmatprep.mubr.f32.mxu0 0.0
    %806 = vmatmul.mubr.f32.gmra.mrb[0].mxu0 %v673
    %v807 = vpop.f32.mrb[0].mxu0
    %v808 = vadd.f32 0.0, %v807
    %v809 = vpop.f32.mrb[0].mxu0
    %810 = vmatprep.mubr.f32.mxu0 0.0
    %811 = vmatmul.mubr.f32.gmra.mrb[0].mxu0 %v674
    %v812 = vpop.f32.mrb[0].mxu0
    %v813 = vadd.f32 0.0, %v812
    %v814 = vpop.f32.mrb[0].mxu0
    %815 = vmatprep.mubr.f32.mxu0 0.0
    %816 = vmatmul.mubr.f32.gmra.mrb[0].mxu0 %v675
    %v817 = vpop.f32.mrb[0].mxu0
    %v818 = vadd.f32 0.0, %v817
    %v819 = vpop.f32.mrb[0].mxu0
    %820 = vdwg.mxu0
    %821 = vmatprep.subr.mxu0 0.0
    %822 = vmatpush1.msra.mxu0 %v743
    %823 = vmatprep.subr.mxu0 0.0
    %824 = vmatpush1.msra.mxu0 %v748
    %825 = vmatprep.subr.mxu0 0.0
    %826 = vmatpush1.msra.mxu0 %v753
    %827 = vmatprep.subr.mxu0 0.0
    %828 = vmatpush1.msra.mxu0 %v758
    %829 = vmatprep.subr.mxu0 0.0
    %830 = vmatpush1.msra.mxu0 %v763
    %831 = vmatprep.subr.mxu0 0.0
    %832 = vmatpush1.msra.mxu0 %v768
    %833 = vmatprep.subr.mxu0 0.0
    %834 = vmatpush1.msra.mxu0 %v773
    %835 = vmatprep.subr.mxu0 0.0
    %836 = vmatpush1.msra.mxu0 %v778
    %837 = vmatprep.subr.mxu0 0.0
    %838 = vmatpush1.msra.mxu0 %v783
    %839 = vmatprep.subr.mxu0 0.0
    %840 = vmatpush1.msra.mxu0 %v788
    %841 = vmatprep.subr.mxu0 0.0
    %842 = vmatpush1.msra.mxu0 %v793
    %843 = vmatprep.subr.mxu0 0.0
    %844 = vmatpush1.msra.mxu0 %v798
    %845 = vmatprep.subr.mxu0 0.0
    %846 = vmatpush1.msra.mxu0 %v803
    %847 = vmatprep.subr.mxu0 0.0
    %848 = vmatpush1.msra.mxu0 %v808
    %849 = vmatprep.subr.mxu0 0.0
    %850 = vmatpush1.msra.mxu0 %v813
    %851 = vmatprep.subr.mxu0 0.0
    %852 = vmatpush1.msra.mxu0 %v818
    %853 = vmatprep.subr.mxu0 0.0
    %854 = vmatpush1.msra.mxu0 0.0
    %855 = vmatprep.subr.mxu0 0.0
    %856 = vmatpush1.msra.mxu0 0.0
    %857 = vmatprep.subr.mxu0 0.0
    %858 = vmatpush1.msra.mxu0 0.0
    %859 = vmatprep.subr.mxu0 0.0
    %860 = vmatpush1.msra.mxu0 0.0
    %861 = vmatprep.subr.mxu0 0.0
    %862 = vmatpush1.msra.mxu0 0.0
    %863 = vmatprep.subr.mxu0 0.0
    %864 = vmatpush1.msra.mxu0 0.0
    %865 = vmatprep.subr.mxu0 0.0
    %866 = vmatpush1.msra.mxu0 0.0
    %867 = vmatprep.subr.mxu0 0.0
    %868 = vmatpush1.msra.mxu0 0.0
    %869 = vmatprep.subr.mxu0 0.0
    %870 = vmatpush1.msra.mxu0 0.0
    %871 = vmatprep.subr.mxu0 0.0
    %872 = vmatpush1.msra.mxu0 0.0
    %873 = vmatprep.subr.mxu0 0.0
    %874 = vmatpush1.msra.mxu0 0.0
    %875 = vmatprep.subr.mxu0 0.0
    %876 = vmatpush1.msra.mxu0 0.0
    %877 = vmatprep.subr.mxu0 0.0
    %878 = vmatpush1.msra.mxu0 0.0
    %879 = vmatprep.subr.mxu0 0.0
    %880 = vmatpush1.msra.mxu0 0.0
    %881 = vmatprep.subr.mxu0 0.0
    %882 = vmatpush1.msra.mxu0 0.0
    %883 = vmatprep.subr.mxu0 0.0
    %884 = vmatpush1.msra.mxu0 0.0
    %885 = vmatprep.mubr.f32.mxu0 0.0
    %886 = vmatmul.mubr.f32.gmra.mrb[0].mxu0 %v743
    %v887 = vpop.f32.mrb[0].mxu0
    %v888 = vadd.f32 0.0, %v887
    %v889 = vpop.f32.mrb[0].mxu0
    %890 = vmatprep.mubr.f32.mxu0 0.0
    %891 = vmatmul.mubr.f32.gmra.mrb[0].mxu0 %v748
    %v892 = vpop.f32.mrb[0].mxu0
    %v893 = vadd.f32 0.0, %v892
    %v894 = vpop.f32.mrb[0].mxu0
    %895 = vmatprep.mubr.f32.mxu0 0.0
    %896 = vmatmul.mubr.f32.gmra.mrb[0].mxu0 %v753
    %v897 = vpop.f32.mrb[0].mxu0
    %v898 = vadd.f32 0.0, %v897
    %v899 = vpop.f32.mrb[0].mxu0
    %900 = vmatprep.mubr.f32.mxu0 0.0
    %901 = vmatmul.mubr.f32.gmra.mrb[0].mxu0 %v758
    %v902 = vpop.f32.mrb[0].mxu0
    %v903 = vadd.f32 0.0, %v902
    %v904 = vpop.f32.mrb[0].mxu0
    %905 = vmatprep.mubr.f32.mxu0 0.0
    %906 = vmatmul.mubr.f32.gmra.mrb[0].mxu0 %v763
    %v907 = vpop.f32.mrb[0].mxu0
    %v908 = vadd.f32 0.0, %v907
    %v909 = vpop.f32.mrb[0].mxu0
    %910 = vmatprep.mubr.f32.mxu0 0.0
    %911 = vmatmul.mubr.f32.gmra.mrb[0].mxu0 %v768
    %v912 = vpop.f32.mrb[0].mxu0
    %v913 = vadd.f32 0.0, %v912
    %v914 = vpop.f32.mrb[0].mxu0
    %915 = vmatprep.mubr.f32.mxu0 0.0
    %916 = vmatmul.mubr.f32.gmra.mrb[0].mxu0 %v773
    %v917 = vpop.f32.mrb[0].mxu0
    %v918 = vadd.f32 0.0, %v917
    %v919 = vpop.f32.mrb[0].mxu0
    %920 = vmatprep.mubr.f32.mxu0 0.0
    %921 = vmatmul.mubr.f32.gmra.mrb[0].mxu0 %v778
    %v922 = vpop.f32.mrb[0].mxu0
    %v923 = vadd.f32 0.0, %v922
    %v924 = vpop.f32.mrb[0].mxu0
    %925 = vmatprep.mubr.f32.mxu0 0.0
    %926 = vmatmul.mubr.f32.gmra.mrb[0].mxu0 %v783
    %v927 = vpop.f32.mrb[0].mxu0
    %v928 = vadd.f32 0.0, %v927
    %v929 = vpop.f32.mrb[0].mxu0
    %930 = vmatprep.mubr.f32.mxu0 0.0
    %931 = vmatmul.mubr.f32.gmra.mrb[0].mxu0 %v788
    %v932 = vpop.f32.mrb[0].mxu0
    %v933 = vadd.f32 0.0, %v932
    %v934 = vpop.f32.mrb[0].mxu0
    %935 = vmatprep.mubr.f32.mxu0 0.0
    %936 = vmatmul.mubr.f32.gmra.mrb[0].mxu0 %v793
    %v937 = vpop.f32.mrb[0].mxu0
    %v938 = vadd.f32 0.0, %v937
    %v939 = vpop.f32.mrb[0].mxu0
    %940 = vmatprep.mubr.f32.mxu0 0.0
    %941 = vmatmul.mubr.f32.gmra.mrb[0].mxu0 %v798
    %v942 = vpop.f32.mrb[0].mxu0
    %v943 = vadd.f32 0.0, %v942
    %v944 = vpop.f32.mrb[0].mxu0
    %945 = vmatprep.mubr.f32.mxu0 0.0
    %946 = vmatmul.mubr.f32.gmra.mrb[0].mxu0 %v803
    %v947 = vpop.f32.mrb[0].mxu0
    %v948 = vadd.f32 0.0, %v947
    %v949 = vpop.f32.mrb[0].mxu0
    %950 = vmatprep.mubr.f32.mxu0 0.0
    %951 = vmatmul.mubr.f32.gmra.mrb[0].mxu0 %v808
    %v952 = vpop.f32.mrb[0].mxu0
    %v953 = vadd.f32 0.0, %v952
    %v954 = vpop.f32.mrb[0].mxu0
    %955 = vmatprep.mubr.f32.mxu0 0.0
    %956 = vmatmul.mubr.f32.gmra.mrb[0].mxu0 %v813
    %v957 = vpop.f32.mrb[0].mxu0
    %v958 = vadd.f32 0.0, %v957
    %v959 = vpop.f32.mrb[0].mxu0
    %960 = vmatprep.mubr.f32.mxu0 0.0
    %961 = vmatmul.mubr.f32.gmra.mrb[0].mxu0 %v818
    %v962 = vpop.f32.mrb[0].mxu0
    %v963 = vadd.f32 0.0, %v962
    %v964 = vpop.f32.mrb[0].mxu0
    %965 = vdwg.mxu0
    %966 = vmatprep.subr.mxu0 0.0
    %967 = vmatpush1.msra.mxu0 %v888
    %968 = vmatprep.subr.mxu0 0.0
    %969 = vmatpush1.msra.mxu0 %v893
    %970 = vmatprep.subr.mxu0 0.0
    %971 = vmatpush1.msra.mxu0 %v898
    %972 = vmatprep.subr.mxu0 0.0
    %973 = vmatpush1.msra.mxu0 %v903
    %974 = vmatprep.subr.mxu0 0.0
    %975 = vmatpush1.msra.mxu0 %v908
    %976 = vmatprep.subr.mxu0 0.0
    %977 = vmatpush1.msra.mxu0 %v913
    %978 = vmatprep.subr.mxu0 0.0
    %979 = vmatpush1.msra.mxu0 %v918
    %980 = vmatprep.subr.mxu0 0.0
    %981 = vmatpush1.msra.mxu0 %v923
    %982 = vmatprep.subr.mxu0 0.0
    %983 = vmatpush1.msra.mxu0 %v928
    %984 = vmatprep.subr.mxu0 0.0
    %985 = vmatpush1.msra.mxu0 %v933
    %986 = vmatprep.subr.mxu0 0.0
    %987 = vmatpush1.msra.mxu0 %v938
    %988 = vmatprep.subr.mxu0 0.0
    %989 = vmatpush1.msra.mxu0 %v943
    %990 = vmatprep.subr.mxu0 0.0
    %991 = vmatpush1.msra.mxu0 %v948
    %992 = vmatprep.subr.mxu0 0.0
    %993 = vmatpush1.msra.mxu0 %v953
    %994 = vmatprep.subr.mxu0 0.0
    %995 = vmatpush1.msra.mxu0 %v958
    %996 = vmatprep.subr.mxu0 0.0
    %997 = vmatpush1.msra.mxu0 %v963
    %998 = vmatprep.subr.mxu0 0.0
    %999 = vmatpush1.msra.mxu0 0.0
    %1000 = vmatprep.subr.mxu0 0.0
    %1001 = vmatpush1.msra.mxu0 0.0
    %1002 = vmatprep.subr.mxu0 0.0
    %1003 = vmatpush1.msra.mxu0 0.0
    %1004 = vmatprep.subr.mxu0 0.0
    %1005 = vmatpush1.msra.mxu0 0.0
    %1006 = vmatprep.subr.mxu0 0.0
    %1007 = vmatpush1.msra.mxu0 0.0
    %1008 = vmatprep.subr.mxu0 0.0
    %1009 = vmatpush1.msra.mxu0 0.0
    %1010 = vmatprep.subr.mxu0 0.0
    %1011 = vmatpush1.msra.mxu0 0.0
    %1012 = vmatprep.subr.mxu0 0.0
    %1013 = vmatpush1.msra.mxu0 0.0
    %1014 = vmatprep.subr.mxu0 0.0
    %1015 = vmatpush1.msra.mxu0 0.0
    %1016 = vmatprep.subr.mxu0 0.0
    %1017 = vmatpush1.msra.mxu0 0.0
    %1018 = vmatprep.subr.mxu0 0.0
    %1019 = vmatpush1.msra.mxu0 0.0
    %1020 = vmatprep.subr.mxu0 0.0
    %1021 = vmatpush1.msra.mxu0 0.0
    %1022 = vmatprep.subr.mxu0 0.0
    %1023 = vmatpush1.msra.mxu0 0.0
    %1024 = vmatprep.subr.mxu0 0.0
    %1025 = vmatpush1.msra.mxu0 0.0
    %1026 = vmatprep.subr.mxu0 0.0
    %1027 = vmatpush1.msra.mxu0 0.0
    %1028 = vmatprep.subr.mxu0 0.0
    %1029 = vmatpush1.msra.mxu0 0.0
    %1030 = vmatprep.mubr.f32.mxu0 0.0
    %1031 = vmatmul.mubr.f32.gmra.mrb[0].mxu0 %v888
    %v1032 = vpop.f32.mrb[0].mxu0
    %v1033 = vadd.f32 0.0, %v1032
    %v1034 = vpop.f32.mrb[0].mxu0
    %1035 = vmatprep.mubr.f32.mxu0 0.0
    %1036 = vmatmul.mubr.f32.gmra.mrb[0].mxu0 %v893
    %v1037 = vpop.f32.mrb[0].mxu0
    %v1038 = vadd.f32 0.0, %v1037
    %v1039 = vpop.f32.mrb[0].mxu0
    %1040 = vmatprep.mubr.f32.mxu0 0.0
    %1041 = vmatmul.mubr.f32.gmra.mrb[0].mxu0 %v898
    %v1042 = vpop.f32.mrb[0].mxu0
    %v1043 = vadd.f32 0.0, %v1042
    %v1044 = vpop.f32.mrb[0].mxu0
    %1045 = vmatprep.mubr.f32.mxu0 0.0
    %1046 = vmatmul.mubr.f32.gmra.mrb[0].mxu0 %v903
    %v1047 = vpop.f32.mrb[0].mxu0
    %v1048 = vadd.f32 0.0, %v1047
    %v1049 = vpop.f32.mrb[0].mxu0
    %1050 = vmatprep.mubr.f32.mxu0 0.0
    %1051 = vmatmul.mubr.f32.gmra.mrb[0].mxu0 %v908
    %v1052 = vpop.f32.mrb[0].mxu0
    %v1053 = vadd.f32 0.0, %v1052
    %v1054 = vpop.f32.mrb[0].mxu0
    %1055 = vmatprep.mubr.f32.mxu0 0.0
    %1056 = vmatmul.mubr.f32.gmra.mrb[0].mxu0 %v913
    %v1057 = vpop.f32.mrb[0].mxu0
    %v1058 = vadd.f32 0.0, %v1057
    %v1059 = vpop.f32.mrb[0].mxu0
    %1060 = vmatprep.mubr.f32.mxu0 0.0
    %1061 = vmatmul.mubr.f32.gmra.mrb[0].mxu0 %v918
    %v1062 = vpop.f32.mrb[0].mxu0
    %v1063 = vadd.f32 0.0, %v1062
    %v1064 = vpop.f32.mrb[0].mxu0
    %1065 = vmatprep.mubr.f32.mxu0 0.0
    %1066 = vmatmul.mubr.f32.gmra.mrb[0].mxu0 %v923
    %v1067 = vpop.f32.mrb[0].mxu0
    %v1068 = vadd.f32 0.0, %v1067
    %v1069 = vpop.f32.mrb[0].mxu0
    %1070 = vmatprep.mubr.f32.mxu0 0.0
    %1071 = vmatmul.mubr.f32.gmra.mrb[0].mxu0 %v928
    %v1072 = vpop.f32.mrb[0].mxu0
    %v1073 = vadd.f32 0.0, %v1072
    %v1074 = vpop.f32.mrb[0].mxu0
    %1075 = vmatprep.mubr.f32.mxu0 0.0
    %1076 = vmatmul.mubr.f32.gmra.mrb[0].mxu0 %v933
    %v1077 = vpop.f32.mrb[0].mxu0
    %v1078 = vadd.f32 0.0, %v1077
    %v1079 = vpop.f32.mrb[0].mxu0
    %1080 = vmatprep.mubr.f32.mxu0 0.0
    %1081 = vmatmul.mubr.f32.gmra.mrb[0].mxu0 %v938
    %v1082 = vpop.f32.mrb[0].mxu0
    %v1083 = vadd.f32 0.0, %v1082
    %v1084 = vpop.f32.mrb[0].mxu0
    %1085 = vmatprep.mubr.f32.mxu0 0.0
    %1086 = vmatmul.mubr.f32.gmra.mrb[0].mxu0 %v943
    %v1087 = vpop.f32.mrb[0].mxu0
    %v1088 = vadd.f32 0.0, %v1087
    %v1089 = vpop.f32.mrb[0].mxu0
    %1090 = vmatprep.mubr.f32.mxu0 0.0
    %1091 = vmatmul.mubr.f32.gmra.mrb[0].mxu0 %v948
    %v1092 = vpop.f32.mrb[0].mxu0
    %v1093 = vadd.f32 0.0, %v1092
    %v1094 = vpop.f32.mrb[0].mxu0
    %1095 = vmatprep.mubr.f32.mxu0 0.0
    %1096 = vmatmul.mubr.f32.gmra.mrb[0].mxu0 %v953
    %v1097 = vpop.f32.mrb[0].mxu0
    %v1098 = vadd.f32 0.0, %v1097
    %v1099 = vpop.f32.mrb[0].mxu0
    %1100 = vmatprep.mubr.f32.mxu0 0.0
    %1101 = vmatmul.mubr.f32.gmra.mrb[0].mxu0 %v958
    %v1102 = vpop.f32.mrb[0].mxu0
    %v1103 = vadd.f32 0.0, %v1102
    %v1104 = vpop.f32.mrb[0].mxu0
    %1105 = vmatprep.mubr.f32.mxu0 0.0
    %1106 = vmatmul.mubr.f32.gmra.mrb[0].mxu0 %v963
    %v1107 = vpop.f32.mrb[0].mxu0
    %v1108 = vadd.f32 0.0, %v1107
    %v1109 = vpop.f32.mrb[0].mxu0
    %1110 = vdwg.mxu0
    %1111 = vmatprep.subr.mxu0 0.0
    %1112 = vmatpush1.msra.mxu0 %v1033
    %1113 = vmatprep.subr.mxu0 0.0
    %1114 = vmatpush1.msra.mxu0 %v1038
    %1115 = vmatprep.subr.mxu0 0.0
    %1116 = vmatpush1.msra.mxu0 %v1043
    %1117 = vmatprep.subr.mxu0 0.0
    %1118 = vmatpush1.msra.mxu0 %v1048
    %1119 = vmatprep.subr.mxu0 0.0
    %1120 = vmatpush1.msra.mxu0 %v1053
    %1121 = vmatprep.subr.mxu0 0.0
    %1122 = vmatpush1.msra.mxu0 %v1058
    %1123 = vmatprep.subr.mxu0 0.0
    %1124 = vmatpush1.msra.mxu0 %v1063
    %1125 = vmatprep.subr.mxu0 0.0
    %1126 = vmatpush1.msra.mxu0 %v1068
    %1127 = vmatprep.subr.mxu0 0.0
    %1128 = vmatpush1.msra.mxu0 %v1073
    %1129 = vmatprep.subr.mxu0 0.0
    %1130 = vmatpush1.msra.mxu0 %v1078
    %1131 = vmatprep.subr.mxu0 0.0
    %1132 = vmatpush1.msra.mxu0 %v1083
    %1133 = vmatprep.subr.mxu0 0.0
    %1134 = vmatpush1.msra.mxu0 %v1088
    %1135 = vmatprep.subr.mxu0 0.0
    %1136 = vmatpush1.msra.mxu0 %v1093
    %1137 = vmatprep.subr.mxu0 0.0
    %1138 = vmatpush1.msra.mxu0 %v1098
    %1139 = vmatprep.subr.mxu0 0.0
    %1140 = vmatpush1.msra.mxu0 %v1103
    %1141 = vmatprep.subr.mxu0 0.0
    %1142 = vmatpush1.msra.mxu0 %v1108
    %1143 = vmatprep.subr.mxu0 0.0
    %1144 = vmatpush1.msra.mxu0 0.0
    %1145 = vmatprep.subr.mxu0 0.0
    %1146 = vmatpush1.msra.mxu0 0.0
    %1147 = vmatprep.subr.mxu0 0.0
    %1148 = vmatpush1.msra.mxu0 0.0
    %1149 = vmatprep.subr.mxu0 0.0
    %1150 = vmatpush1.msra.mxu0 0.0
    %1151 = vmatprep.subr.mxu0 0.0
    %1152 = vmatpush1.msra.mxu0 0.0
    %1153 = vmatprep.subr.mxu0 0.0
    %1154 = vmatpush1.msra.mxu0 0.0
    %1155 = vmatprep.subr.mxu0 0.0
    %1156 = vmatpush1.msra.mxu0 0.0
    %1157 = vmatprep.subr.mxu0 0.0
    %1158 = vmatpush1.msra.mxu0 0.0
    %1159 = vmatprep.subr.mxu0 0.0
    %1160 = vmatpush1.msra.mxu0 0.0
    %1161 = vmatprep.subr.mxu0 0.0
    %1162 = vmatpush1.msra.mxu0 0.0
    %1163 = vmatprep.subr.mxu0 0.0
    %1164 = vmatpush1.msra.mxu0 0.0
    %1165 = vmatprep.subr.mxu0 0.0
    %1166 = vmatpush1.msra.mxu0 0.0
    %1167 = vmatprep.subr.mxu0 0.0
    %1168 = vmatpush1.msra.mxu0 0.0
    %1169 = vmatprep.subr.mxu0 0.0
    %1170 = vmatpush1.msra.mxu0 0.0
    %1171 = vmatprep.subr.mxu0 0.0
    %1172 = vmatpush1.msra.mxu0 0.0
    %1173 = vmatprep.subr.mxu0 0.0
    %1174 = vmatpush1.msra.mxu0 0.0
    %1175 = vmatprep.mubr.f32.mxu0 0.0
    %1176 = vmatmul.mubr.f32.gmra.mrb[0].mxu0 %v1033
    %v1177 = vpop.f32.mrb[0].mxu0
    %v1178 = vadd.f32 0.0, %v1177
    %v1179 = vpop.f32.mrb[0].mxu0
    %1180 = vmatprep.mubr.f32.mxu0 0.0
    %1181 = vmatmul.mubr.f32.gmra.mrb[0].mxu0 %v1038
    %v1182 = vpop.f32.mrb[0].mxu0
    %v1183 = vadd.f32 0.0, %v1182
    %v1184 = vpop.f32.mrb[0].mxu0
    %1185 = vmatprep.mubr.f32.mxu0 0.0
    %1186 = vmatmul.mubr.f32.gmra.mrb[0].mxu0 %v1043
    %v1187 = vpop.f32.mrb[0].mxu0
    %v1188 = vadd.f32 0.0, %v1187
    %v1189 = vpop.f32.mrb[0].mxu0
    %1190 = vmatprep.mubr.f32.mxu0 0.0
    %1191 = vmatmul.mubr.f32.gmra.mrb[0].mxu0 %v1048
    %v1192 = vpop.f32.mrb[0].mxu0
    %v1193 = vadd.f32 0.0, %v1192
    %v1194 = vpop.f32.mrb[0].mxu0
    %1195 = vmatprep.mubr.f32.mxu0 0.0
    %1196 = vmatmul.mubr.f32.gmra.mrb[0].mxu0 %v1053
    %v1197 = vpop.f32.mrb[0].mxu0
    %v1198 = vadd.f32 0.0, %v1197
    %v1199 = vpop.f32.mrb[0].mxu0
    %1200 = vmatprep.mubr.f32.mxu0 0.0
    %1201 = vmatmul.mubr.f32.gmra.mrb[0].mxu0 %v1058
    %v1202 = vpop.f32.mrb[0].mxu0
    %v1203 = vadd.f32 0.0, %v1202
    %v1204 = vpop.f32.mrb[0].mxu0
    %1205 = vmatprep.mubr.f32.mxu0 0.0
    %1206 = vmatmul.mubr.f32.gmra.mrb[0].mxu0 %v1063
    %v1207 = vpop.f32.mrb[0].mxu0
    %v1208 = vadd.f32 0.0, %v1207
    %v1209 = vpop.f32.mrb[0].mxu0
    %1210 = vmatprep.mubr.f32.mxu0 0.0
    %1211 = vmatmul.mubr.f32.gmra.mrb[0].mxu0 %v1068
    %v1212 = vpop.f32.mrb[0].mxu0
    %v1213 = vadd.f32 0.0, %v1212
    %v1214 = vpop.f32.mrb[0].mxu0
    %1215 = vmatprep.mubr.f32.mxu0 0.0
    %1216 = vmatmul.mubr.f32.gmra.mrb[0].mxu0 %v1073
    %v1217 = vpop.f32.mrb[0].mxu0
    %v1218 = vadd.f32 0.0, %v1217
    %v1219 = vpop.f32.mrb[0].mxu0
    %1220 = vmatprep.mubr.f32.mxu0 0.0
    %1221 = vmatmul.mubr.f32.gmra.mrb[0].mxu0 %v1078
    %v1222 = vpop.f32.mrb[0].mxu0
    %v1223 = vadd.f32 0.0, %v1222
    %v1224 = vpop.f32.mrb[0].mxu0
    %1225 = vmatprep.mubr.f32.mxu0 0.0
    %1226 = vmatmul.mubr.f32.gmra.mrb[0].mxu0 %v1083
    %v1227 = vpop.f32.mrb[0].mxu0
    %v1228 = vadd.f32 0.0, %v1227
    %v1229 = vpop.f32.mrb[0].mxu0
    %1230 = vmatprep.mubr.f32.mxu0 0.0
    %1231 = vmatmul.mubr.f32.gmra.mrb[0].mxu0 %v1088
    %v1232 = vpop.f32.mrb[0].mxu0
    %v1233 = vadd.f32 0.0, %v1232
    %v1234 = vpop.f32.mrb[0].mxu0
    %1235 = vmatprep.mubr.f32.mxu0 0.0
    %1236 = vmatmul.mubr.f32.gmra.mrb[0].mxu0 %v1093
    %v1237 = vpop.f32.mrb[0].mxu0
    %v1238 = vadd.f32 0.0, %v1237
    %v1239 = vpop.f32.mrb[0].mxu0
    %1240 = vmatprep.mubr.f32.mxu0 0.0
    %1241 = vmatmul.mubr.f32.gmra.mrb[0].mxu0 %v1098
    %v1242 = vpop.f32.mrb[0].mxu0
    %v1243 = vadd.f32 0.0, %v1242
    %v1244 = vpop.f32.mrb[0].mxu0
    %1245 = vmatprep.mubr.f32.mxu0 0.0
    %1246 = vmatmul.mubr.f32.gmra.mrb[0].mxu0 %v1103
    %v1247 = vpop.f32.mrb[0].mxu0
    %v1248 = vadd.f32 0.0, %v1247
    %v1249 = vpop.f32.mrb[0].mxu0
    %1250 = vmatprep.mubr.f32.mxu0 0.0
    %1251 = vmatmul.mubr.f32.gmra.mrb[0].mxu0 %v1108
    %v1252 = vpop.f32.mrb[0].mxu0
    %v1253 = vadd.f32 0.0, %v1252
    %v1254 = vpop.f32.mrb[0].mxu0
    %1255 = vdwg.mxu0
    %1256 = vmatprep.subr.mxu0 0.0
    %1257 = vmatpush1.msra.mxu0 %v1178
    %1258 = vmatprep.subr.mxu0 0.0
    %1259 = vmatpush1.msra.mxu0 %v1183
    %1260 = vmatprep.subr.mxu0 0.0
    %1261 = vmatpush1.msra.mxu0 %v1188
    %1262 = vmatprep.subr.mxu0 0.0
    %1263 = vmatpush1.msra.mxu0 %v1193
    %1264 = vmatprep.subr.mxu0 0.0
    %1265 = vmatpush1.msra.mxu0 %v1198
    %1266 = vmatprep.subr.mxu0 0.0
    %1267 = vmatpush1.msra.mxu0 %v1203
    %1268 = vmatprep.subr.mxu0 0.0
    %1269 = vmatpush1.msra.mxu0 %v1208
    %1270 = vmatprep.subr.mxu0 0.0
    %1271 = vmatpush1.msra.mxu0 %v1213
    %1272 = vmatprep.subr.mxu0 0.0
    %1273 = vmatpush1.msra.mxu0 %v1218
    %1274 = vmatprep.subr.mxu0 0.0
    %1275 = vmatpush1.msra.mxu0 %v1223
    %1276 = vmatprep.subr.mxu0 0.0
    %1277 = vmatpush1.msra.mxu0 %v1228
    %1278 = vmatprep.subr.mxu0 0.0
    %1279 = vmatpush1.msra.mxu0 %v1233
    %1280 = vmatprep.subr.mxu0 0.0
    %1281 = vmatpush1.msra.mxu0 %v1238
    %1282 = vmatprep.subr.mxu0 0.0
    %1283 = vmatpush1.msra.mxu0 %v1243
    %1284 = vmatprep.subr.mxu0 0.0
    %1285 = vmatpush1.msra.mxu0 %v1248
    %1286 = vmatprep.subr.mxu0 0.0
    %1287 = vmatpush1.msra.mxu0 %v1253
    %1288 = vmatprep.subr.mxu0 0.0
    %1289 = vmatpush1.msra.mxu0 0.0
    %1290 = vmatprep.subr.mxu0 0.0
    %1291 = vmatpush1.msra.mxu0 0.0
    %1292 = vmatprep.subr.mxu0 0.0
    %1293 = vmatpush1.msra.mxu0 0.0
    %1294 = vmatprep.subr.mxu0 0.0
    %1295 = vmatpush1.msra.mxu0 0.0
    %1296 = vmatprep.subr.mxu0 0.0
    %1297 = vmatpush1.msra.mxu0 0.0
    %1298 = vmatprep.subr.mxu0 0.0
    %1299 = vmatpush1.msra.mxu0 0.0
    %1300 = vmatprep.subr.mxu0 0.0
    %1301 = vmatpush1.msra.mxu0 0.0
    %1302 = vmatprep.subr.mxu0 0.0
    %1303 = vmatpush1.msra.mxu0 0.0
    %1304 = vmatprep.subr.mxu0 0.0
    %1305 = vmatpush1.msra.mxu0 0.0
    %1306 = vmatprep.subr.mxu0 0.0
    %1307 = vmatpush1.msra.mxu0 0.0
    %1308 = vmatprep.subr.mxu0 0.0
    %1309 = vmatpush1.msra.mxu0 0.0
    %1310 = vmatprep.subr.mxu0 0.0
    %1311 = vmatpush1.msra.mxu0 0.0
    %1312 = vmatprep.subr.mxu0 0.0
    %1313 = vmatpush1.msra.mxu0 0.0
    %1314 = vmatprep.subr.mxu0 0.0
    %1315 = vmatpush1.msra.mxu0 0.0
    %1316 = vmatprep.subr.mxu0 0.0
    %1317 = vmatpush1.msra.mxu0 0.0
    %1318 = vmatprep.subr.mxu0 0.0
    %1319 = vmatpush1.msra.mxu0 0.0
    %1320 = vmatprep.mubr.f32.mxu0 0.0
    %1321 = vmatmul.mubr.f32.gmra.mrb[0].mxu0 %v888
    %v1322 = vpop.f32.mrb[0].mxu0
    %v1323 = vadd.f32 0.0, %v1322
    %v1324 = vpop.f32.mrb[0].mxu0
    %1325 = vmatprep.mubr.f32.mxu0 0.0
    %1326 = vmatmul.mubr.f32.gmra.mrb[0].mxu0 %v893
    %v1327 = vpop.f32.mrb[0].mxu0
    %v1328 = vadd.f32 0.0, %v1327
    %v1329 = vpop.f32.mrb[0].mxu0
    %1330 = vmatprep.mubr.f32.mxu0 0.0
    %1331 = vmatmul.mubr.f32.gmra.mrb[0].mxu0 %v898
    %v1332 = vpop.f32.mrb[0].mxu0
    %v1333 = vadd.f32 0.0, %v1332
    %v1334 = vpop.f32.mrb[0].mxu0
    %1335 = vmatprep.mubr.f32.mxu0 0.0
    %1336 = vmatmul.mubr.f32.gmra.mrb[0].mxu0 %v903
    %v1337 = vpop.f32.mrb[0].mxu0
    %v1338 = vadd.f32 0.0, %v1337
    %v1339 = vpop.f32.mrb[0].mxu0
    %1340 = vmatprep.mubr.f32.mxu0 0.0
    %1341 = vmatmul.mubr.f32.gmra.mrb[0].mxu0 %v908
    %v1342 = vpop.f32.mrb[0].mxu0
    %v1343 = vadd.f32 0.0, %v1342
    %v1344 = vpop.f32.mrb[0].mxu0
    %1345 = vmatprep.mubr.f32.mxu0 0.0
    %1346 = vmatmul.mubr.f32.gmra.mrb[0].mxu0 %v913
    %v1347 = vpop.f32.mrb[0].mxu0
    %v1348 = vadd.f32 0.0, %v1347
    %v1349 = vpop.f32.mrb[0].mxu0
    %1350 = vmatprep.mubr.f32.mxu0 0.0
    %1351 = vmatmul.mubr.f32.gmra.mrb[0].mxu0 %v918
    %v1352 = vpop.f32.mrb[0].mxu0
    %v1353 = vadd.f32 0.0, %v1352
    %v1354 = vpop.f32.mrb[0].mxu0
    %1355 = vmatprep.mubr.f32.mxu0 0.0
    %1356 = vmatmul.mubr.f32.gmra.mrb[0].mxu0 %v923
    %v1357 = vpop.f32.mrb[0].mxu0
    %v1358 = vadd.f32 0.0, %v1357
    %v1359 = vpop.f32.mrb[0].mxu0
    %1360 = vmatprep.mubr.f32.mxu0 0.0
    %1361 = vmatmul.mubr.f32.gmra.mrb[0].mxu0 %v928
    %v1362 = vpop.f32.mrb[0].mxu0
    %v1363 = vadd.f32 0.0, %v1362
    %v1364 = vpop.f32.mrb[0].mxu0
    %1365 = vmatprep.mubr.f32.mxu0 0.0
    %1366 = vmatmul.mubr.f32.gmra.mrb[0].mxu0 %v933
    %v1367 = vpop.f32.mrb[0].mxu0
    %v1368 = vadd.f32 0.0, %v1367
    %v1369 = vpop.f32.mrb[0].mxu0
    %1370 = vmatprep.mubr.f32.mxu0 0.0
    %1371 = vmatmul.mubr.f32.gmra.mrb[0].mxu0 %v938
    %v1372 = vpop.f32.mrb[0].mxu0
    %v1373 = vadd.f32 0.0, %v1372
    %v1374 = vpop.f32.mrb[0].mxu0
    %1375 = vmatprep.mubr.f32.mxu0 0.0
    %1376 = vmatmul.mubr.f32.gmra.mrb[0].mxu0 %v943
    %v1377 = vpop.f32.mrb[0].mxu0
    %v1378 = vadd.f32 0.0, %v1377
    %v1379 = vpop.f32.mrb[0].mxu0
    %1380 = vmatprep.mubr.f32.mxu0 0.0
    %1381 = vmatmul.mubr.f32.gmra.mrb[0].mxu0 %v948
    %v1382 = vpop.f32.mrb[0].mxu0
    %v1383 = vadd.f32 0.0, %v1382
    %v1384 = vpop.f32.mrb[0].mxu0
    %1385 = vmatprep.mubr.f32.mxu0 0.0
    %1386 = vmatmul.mubr.f32.gmra.mrb[0].mxu0 %v953
    %v1387 = vpop.f32.mrb[0].mxu0
    %v1388 = vadd.f32 0.0, %v1387
    %v1389 = vpop.f32.mrb[0].mxu0
    %1390 = vmatprep.mubr.f32.mxu0 0.0
    %1391 = vmatmul.mubr.f32.gmra.mrb[0].mxu0 %v958
    %v1392 = vpop.f32.mrb[0].mxu0
    %v1393 = vadd.f32 0.0, %v1392
    %v1394 = vpop.f32.mrb[0].mxu0
    %1395 = vmatprep.mubr.f32.mxu0 0.0
    %1396 = vmatmul.mubr.f32.gmra.mrb[0].mxu0 %v963
    %v1397 = vpop.f32.mrb[0].mxu0
    %v1398 = vadd.f32 0.0, %v1397
    %v1399 = vpop.f32.mrb[0].mxu0
    %1400 = vdwg.mxu0
    %1401 = vmatprep.subr.mxu0 0.0
    %1402 = vmatpush1.msra.mxu0 %v1323
    %1403 = vmatprep.subr.mxu0 0.0
    %1404 = vmatpush1.msra.mxu0 %v1328
    %1405 = vmatprep.subr.mxu0 0.0
    %1406 = vmatpush1.msra.mxu0 %v1333
    %1407 = vmatprep.subr.mxu0 0.0
    %1408 = vmatpush1.msra.mxu0 %v1338
    %1409 = vmatprep.subr.mxu0 0.0
    %1410 = vmatpush1.msra.mxu0 %v1343
    %1411 = vmatprep.subr.mxu0 0.0
    %1412 = vmatpush1.msra.mxu0 %v1348
    %1413 = vmatprep.subr.mxu0 0.0
    %1414 = vmatpush1.msra.mxu0 %v1353
    %1415 = vmatprep.subr.mxu0 0.0
    %1416 = vmatpush1.msra.mxu0 %v1358
    %1417 = vmatprep.subr.mxu0 0.0
    %1418 = vmatpush1.msra.mxu0 %v1363
    %1419 = vmatprep.subr.mxu0 0.0
    %1420 = vmatpush1.msra.mxu0 %v1368
    %1421 = vmatprep.subr.mxu0 0.0
    %1422 = vmatpush1.msra.mxu0 %v1373
    %1423 = vmatprep.subr.mxu0 0.0
    %1424 = vmatpush1.msra.mxu0 %v1378
    %1425 = vmatprep.subr.mxu0 0.0
    %1426 = vmatpush1.msra.mxu0 %v1383
    %1427 = vmatprep.subr.mxu0 0.0
    %1428 = vmatpush1.msra.mxu0 %v1388
    %1429 = vmatprep.subr.mxu0 0.0
    %1430 = vmatpush1.msra.mxu0 %v1393
    %1431 = vmatprep.subr.mxu0 0.0
    %1432 = vmatpush1.msra.mxu0 %v1398
    %1433 = vmatprep.subr.mxu0 0.0
    %1434 = vmatpush1.msra.mxu0 0.0
    %1435 = vmatprep.subr.mxu0 0.0
    %1436 = vmatpush1.msra.mxu0 0.0
    %1437 = vmatprep.subr.mxu0 0.0
    %1438 = vmatpush1.msra.mxu0 0.0
    %1439 = vmatprep.subr.mxu0 0.0
    %1440 = vmatpush1.msra.mxu0 0.0
    %1441 = vmatprep.subr.mxu0 0.0
    %1442 = vmatpush1.msra.mxu0 0.0
    %1443 = vmatprep.subr.mxu0 0.0
    %1444 = vmatpush1.msra.mxu0 0.0
    %1445 = vmatprep.subr.mxu0 0.0
    %1446 = vmatpush1.msra.mxu0 0.0
    %1447 = vmatprep.subr.mxu0 0.0
    %1448 = vmatpush1.msra.mxu0 0.0
    %1449 = vmatprep.subr.mxu0 0.0
    %1450 = vmatpush1.msra.mxu0 0.0
    %1451 = vmatprep.subr.mxu0 0.0
    %1452 = vmatpush1.msra.mxu0 0.0
    %1453 = vmatprep.subr.mxu0 0.0
    %1454 = vmatpush1.msra.mxu0 0.0
    %1455 = vmatprep.subr.mxu0 0.0
    %1456 = vmatpush1.msra.mxu0 0.0
    %1457 = vmatprep.subr.mxu0 0.0
    %1458 = vmatpush1.msra.mxu0 0.0
    %1459 = vmatprep.subr.mxu0 0.0
    %1460 = vmatpush1.msra.mxu0 0.0
    %1461 = vmatprep.subr.mxu0 0.0
    %1462 = vmatpush1.msra.mxu0 0.0
    %1463 = vmatprep.subr.mxu0 0.0
    %1464 = vmatpush1.msra.mxu0 0.0
    %1465 = vmatprep.mubr.f32.mxu0 0.0
    %1466 = vmatmul.mubr.f32.gmra.mrb[0].mxu0 %v110
    %v1467 = vpop.f32.mrb[0].mxu0
    %v1468 = vadd.f32 0.0, %v1467
    %v1469 = vpop.f32.mrb[0].mxu0
    %1470 = vdwg.mxu0
    %1471 = vst [vmem:[%s3] sm:$0xff] %v1468
    %s1472 = sld [smem:[#allocation2 + $0x1]]
    %v1473 = vstv %s1472
    %v1474 = vmul.f32 %v1473, %v27
    %v1475 = vmul.f32 %v1473, %v28
    %v1476 = vmul.f32 %v1473, %v29
    %v1477 = vmul.f32 %v1473, %v30
    %v1478 = vmul.f32 %v1473, %v31
    %v1479 = vmul.f32 %v1473, %v32
    %v1480 = vmul.f32 %v1473, %v33
    %v1481 = vmul.f32 %v1473, %v34
    %v1482 = vmul.f32 %v1473, %v35
    %v1483 = vmul.f32 %v1473, %v36
    %v1484 = vmul.f32 %v1473, %v37
    %v1485 = vmul.f32 %v1473, %v38
    %v1486 = vmul.f32 %v1473, %v39
    %v1487 = vmul.f32 %v1473, %v40
    %v1488 = vmul.f32 %v1473, %v41
    %v1489 = vmul.f32 %v1473, %v42
    %1490 = vmatprep.subr.mxu0 0.0
    %1491 = vmatpush1.msra.mxu0 %v1474
    %1492 = vmatprep.subr.mxu0 0.0
    %1493 = vmatpush1.msra.mxu0 %v1475
    %1494 = vmatprep.subr.mxu0 0.0
    %1495 = vmatpush1.msra.mxu0 %v1476
    %1496 = vmatprep.subr.mxu0 0.0
    %1497 = vmatpush1.msra.mxu0 %v1477
    %1498 = vmatprep.subr.mxu0 0.0
    %1499 = vmatpush1.msra.mxu0 %v1478
    %1500 = vmatprep.subr.mxu0 0.0
    %1501 = vmatpush1.msra.mxu0 %v1479
    %1502 = vmatprep.subr.mxu0 0.0
    %1503 = vmatpush1.msra.mxu0 %v1480
    %1504 = vmatprep.subr.mxu0 0.0
    %1505 = vmatpush1.msra.mxu0 %v1481
    %1506 = vmatprep.subr.mxu0 0.0
    %1507 = vmatpush1.msra.mxu0 %v1482
    %1508 = vmatprep.subr.mxu0 0.0
    %1509 = vmatpush1.msra.mxu0 %v1483
    %1510 = vmatprep.subr.mxu0 0.0
    %1511 = vmatpush1.msra.mxu0 %v1484
    %1512 = vmatprep.subr.mxu0 0.0
    %1513 = vmatpush1.msra.mxu0 %v1485
    %1514 = vmatprep.subr.mxu0 0.0
    %1515 = vmatpush1.msra.mxu0 %v1486
    %1516 = vmatprep.subr.mxu0 0.0
    %1517 = vmatpush1.msra.mxu0 %v1487
    %1518 = vmatprep.subr.mxu0 0.0
    %1519 = vmatpush1.msra.mxu0 %v1488
    %1520 = vmatprep.subr.mxu0 0.0
    %1521 = vmatpush1.msra.mxu0 %v1489
    %1522 = vmatprep.subr.mxu0 0.0
    %1523 = vmatpush1.msra.mxu0 0.0
    %1524 = vmatprep.subr.mxu0 0.0
    %1525 = vmatpush1.msra.mxu0 0.0
    %1526 = vmatprep.subr.mxu0 0.0
    %1527 = vmatpush1.msra.mxu0 0.0
    %1528 = vmatprep.subr.mxu0 0.0
    %1529 = vmatpush1.msra.mxu0 0.0
    %1530 = vmatprep.subr.mxu0 0.0
    %1531 = vmatpush1.msra.mxu0 0.0
    %1532 = vmatprep.subr.mxu0 0.0
    %1533 = vmatpush1.msra.mxu0 0.0
    %1534 = vmatprep.subr.mxu0 0.0
    %1535 = vmatpush1.msra.mxu0 0.0
    %1536 = vmatprep.subr.mxu0 0.0
    %1537 = vmatpush1.msra.mxu0 0.0
    %1538 = vmatprep.subr.mxu0 0.0
    %1539 = vmatpush1.msra.mxu0 0.0
    %1540 = vmatprep.subr.mxu0 0.0
    %1541 = vmatpush1.msra.mxu0 0.0
    %1542 = vmatprep.subr.mxu0 0.0
    %1543 = vmatpush1.msra.mxu0 0.0
    %1544 = vmatprep.subr.mxu0 0.0
    %1545 = vmatpush1.msra.mxu0 0.0
    %1546 = vmatprep.subr.mxu0 0.0
    %1547 = vmatpush1.msra.mxu0 0.0
    %1548 = vmatprep.subr.mxu0 0.0
    %1549 = vmatpush1.msra.mxu0 0.0
    %1550 = vmatprep.subr.mxu0 0.0
    %1551 = vmatpush1.msra.mxu0 0.0
    %1552 = vmatprep.subr.mxu0 0.0
    %1553 = vmatpush1.msra.mxu0 0.0
    %1554 = vmatprep.mubr.f32.mxu0 0.0
    %1555 = vmatmul.mubr.f32.gmra.mrb[0].mxu0 %v1474
    %v1556 = vpop.f32.mrb[0].mxu0
    %v1557 = vadd.f32 0.0, %v1556
    %v1558 = vpop.f32.mrb[0].mxu0
    %1559 = vmatprep.mubr.f32.mxu0 0.0
    %1560 = vmatmul.mubr.f32.gmra.mrb[0].mxu0 %v1475
    %v1561 = vpop.f32.mrb[0].mxu0
    %v1562 = vadd.f32 0.0, %v1561
    %v1563 = vpop.f32.mrb[0].mxu0
    %1564 = vmatprep.mubr.f32.mxu0 0.0
    %1565 = vmatmul.mubr.f32.gmra.mrb[0].mxu0 %v1476
    %v1566 = vpop.f32.mrb[0].mxu0
    %v1567 = vadd.f32 0.0, %v1566
    %v1568 = vpop.f32.mrb[0].mxu0
    %1569 = vmatprep.mubr.f32.mxu0 0.0
    %1570 = vmatmul.mubr.f32.gmra.mrb[0].mxu0 %v1477
    %v1571 = vpop.f32.mrb[0].mxu0
    %v1572 = vadd.f32 0.0, %v1571
    %v1573 = vpop.f32.mrb[0].mxu0
    %1574 = vmatprep.mubr.f32.mxu0 0.0
    %1575 = vmatmul.mubr.f32.gmra.mrb[0].mxu0 %v1478
    %v1576 = vpop.f32.mrb[0].mxu0
    %v1577 = vadd.f32 0.0, %v1576
    %v1578 = vpop.f32.mrb[0].mxu0
    %1579 = vmatprep.mubr.f32.mxu0 0.0
    %1580 = vmatmul.mubr.f32.gmra.mrb[0].mxu0 %v1479
    %v1581 = vpop.f32.mrb[0].mxu0
    %v1582 = vadd.f32 0.0, %v1581
    %v1583 = vpop.f32.mrb[0].mxu0
    %1584 = vmatprep.mubr.f32.mxu0 0.0
    %1585 = vmatmul.mubr.f32.gmra.mrb[0].mxu0 %v1480
    %v1586 = vpop.f32.mrb[0].mxu0
    %v1587 = vadd.f32 0.0, %v1586
    %v1588 = vpop.f32.mrb[0].mxu0
    %1589 = vmatprep.mubr.f32.mxu0 0.0
    %1590 = vmatmul.mubr.f32.gmra.mrb[0].mxu0 %v1481
    %v1591 = vpop.f32.mrb[0].mxu0
    %v1592 = vadd.f32 0.0, %v1591
    %v1593 = vpop.f32.mrb[0].mxu0
    %1594 = vmatprep.mubr.f32.mxu0 0.0
    %1595 = vmatmul.mubr.f32.gmra.mrb[0].mxu0 %v1482
    %v1596 = vpop.f32.mrb[0].mxu0
    %v1597 = vadd.f32 0.0, %v1596
    %v1598 = vpop.f32.mrb[0].mxu0
    %1599 = vmatprep.mubr.f32.mxu0 0.0
    %1600 = vmatmul.mubr.f32.gmra.mrb[0].mxu0 %v1483
    %v1601 = vpop.f32.mrb[0].mxu0
    %v1602 = vadd.f32 0.0, %v1601
    %v1603 = vpop.f32.mrb[0].mxu0
    %1604 = vmatprep.mubr.f32.mxu0 0.0
    %1605 = vmatmul.mubr.f32.gmra.mrb[0].mxu0 %v1484
    %v1606 = vpop.f32.mrb[0].mxu0
    %v1607 = vadd.f32 0.0, %v1606
    %v1608 = vpop.f32.mrb[0].mxu0
    %1609 = vmatprep.mubr.f32.mxu0 0.0
    %1610 = vmatmul.mubr.f32.gmra.mrb[0].mxu0 %v1485
    %v1611 = vpop.f32.mrb[0].mxu0
    %v1612 = vadd.f32 0.0, %v1611
    %v1613 = vpop.f32.mrb[0].mxu0
    %1614 = vmatprep.mubr.f32.mxu0 0.0
    %1615 = vmatmul.mubr.f32.gmra.mrb[0].mxu0 %v1486
    %v1616 = vpop.f32.mrb[0].mxu0
    %v1617 = vadd.f32 0.0, %v1616
    %v1618 = vpop.f32.mrb[0].mxu0
    %1619 = vmatprep.mubr.f32.mxu0 0.0
    %1620 = vmatmul.mubr.f32.gmra.mrb[0].mxu0 %v1487
    %v1621 = vpop.f32.mrb[0].mxu0
    %v1622 = vadd.f32 0.0, %v1621
    %v1623 = vpop.f32.mrb[0].mxu0
    %1624 = vmatprep.mubr.f32.mxu0 0.0
    %1625 = vmatmul.mubr.f32.gmra.mrb[0].mxu0 %v1488
    %v1626 = vpop.f32.mrb[0].mxu0
    %v1627 = vadd.f32 0.0, %v1626
    %v1628 = vpop.f32.mrb[0].mxu0
    %1629 = vmatprep.mubr.f32.mxu0 0.0
    %1630 = vmatmul.mubr.f32.gmra.mrb[0].mxu0 %v1489
    %v1631 = vpop.f32.mrb[0].mxu0
    %v1632 = vadd.f32 0.0, %v1631
    %v1633 = vpop.f32.mrb[0].mxu0
    %1634 = vdwg.mxu0
    %1635 = vmatprep.subr.mxu0 0.0
    %1636 = vmatpush1.msra.mxu0 %v1474
    %1637 = vmatprep.subr.mxu0 0.0
    %1638 = vmatpush1.msra.mxu0 %v1475
    %1639 = vmatprep.subr.mxu0 0.0
    %1640 = vmatpush1.msra.mxu0 %v1476
    %1641 = vmatprep.subr.mxu0 0.0
    %1642 = vmatpush1.msra.mxu0 %v1477
    %1643 = vmatprep.subr.mxu0 0.0
    %1644 = vmatpush1.msra.mxu0 %v1478
    %1645 = vmatprep.subr.mxu0 0.0
    %1646 = vmatpush1.msra.mxu0 %v1479
    %1647 = vmatprep.subr.mxu0 0.0
    %1648 = vmatpush1.msra.mxu0 %v1480
    %1649 = vmatprep.subr.mxu0 0.0
    %1650 = vmatpush1.msra.mxu0 %v1481
    %1651 = vmatprep.subr.mxu0 0.0
    %1652 = vmatpush1.msra.mxu0 %v1482
    %1653 = vmatprep.subr.mxu0 0.0
    %1654 = vmatpush1.msra.mxu0 %v1483
    %1655 = vmatprep.subr.mxu0 0.0
    %1656 = vmatpush1.msra.mxu0 %v1484
    %1657 = vmatprep.subr.mxu0 0.0
    %1658 = vmatpush1.msra.mxu0 %v1485
    %1659 = vmatprep.subr.mxu0 0.0
    %1660 = vmatpush1.msra.mxu0 %v1486
    %1661 = vmatprep.subr.mxu0 0.0
    %1662 = vmatpush1.msra.mxu0 %v1487
    %1663 = vmatprep.subr.mxu0 0.0
    %1664 = vmatpush1.msra.mxu0 %v1488
    %1665 = vmatprep.subr.mxu0 0.0
    %1666 = vmatpush1.msra.mxu0 %v1489
    %1667 = vmatprep.subr.mxu0 0.0
    %1668 = vmatpush1.msra.mxu0 0.0
    %1669 = vmatprep.subr.mxu0 0.0
    %1670 = vmatpush1.msra.mxu0 0.0
    %1671 = vmatprep.subr.mxu0 0.0
    %1672 = vmatpush1.msra.mxu0 0.0
    %1673 = vmatprep.subr.mxu0 0.0
    %1674 = vmatpush1.msra.mxu0 0.0
    %1675 = vmatprep.subr.mxu0 0.0
    %1676 = vmatpush1.msra.mxu0 0.0
    %1677 = vmatprep.subr.mxu0 0.0
    %1678 = vmatpush1.msra.mxu0 0.0
    %1679 = vmatprep.subr.mxu0 0.0
    %1680 = vmatpush1.msra.mxu0 0.0
    %1681 = vmatprep.subr.mxu0 0.0
    %1682 = vmatpush1.msra.mxu0 0.0
    %1683 = vmatprep.subr.mxu0 0.0
    %1684 = vmatpush1.msra.mxu0 0.0
    %1685 = vmatprep.subr.mxu0 0.0
    %1686 = vmatpush1.msra.mxu0 0.0
    %1687 = vmatprep.subr.mxu0 0.0
    %1688 = vmatpush1.msra.mxu0 0.0
    %1689 = vmatprep.subr.mxu0 0.0
    %1690 = vmatpush1.msra.mxu0 0.0
    %1691 = vmatprep.subr.mxu0 0.0
    %1692 = vmatpush1.msra.mxu0 0.0
    %1693 = vmatprep.subr.mxu0 0.0
    %1694 = vmatpush1.msra.mxu0 0.0
    %1695 = vmatprep.subr.mxu0 0.0
    %1696 = vmatpush1.msra.mxu0 0.0
    %1697 = vmatprep.subr.mxu0 0.0
    %1698 = vmatpush1.msra.mxu0 0.0
    %1699 = vmatprep.mubr.f32.mxu0 0.0
    %1700 = vmatmul.mubr.f32.gmra.mrb[0].mxu0 %v1557
    %v1701 = vpop.f32.mrb[0].mxu0
    %v1702 = vadd.f32 0.0, %v1701
    %v1703 = vpop.f32.mrb[0].mxu0
    %1704 = vmatprep.mubr.f32.mxu0 0.0
    %1705 = vmatmul.mubr.f32.gmra.mrb[0].mxu0 %v1562
    %v1706 = vpop.f32.mrb[0].mxu0
    %v1707 = vadd.f32 0.0, %v1706
    %v1708 = vpop.f32.mrb[0].mxu0
    %1709 = vmatprep.mubr.f32.mxu0 0.0
    %1710 = vmatmul.mubr.f32.gmra.mrb[0].mxu0 %v1567
    %v1711 = vpop.f32.mrb[0].mxu0
    %v1712 = vadd.f32 0.0, %v1711
    %v1713 = vpop.f32.mrb[0].mxu0
    %1714 = vmatprep.mubr.f32.mxu0 0.0
    %1715 = vmatmul.mubr.f32.gmra.mrb[0].mxu0 %v1572
    %v1716 = vpop.f32.mrb[0].mxu0
    %v1717 = vadd.f32 0.0, %v1716
    %v1718 = vpop.f32.mrb[0].mxu0
    %1719 = vmatprep.mubr.f32.mxu0 0.0
    %1720 = vmatmul.mubr.f32.gmra.mrb[0].mxu0 %v1577
    %v1721 = vpop.f32.mrb[0].mxu0
    %v1722 = vadd.f32 0.0, %v1721
    %v1723 = vpop.f32.mrb[0].mxu0
    %1724 = vmatprep.mubr.f32.mxu0 0.0
    %1725 = vmatmul.mubr.f32.gmra.mrb[0].mxu0 %v1582
    %v1726 = vpop.f32.mrb[0].mxu0
    %v1727 = vadd.f32 0.0, %v1726
    %v1728 = vpop.f32.mrb[0].mxu0
    %1729 = vmatprep.mubr.f32.mxu0 0.0
    %1730 = vmatmul.mubr.f32.gmra.mrb[0].mxu0 %v1587
    %v1731 = vpop.f32.mrb[0].mxu0
    %v1732 = vadd.f32 0.0, %v1731
    %v1733 = vpop.f32.mrb[0].mxu0
    %1734 = vmatprep.mubr.f32.mxu0 0.0
    %1735 = vmatmul.mubr.f32.gmra.mrb[0].mxu0 %v1592
    %v1736 = vpop.f32.mrb[0].mxu0
    %v1737 = vadd.f32 0.0, %v1736
    %v1738 = vpop.f32.mrb[0].mxu0
    %1739 = vmatprep.mubr.f32.mxu0 0.0
    %1740 = vmatmul.mubr.f32.gmra.mrb[0].mxu0 %v1597
    %v1741 = vpop.f32.mrb[0].mxu0
    %v1742 = vadd.f32 0.0, %v1741
    %v1743 = vpop.f32.mrb[0].mxu0
    %1744 = vmatprep.mubr.f32.mxu0 0.0
    %1745 = vmatmul.mubr.f32.gmra.mrb[0].mxu0 %v1602
    %v1746 = vpop.f32.mrb[0].mxu0
    %v1747 = vadd.f32 0.0, %v1746
    %v1748 = vpop.f32.mrb[0].mxu0
    %1749 = vmatprep.mubr.f32.mxu0 0.0
    %1750 = vmatmul.mubr.f32.gmra.mrb[0].mxu0 %v1607
    %v1751 = vpop.f32.mrb[0].mxu0
    %v1752 = vadd.f32 0.0, %v1751
    %v1753 = vpop.f32.mrb[0].mxu0
    %1754 = vmatprep.mubr.f32.mxu0 0.0
    %1755 = vmatmul.mubr.f32.gmra.mrb[0].mxu0 %v1612
    %v1756 = vpop.f32.mrb[0].mxu0
    %v1757 = vadd.f32 0.0, %v1756
    %v1758 = vpop.f32.mrb[0].mxu0
    %1759 = vmatprep.mubr.f32.mxu0 0.0
    %1760 = vmatmul.mubr.f32.gmra.mrb[0].mxu0 %v1617
    %v1761 = vpop.f32.mrb[0].mxu0
    %v1762 = vadd.f32 0.0, %v1761
    %v1763 = vpop.f32.mrb[0].mxu0
    %1764 = vmatprep.mubr.f32.mxu0 0.0
    %1765 = vmatmul.mubr.f32.gmra.mrb[0].mxu0 %v1622
    %v1766 = vpop.f32.mrb[0].mxu0
    %v1767 = vadd.f32 0.0, %v1766
    %v1768 = vpop.f32.mrb[0].mxu0
    %1769 = vmatprep.mubr.f32.mxu0 0.0
    %1770 = vmatmul.mubr.f32.gmra.mrb[0].mxu0 %v1627
    %v1771 = vpop.f32.mrb[0].mxu0
    %v1772 = vadd.f32 0.0, %v1771
    %v1773 = vpop.f32.mrb[0].mxu0
    %1774 = vmatprep.mubr.f32.mxu0 0.0
    %1775 = vmatmul.mubr.f32.gmra.mrb[0].mxu0 %v1632
    %v1776 = vpop.f32.mrb[0].mxu0
    %v1777 = vadd.f32 0.0, %v1776
    %v1778 = vpop.f32.mrb[0].mxu0
    %1779 = vdwg.mxu0
    %1780 = vmatprep.subr.mxu0 0.0
    %1781 = vmatpush1.msra.mxu0 %v1474
    %1782 = vmatprep.subr.mxu0 0.0
    %1783 = vmatpush1.msra.mxu0 %v1475
    %1784 = vmatprep.subr.mxu0 0.0
    %1785 = vmatpush1.msra.mxu0 %v1476
    %1786 = vmatprep.subr.mxu0 0.0
    %1787 = vmatpush1.msra.mxu0 %v1477
    %1788 = vmatprep.subr.mxu0 0.0
    %1789 = vmatpush1.msra.mxu0 %v1478
    %1790 = vmatprep.subr.mxu0 0.0
    %1791 = vmatpush1.msra.mxu0 %v1479
    %1792 = vmatprep.subr.mxu0 0.0
    %1793 = vmatpush1.msra.mxu0 %v1480
    %1794 = vmatprep.subr.mxu0 0.0
    %1795 = vmatpush1.msra.mxu0 %v1481
    %1796 = vmatprep.subr.mxu0 0.0
    %1797 = vmatpush1.msra.mxu0 %v1482
    %1798 = vmatprep.subr.mxu0 0.0
    %1799 = vmatpush1.msra.mxu0 %v1483
    %1800 = vmatprep.subr.mxu0 0.0
    %1801 = vmatpush1.msra.mxu0 %v1484
    %1802 = vmatprep.subr.mxu0 0.0
    %1803 = vmatpush1.msra.mxu0 %v1485
    %1804 = vmatprep.subr.mxu0 0.0
    %1805 = vmatpush1.msra.mxu0 %v1486
    %1806 = vmatprep.subr.mxu0 0.0
    %1807 = vmatpush1.msra.mxu0 %v1487
    %1808 = vmatprep.subr.mxu0 0.0
    %1809 = vmatpush1.msra.mxu0 %v1488
    %1810 = vmatprep.subr.mxu0 0.0
    %1811 = vmatpush1.msra.mxu0 %v1489
    %1812 = vmatprep.subr.mxu0 0.0
    %1813 = vmatpush1.msra.mxu0 0.0
    %1814 = vmatprep.subr.mxu0 0.0
    %1815 = vmatpush1.msra.mxu0 0.0
    %1816 = vmatprep.subr.mxu0 0.0
    %1817 = vmatpush1.msra.mxu0 0.0
    %1818 = vmatprep.subr.mxu0 0.0
    %1819 = vmatpush1.msra.mxu0 0.0
    %1820 = vmatprep.subr.mxu0 0.0
    %1821 = vmatpush1.msra.mxu0 0.0
    %1822 = vmatprep.subr.mxu0 0.0
    %1823 = vmatpush1.msra.mxu0 0.0
    %1824 = vmatprep.subr.mxu0 0.0
    %1825 = vmatpush1.msra.mxu0 0.0
    %1826 = vmatprep.subr.mxu0 0.0
    %1827 = vmatpush1.msra.mxu0 0.0
    %1828 = vmatprep.subr.mxu0 0.0
    %1829 = vmatpush1.msra.mxu0 0.0
    %1830 = vmatprep.subr.mxu0 0.0
    %1831 = vmatpush1.msra.mxu0 0.0
    %1832 = vmatprep.subr.mxu0 0.0
    %1833 = vmatpush1.msra.mxu0 0.0
    %1834 = vmatprep.subr.mxu0 0.0
    %1835 = vmatpush1.msra.mxu0 0.0
    %1836 = vmatprep.subr.mxu0 0.0
    %1837 = vmatpush1.msra.mxu0 0.0
    %1838 = vmatprep.subr.mxu0 0.0
    %1839 = vmatpush1.msra.mxu0 0.0
    %1840 = vmatprep.subr.mxu0 0.0
    %1841 = vmatpush1.msra.mxu0 0.0
    %1842 = vmatprep.subr.mxu0 0.0
    %1843 = vmatpush1.msra.mxu0 0.0
    %1844 = vmatprep.mubr.f32.mxu0 0.0
    %1845 = vmatmul.mubr.f32.gmra.mrb[0].mxu0 %v1702
    %v1846 = vpop.f32.mrb[0].mxu0
    %v1847 = vadd.f32 0.0, %v1846
    %v1848 = vpop.f32.mrb[0].mxu0
    %1849 = vmatprep.mubr.f32.mxu0 0.0
    %1850 = vmatmul.mubr.f32.gmra.mrb[0].mxu0 %v1707
    %v1851 = vpop.f32.mrb[0].mxu0
    %v1852 = vadd.f32 0.0, %v1851
    %v1853 = vpop.f32.mrb[0].mxu0
    %1854 = vmatprep.mubr.f32.mxu0 0.0
    %1855 = vmatmul.mubr.f32.gmra.mrb[0].mxu0 %v1712
    %v1856 = vpop.f32.mrb[0].mxu0
    %v1857 = vadd.f32 0.0, %v1856
    %v1858 = vpop.f32.mrb[0].mxu0
    %1859 = vmatprep.mubr.f32.mxu0 0.0
    %1860 = vmatmul.mubr.f32.gmra.mrb[0].mxu0 %v1717
    %v1861 = vpop.f32.mrb[0].mxu0
    %v1862 = vadd.f32 0.0, %v1861
    %v1863 = vpop.f32.mrb[0].mxu0
    %1864 = vmatprep.mubr.f32.mxu0 0.0
    %1865 = vmatmul.mubr.f32.gmra.mrb[0].mxu0 %v1722
    %v1866 = vpop.f32.mrb[0].mxu0
    %v1867 = vadd.f32 0.0, %v1866
    %v1868 = vpop.f32.mrb[0].mxu0
    %1869 = vmatprep.mubr.f32.mxu0 0.0
    %1870 = vmatmul.mubr.f32.gmra.mrb[0].mxu0 %v1727
    %v1871 = vpop.f32.mrb[0].mxu0
    %v1872 = vadd.f32 0.0, %v1871
    %v1873 = vpop.f32.mrb[0].mxu0
    %1874 = vmatprep.mubr.f32.mxu0 0.0
    %1875 = vmatmul.mubr.f32.gmra.mrb[0].mxu0 %v1732
    %v1876 = vpop.f32.mrb[0].mxu0
    %v1877 = vadd.f32 0.0, %v1876
    %v1878 = vpop.f32.mrb[0].mxu0
    %1879 = vmatprep.mubr.f32.mxu0 0.0
    %1880 = vmatmul.mubr.f32.gmra.mrb[0].mxu0 %v1737
    %v1881 = vpop.f32.mrb[0].mxu0
    %v1882 = vadd.f32 0.0, %v1881
    %v1883 = vpop.f32.mrb[0].mxu0
    %1884 = vmatprep.mubr.f32.mxu0 0.0
    %1885 = vmatmul.mubr.f32.gmra.mrb[0].mxu0 %v1742
    %v1886 = vpop.f32.mrb[0].mxu0
    %v1887 = vadd.f32 0.0, %v1886
    %v1888 = vpop.f32.mrb[0].mxu0
    %1889 = vmatprep.mubr.f32.mxu0 0.0
    %1890 = vmatmul.mubr.f32.gmra.mrb[0].mxu0 %v1747
    %v1891 = vpop.f32.mrb[0].mxu0
    %v1892 = vadd.f32 0.0, %v1891
    %v1893 = vpop.f32.mrb[0].mxu0
    %1894 = vmatprep.mubr.f32.mxu0 0.0
    %1895 = vmatmul.mubr.f32.gmra.mrb[0].mxu0 %v1752
    %v1896 = vpop.f32.mrb[0].mxu0
    %v1897 = vadd.f32 0.0, %v1896
    %v1898 = vpop.f32.mrb[0].mxu0
    %1899 = vmatprep.mubr.f32.mxu0 0.0
    %1900 = vmatmul.mubr.f32.gmra.mrb[0].mxu0 %v1757
    %v1901 = vpop.f32.mrb[0].mxu0
    %v1902 = vadd.f32 0.0, %v1901
    %v1903 = vpop.f32.mrb[0].mxu0
    %1904 = vmatprep.mubr.f32.mxu0 0.0
    %1905 = vmatmul.mubr.f32.gmra.mrb[0].mxu0 %v1762
    %v1906 = vpop.f32.mrb[0].mxu0
    %v1907 = vadd.f32 0.0, %v1906
    %v1908 = vpop.f32.mrb[0].mxu0
    %1909 = vmatprep.mubr.f32.mxu0 0.0
    %1910 = vmatmul.mubr.f32.gmra.mrb[0].mxu0 %v1767
    %v1911 = vpop.f32.mrb[0].mxu0
    %v1912 = vadd.f32 0.0, %v1911
    %v1913 = vpop.f32.mrb[0].mxu0
    %1914 = vmatprep.mubr.f32.mxu0 0.0
    %1915 = vmatmul.mubr.f32.gmra.mrb[0].mxu0 %v1772
    %v1916 = vpop.f32.mrb[0].mxu0
    %v1917 = vadd.f32 0.0, %v1916
    %v1918 = vpop.f32.mrb[0].mxu0
    %1919 = vmatprep.mubr.f32.mxu0 0.0
    %1920 = vmatmul.mubr.f32.gmra.mrb[0].mxu0 %v1777
    %v1921 = vpop.f32.mrb[0].mxu0
    %v1922 = vadd.f32 0.0, %v1921
    %v1923 = vpop.f32.mrb[0].mxu0
    %1924 = vdwg.mxu0
    %v1925 = vadd.f32 %v94, %v1474
    %v1926 = vadd.f32 %v95, %v1475
    %v1927 = vadd.f32 %v96, %v1476
    %v1928 = vadd.f32 %v97, %v1477
    %v1929 = vadd.f32 %v98, %v1478
    %v1930 = vadd.f32 %v99, %v1479
    %v1931 = vadd.f32 %v100, %v1480
    %v1932 = vadd.f32 %v101, %v1481
    %v1933 = vadd.f32 %v102, %v1482
    %v1934 = vadd.f32 %v103, %v1483
    %v1935 = vadd.f32 %v104, %v1484
    %v1936 = vadd.f32 %v105, %v1485
    %v1937 = vadd.f32 %v106, %v1486
    %v1938 = vadd.f32 %v107, %v1487
    %v1939 = vadd.f32 %v108, %v1488
    %v1940 = vadd.f32 %v109, %v1489
    %v1941 = vmul.f32 %v1557, 0.5
    %v1942 = vmul.f32 %v1562, 0.5
    %v1943 = vmul.f32 %v1567, 0.5
    %v1944 = vmul.f32 %v1572, 0.5
    %v1945 = vmul.f32 %v1577, 0.5
    %v1946 = vmul.f32 %v1582, 0.5
    %v1947 = vmul.f32 %v1587, 0.5
    %v1948 = vmul.f32 %v1592, 0.5
    %v1949 = vmul.f32 %v1597, 0.5
    %v1950 = vmul.f32 %v1602, 0.5
    %v1951 = vmul.f32 %v1607, 0.5
    %v1952 = vmul.f32 %v1612, 0.5
    %v1953 = vmul.f32 %v1617, 0.5
    %v1954 = vmul.f32 %v1622, 0.5
    %v1955 = vmul.f32 %v1627, 0.5
    %v1956 = vmul.f32 %v1632, 0.5
    %v1957 = vadd.f32 %v1925, %v1941
    %v1958 = vadd.f32 %v1926, %v1942
    %v1959 = vadd.f32 %v1927, %v1943
    %v1960 = vadd.f32 %v1928, %v1944
    %v1961 = vadd.f32 %v1929, %v1945
    %v1962 = vadd.f32 %v1930, %v1946
    %v1963 = vadd.f32 %v1931, %v1947
    %v1964 = vadd.f32 %v1932, %v1948
    %v1965 = vadd.f32 %v1933, %v1949
    %v1966 = vadd.f32 %v1934, %v1950
    %v1967 = vadd.f32 %v1935, %v1951
    %v1968 = vadd.f32 %v1936, %v1952
    %v1969 = vadd.f32 %v1937, %v1953
    %v1970 = vadd.f32 %v1938, %v1954
    %v1971 = vadd.f32 %v1939, %v1955
    %v1972 = vadd.f32 %v1940, %v1956
    %v1973 = vmul.f32 %v1702, 0.16666667
    %v1974 = vmul.f32 %v1707, 0.16666667
    %v1975 = vmul.f32 %v1712, 0.16666667
    %v1976 = vmul.f32 %v1717, 0.16666667
    %v1977 = vmul.f32 %v1722, 0.16666667
    %v1978 = vmul.f32 %v1727, 0.16666667
    %v1979 = vmul.f32 %v1732, 0.16666667
    %v1980 = vmul.f32 %v1737, 0.16666667
    %v1981 = vmul.f32 %v1742, 0.16666667
    %v1982 = vmul.f32 %v1747, 0.16666667
    %v1983 = vmul.f32 %v1752, 0.16666667
    %v1984 = vmul.f32 %v1757, 0.16666667
    %v1985 = vmul.f32 %v1762, 0.16666667
    %v1986 = vmul.f32 %v1767, 0.16666667
    %v1987 = vmul.f32 %v1772, 0.16666667
    %v1988 = vmul.f32 %v1777, 0.16666667
    %v1989 = vadd.f32 %v1957, %v1973
    %v1990 = vadd.f32 %v1958, %v1974
    %v1991 = vadd.f32 %v1959, %v1975
    %v1992 = vadd.f32 %v1960, %v1976
    %v1993 = vadd.f32 %v1961, %v1977
    %v1994 = vadd.f32 %v1962, %v1978
    %v1995 = vadd.f32 %v1963, %v1979
    %v1996 = vadd.f32 %v1964, %v1980
    %v1997 = vadd.f32 %v1965, %v1981
    %v1998 = vadd.f32 %v1966, %v1982
    %v1999 = vadd.f32 %v1967, %v1983
    %v2000 = vadd.f32 %v1968, %v1984
    %v2001 = vadd.f32 %v1969, %v1985
    %v2002 = vadd.f32 %v1970, %v1986
    %v2003 = vadd.f32 %v1971, %v1987
    %v2004 = vadd.f32 %v1972, %v1988
    %v2005 = vmul.f32 %v1847, 0.041666668
    %v2006 = vmul.f32 %v1852, 0.041666668
    %v2007 = vmul.f32 %v1857, 0.041666668
    %v2008 = vmul.f32 %v1862, 0.041666668
    %v2009 = vmul.f32 %v1867, 0.041666668
    %v2010 = vmul.f32 %v1872, 0.041666668
    %v2011 = vmul.f32 %v1877, 0.041666668
    %v2012 = vmul.f32 %v1882, 0.041666668
    %v2013 = vmul.f32 %v1887, 0.041666668
    %v2014 = vmul.f32 %v1892, 0.041666668
    %v2015 = vmul.f32 %v1897, 0.041666668
    %v2016 = vmul.f32 %v1902, 0.041666668
    %v2017 = vmul.f32 %v1907, 0.041666668
    %v2018 = vmul.f32 %v1912, 0.041666668
    %v2019 = vmul.f32 %v1917, 0.041666668
    %v2020 = vmul.f32 %v1922, 0.041666668
    %v2021 = vadd.f32 %v1989, %v2005
    %v2022 = vadd.f32 %v1990, %v2006
    %v2023 = vadd.f32 %v1991, %v2007
    %v2024 = vadd.f32 %v1992, %v2008
    %v2025 = vadd.f32 %v1993, %v2009
    %v2026 = vadd.f32 %v1994, %v2010
    %v2027 = vadd.f32 %v1995, %v2011
    %v2028 = vadd.f32 %v1996, %v2012
    %v2029 = vadd.f32 %v1997, %v2013
    %v2030 = vadd.f32 %v1998, %v2014
    %v2031 = vadd.f32 %v1999, %v2015
    %v2032 = vadd.f32 %v2000, %v2016
    %v2033 = vadd.f32 %v2001, %v2017
    %v2034 = vadd.f32 %v2002, %v2018
    %v2035 = vadd.f32 %v2003, %v2019
    %v2036 = vadd.f32 %v2004, %v2020
    %2037 = vmatprep.subr.mxu0 0.0
    %2038 = vmatpush1.msra.mxu0 %v2021
    %2039 = vmatprep.subr.mxu0 0.0
    %2040 = vmatpush1.msra.mxu0 %v2022
    %2041 = vmatprep.subr.mxu0 0.0
    %2042 = vmatpush1.msra.mxu0 %v2023
    %2043 = vmatprep.subr.mxu0 0.0
    %2044 = vmatpush1.msra.mxu0 %v2024
    %2045 = vmatprep.subr.mxu0 0.0
    %2046 = vmatpush1.msra.mxu0 %v2025
    %2047 = vmatprep.subr.mxu0 0.0
    %2048 = vmatpush1.msra.mxu0 %v2026
    %2049 = vmatprep.subr.mxu0 0.0
    %2050 = vmatpush1.msra.mxu0 %v2027
    %2051 = vmatprep.subr.mxu0 0.0
    %2052 = vmatpush1.msra.mxu0 %v2028
    %2053 = vmatprep.subr.mxu0 0.0
    %2054 = vmatpush1.msra.mxu0 %v2029
    %2055 = vmatprep.subr.mxu0 0.0
    %2056 = vmatpush1.msra.mxu0 %v2030
    %2057 = vmatprep.subr.mxu0 0.0
    %2058 = vmatpush1.msra.mxu0 %v2031
    %2059 = vmatprep.subr.mxu0 0.0
    %2060 = vmatpush1.msra.mxu0 %v2032
    %2061 = vmatprep.subr.mxu0 0.0
    %2062 = vmatpush1.msra.mxu0 %v2033
    %2063 = vmatprep.subr.mxu0 0.0
    %2064 = vmatpush1.msra.mxu0 %v2034
    %2065 = vmatprep.subr.mxu0 0.0
    %2066 = vmatpush1.msra.mxu0 %v2035
    %2067 = vmatprep.subr.mxu0 0.0
    %2068 = vmatpush1.msra.mxu0 %v2036
    %2069 = vmatprep.subr.mxu0 0.0
    %2070 = vmatpush1.msra.mxu0 0.0
    %2071 = vmatprep.subr.mxu0 0.0
    %2072 = vmatpush1.msra.mxu0 0.0
    %2073 = vmatprep.subr.mxu0 0.0
    %2074 = vmatpush1.msra.mxu0 0.0
    %2075 = vmatprep.subr.mxu0 0.0
    %2076 = vmatpush1.msra.mxu0 0.0
    %2077 = vmatprep.subr.mxu0 0.0
    %2078 = vmatpush1.msra.mxu0 0.0
    %2079 = vmatprep.subr.mxu0 0.0
    %2080 = vmatpush1.msra.mxu0 0.0
    %2081 = vmatprep.subr.mxu0 0.0
    %2082 = vmatpush1.msra.mxu0 0.0
    %2083 = vmatprep.subr.mxu0 0.0
    %2084 = vmatpush1.msra.mxu0 0.0
    %2085 = vmatprep.subr.mxu0 0.0
    %2086 = vmatpush1.msra.mxu0 0.0
    %2087 = vmatprep.subr.mxu0 0.0
    %2088 = vmatpush1.msra.mxu0 0.0
    %2089 = vmatprep.subr.mxu0 0.0
    %2090 = vmatpush1.msra.mxu0 0.0
    %2091 = vmatprep.subr.mxu0 0.0
    %2092 = vmatpush1.msra.mxu0 0.0
    %2093 = vmatprep.subr.mxu0 0.0
    %2094 = vmatpush1.msra.mxu0 0.0
    %2095 = vmatprep.subr.mxu0 0.0
    %2096 = vmatpush1.msra.mxu0 0.0
    %2097 = vmatprep.subr.mxu0 0.0
    %2098 = vmatpush1.msra.mxu0 0.0
    %2099 = vmatprep.subr.mxu0 0.0
    %2100 = vmatpush1.msra.mxu0 0.0
    %2101 = vmatprep.mubr.f32.mxu0 0.0
    %2102 = vmatmul.mubr.f32.gmra.mrb[0].mxu0 %v2021
    %v2103 = vpop.f32.mrb[0].mxu0
    %v2104 = vadd.f32 0.0, %v2103
    %v2105 = vpop.f32.mrb[0].mxu0
    %2106 = vmatprep.mubr.f32.mxu0 0.0
    %2107 = vmatmul.mubr.f32.gmra.mrb[0].mxu0 %v2022
    %v2108 = vpop.f32.mrb[0].mxu0
    %v2109 = vadd.f32 0.0, %v2108
    %v2110 = vpop.f32.mrb[0].mxu0
    %2111 = vmatprep.mubr.f32.mxu0 0.0
    %2112 = vmatmul.mubr.f32.gmra.mrb[0].mxu0 %v2023
    %v2113 = vpop.f32.mrb[0].mxu0
    %v2114 = vadd.f32 0.0, %v2113
    %v2115 = vpop.f32.mrb[0].mxu0
    %2116 = vmatprep.mubr.f32.mxu0 0.0
    %2117 = vmatmul.mubr.f32.gmra.mrb[0].mxu0 %v2024
    %v2118 = vpop.f32.mrb[0].mxu0
    %v2119 = vadd.f32 0.0, %v2118
    %v2120 = vpop.f32.mrb[0].mxu0
    %2121 = vmatprep.mubr.f32.mxu0 0.0
    %2122 = vmatmul.mubr.f32.gmra.mrb[0].mxu0 %v2025
    %v2123 = vpop.f32.mrb[0].mxu0
    %v2124 = vadd.f32 0.0, %v2123
    %v2125 = vpop.f32.mrb[0].mxu0
    %2126 = vmatprep.mubr.f32.mxu0 0.0
    %2127 = vmatmul.mubr.f32.gmra.mrb[0].mxu0 %v2026
    %v2128 = vpop.f32.mrb[0].mxu0
    %v2129 = vadd.f32 0.0, %v2128
    %v2130 = vpop.f32.mrb[0].mxu0
    %2131 = vmatprep.mubr.f32.mxu0 0.0
    %2132 = vmatmul.mubr.f32.gmra.mrb[0].mxu0 %v2027
    %v2133 = vpop.f32.mrb[0].mxu0
    %v2134 = vadd.f32 0.0, %v2133
    %v2135 = vpop.f32.mrb[0].mxu0
    %2136 = vmatprep.mubr.f32.mxu0 0.0
    %2137 = vmatmul.mubr.f32.gmra.mrb[0].mxu0 %v2028
    %v2138 = vpop.f32.mrb[0].mxu0
    %v2139 = vadd.f32 0.0, %v2138
    %v2140 = vpop.f32.mrb[0].mxu0
    %2141 = vmatprep.mubr.f32.mxu0 0.0
    %2142 = vmatmul.mubr.f32.gmra.mrb[0].mxu0 %v2029
    %v2143 = vpop.f32.mrb[0].mxu0
    %v2144 = vadd.f32 0.0, %v2143
    %v2145 = vpop.f32.mrb[0].mxu0
    %2146 = vmatprep.mubr.f32.mxu0 0.0
    %2147 = vmatmul.mubr.f32.gmra.mrb[0].mxu0 %v2030
    %v2148 = vpop.f32.mrb[0].mxu0
    %v2149 = vadd.f32 0.0, %v2148
    %v2150 = vpop.f32.mrb[0].mxu0
    %2151 = vmatprep.mubr.f32.mxu0 0.0
    %2152 = vmatmul.mubr.f32.gmra.mrb[0].mxu0 %v2031
    %v2153 = vpop.f32.mrb[0].mxu0
    %v2154 = vadd.f32 0.0, %v2153
    %v2155 = vpop.f32.mrb[0].mxu0
    %2156 = vmatprep.mubr.f32.mxu0 0.0
    %2157 = vmatmul.mubr.f32.gmra.mrb[0].mxu0 %v2032
    %v2158 = vpop.f32.mrb[0].mxu0
    %v2159 = vadd.f32 0.0, %v2158
    %v2160 = vpop.f32.mrb[0].mxu0
    %2161 = vmatprep.mubr.f32.mxu0 0.0
    %2162 = vmatmul.mubr.f32.gmra.mrb[0].mxu0 %v2033
    %v2163 = vpop.f32.mrb[0].mxu0
    %v2164 = vadd.f32 0.0, %v2163
    %v2165 = vpop.f32.mrb[0].mxu0
    %2166 = vmatprep.mubr.f32.mxu0 0.0
    %2167 = vmatmul.mubr.f32.gmra.mrb[0].mxu0 %v2034
    %v2168 = vpop.f32.mrb[0].mxu0
    %v2169 = vadd.f32 0.0, %v2168
    %v2170 = vpop.f32.mrb[0].mxu0
    %2171 = vmatprep.mubr.f32.mxu0 0.0
    %2172 = vmatmul.mubr.f32.gmra.mrb[0].mxu0 %v2035
    %v2173 = vpop.f32.mrb[0].mxu0
    %v2174 = vadd.f32 0.0, %v2173
    %v2175 = vpop.f32.mrb[0].mxu0
    %2176 = vmatprep.mubr.f32.mxu0 0.0
    %2177 = vmatmul.mubr.f32.gmra.mrb[0].mxu0 %v2036
    %v2178 = vpop.f32.mrb[0].mxu0
    %v2179 = vadd.f32 0.0, %v2178
    %v2180 = vpop.f32.mrb[0].mxu0
    %2181 = vdwg.mxu0
    %2182 = vmatprep.subr.mxu0 0.0
    %2183 = vmatpush1.msra.mxu0 %v2104
    %2184 = vmatprep.subr.mxu0 0.0
    %2185 = vmatpush1.msra.mxu0 %v2109
    %2186 = vmatprep.subr.mxu0 0.0
    %2187 = vmatpush1.msra.mxu0 %v2114
    %2188 = vmatprep.subr.mxu0 0.0
    %2189 = vmatpush1.msra.mxu0 %v2119
    %2190 = vmatprep.subr.mxu0 0.0
    %2191 = vmatpush1.msra.mxu0 %v2124
    %2192 = vmatprep.subr.mxu0 0.0
    %2193 = vmatpush1.msra.mxu0 %v2129
    %2194 = vmatprep.subr.mxu0 0.0
    %2195 = vmatpush1.msra.mxu0 %v2134
    %2196 = vmatprep.subr.mxu0 0.0
    %2197 = vmatpush1.msra.mxu0 %v2139
    %2198 = vmatprep.subr.mxu0 0.0
    %2199 = vmatpush1.msra.mxu0 %v2144
    %2200 = vmatprep.subr.mxu0 0.0
    %2201 = vmatpush1.msra.mxu0 %v2149
    %2202 = vmatprep.subr.mxu0 0.0
    %2203 = vmatpush1.msra.mxu0 %v2154
    %2204 = vmatprep.subr.mxu0 0.0
    %2205 = vmatpush1.msra.mxu0 %v2159
    %2206 = vmatprep.subr.mxu0 0.0
    %2207 = vmatpush1.msra.mxu0 %v2164
    %2208 = vmatprep.subr.mxu0 0.0
    %2209 = vmatpush1.msra.mxu0 %v2169
    %2210 = vmatprep.subr.mxu0 0.0
    %2211 = vmatpush1.msra.mxu0 %v2174
    %2212 = vmatprep.subr.mxu0 0.0
    %2213 = vmatpush1.msra.mxu0 %v2179
    %2214 = vmatprep.subr.mxu0 0.0
    %2215 = vmatpush1.msra.mxu0 0.0
    %2216 = vmatprep.subr.mxu0 0.0
    %2217 = vmatpush1.msra.mxu0 0.0
    %2218 = vmatprep.subr.mxu0 0.0
    %2219 = vmatpush1.msra.mxu0 0.0
    %2220 = vmatprep.subr.mxu0 0.0
    %2221 = vmatpush1.msra.mxu0 0.0
    %2222 = vmatprep.subr.mxu0 0.0
    %2223 = vmatpush1.msra.mxu0 0.0
    %2224 = vmatprep.subr.mxu0 0.0
    %2225 = vmatpush1.msra.mxu0 0.0
    %2226 = vmatprep.subr.mxu0 0.0
    %2227 = vmatpush1.msra.mxu0 0.0
    %2228 = vmatprep.subr.mxu0 0.0
    %2229 = vmatpush1.msra.mxu0 0.0
    %2230 = vmatprep.subr.mxu0 0.0
    %2231 = vmatpush1.msra.mxu0 0.0
    %2232 = vmatprep.subr.mxu0 0.0
    %2233 = vmatpush1.msra.mxu0 0.0
    %2234 = vmatprep.subr.mxu0 0.0
    %2235 = vmatpush1.msra.mxu0 0.0
    %2236 = vmatprep.subr.mxu0 0.0
    %2237 = vmatpush1.msra.mxu0 0.0
    %2238 = vmatprep.subr.mxu0 0.0
    %2239 = vmatpush1.msra.mxu0 0.0
    %2240 = vmatprep.subr.mxu0 0.0
    %2241 = vmatpush1.msra.mxu0 0.0
    %2242 = vmatprep.subr.mxu0 0.0
    %2243 = vmatpush1.msra.mxu0 0.0
    %2244 = vmatprep.subr.mxu0 0.0
    %2245 = vmatpush1.msra.mxu0 0.0
    %2246 = vmatprep.mubr.f32.mxu0 0.0
    %2247 = vmatmul.mubr.f32.gmra.mrb[0].mxu0 %v2104
    %v2248 = vpop.f32.mrb[0].mxu0
    %v2249 = vadd.f32 0.0, %v2248
    %v2250 = vpop.f32.mrb[0].mxu0
    %2251 = vmatprep.mubr.f32.mxu0 0.0
    %2252 = vmatmul.mubr.f32.gmra.mrb[0].mxu0 %v2109
    %v2253 = vpop.f32.mrb[0].mxu0
    %v2254 = vadd.f32 0.0, %v2253
    %v2255 = vpop.f32.mrb[0].mxu0
    %2256 = vmatprep.mubr.f32.mxu0 0.0
    %2257 = vmatmul.mubr.f32.gmra.mrb[0].mxu0 %v2114
    %v2258 = vpop.f32.mrb[0].mxu0
    %v2259 = vadd.f32 0.0, %v2258
    %v2260 = vpop.f32.mrb[0].mxu0
    %2261 = vmatprep.mubr.f32.mxu0 0.0
    %2262 = vmatmul.mubr.f32.gmra.mrb[0].mxu0 %v2119
    %v2263 = vpop.f32.mrb[0].mxu0
    %v2264 = vadd.f32 0.0, %v2263
    %v2265 = vpop.f32.mrb[0].mxu0
    %2266 = vmatprep.mubr.f32.mxu0 0.0
    %2267 = vmatmul.mubr.f32.gmra.mrb[0].mxu0 %v2124
    %v2268 = vpop.f32.mrb[0].mxu0
    %v2269 = vadd.f32 0.0, %v2268
    %v2270 = vpop.f32.mrb[0].mxu0
    %2271 = vmatprep.mubr.f32.mxu0 0.0
    %2272 = vmatmul.mubr.f32.gmra.mrb[0].mxu0 %v2129
    %v2273 = vpop.f32.mrb[0].mxu0
    %v2274 = vadd.f32 0.0, %v2273
    %v2275 = vpop.f32.mrb[0].mxu0
    %2276 = vmatprep.mubr.f32.mxu0 0.0
    %2277 = vmatmul.mubr.f32.gmra.mrb[0].mxu0 %v2134
    %v2278 = vpop.f32.mrb[0].mxu0
    %v2279 = vadd.f32 0.0, %v2278
    %v2280 = vpop.f32.mrb[0].mxu0
    %2281 = vmatprep.mubr.f32.mxu0 0.0
    %2282 = vmatmul.mubr.f32.gmra.mrb[0].mxu0 %v2139
    %v2283 = vpop.f32.mrb[0].mxu0
    %v2284 = vadd.f32 0.0, %v2283
    %v2285 = vpop.f32.mrb[0].mxu0
    %2286 = vmatprep.mubr.f32.mxu0 0.0
    %2287 = vmatmul.mubr.f32.gmra.mrb[0].mxu0 %v2144
    %v2288 = vpop.f32.mrb[0].mxu0
    %v2289 = vadd.f32 0.0, %v2288
    %v2290 = vpop.f32.mrb[0].mxu0
    %2291 = vmatprep.mubr.f32.mxu0 0.0
    %2292 = vmatmul.mubr.f32.gmra.mrb[0].mxu0 %v2149
    %v2293 = vpop.f32.mrb[0].mxu0
    %v2294 = vadd.f32 0.0, %v2293
    %v2295 = vpop.f32.mrb[0].mxu0
    %2296 = vmatprep.mubr.f32.mxu0 0.0
    %2297 = vmatmul.mubr.f32.gmra.mrb[0].mxu0 %v2154
    %v2298 = vpop.f32.mrb[0].mxu0
    %v2299 = vadd.f32 0.0, %v2298
    %v2300 = vpop.f32.mrb[0].mxu0
    %2301 = vmatprep.mubr.f32.mxu0 0.0
    %2302 = vmatmul.mubr.f32.gmra.mrb[0].mxu0 %v2159
    %v2303 = vpop.f32.mrb[0].mxu0
    %v2304 = vadd.f32 0.0, %v2303
    %v2305 = vpop.f32.mrb[0].mxu0
    %2306 = vmatprep.mubr.f32.mxu0 0.0
    %2307 = vmatmul.mubr.f32.gmra.mrb[0].mxu0 %v2164
    %v2308 = vpop.f32.mrb[0].mxu0
    %v2309 = vadd.f32 0.0, %v2308
    %v2310 = vpop.f32.mrb[0].mxu0
    %2311 = vmatprep.mubr.f32.mxu0 0.0
    %2312 = vmatmul.mubr.f32.gmra.mrb[0].mxu0 %v2169
    %v2313 = vpop.f32.mrb[0].mxu0
    %v2314 = vadd.f32 0.0, %v2313
    %v2315 = vpop.f32.mrb[0].mxu0
    %2316 = vmatprep.mubr.f32.mxu0 0.0
    %2317 = vmatmul.mubr.f32.gmra.mrb[0].mxu0 %v2174
    %v2318 = vpop.f32.mrb[0].mxu0
    %v2319 = vadd.f32 0.0, %v2318
    %v2320 = vpop.f32.mrb[0].mxu0
    %2321 = vmatprep.mubr.f32.mxu0 0.0
    %2322 = vmatmul.mubr.f32.gmra.mrb[0].mxu0 %v2179
    %v2323 = vpop.f32.mrb[0].mxu0
    %v2324 = vadd.f32 0.0, %v2323
    %v2325 = vpop.f32.mrb[0].mxu0
    %2326 = vdwg.mxu0
    %2327 = vmatprep.subr.mxu0 0.0
    %2328 = vmatpush1.msra.mxu0 %v2249
    %2329 = vmatprep.subr.mxu0 0.0
    %2330 = vmatpush1.msra.mxu0 %v2254
    %2331 = vmatprep.subr.mxu0 0.0
    %2332 = vmatpush1.msra.mxu0 %v2259
    %2333 = vmatprep.subr.mxu0 0.0
    %2334 = vmatpush1.msra.mxu0 %v2264
    %2335 = vmatprep.subr.mxu0 0.0
    %2336 = vmatpush1.msra.mxu0 %v2269
    %2337 = vmatprep.subr.mxu0 0.0
    %2338 = vmatpush1.msra.mxu0 %v2274
    %2339 = vmatprep.subr.mxu0 0.0
    %2340 = vmatpush1.msra.mxu0 %v2279
    %2341 = vmatprep.subr.mxu0 0.0
    %2342 = vmatpush1.msra.mxu0 %v2284
    %2343 = vmatprep.subr.mxu0 0.0
    %2344 = vmatpush1.msra.mxu0 %v2289
    %2345 = vmatprep.subr.mxu0 0.0
    %2346 = vmatpush1.msra.mxu0 %v2294
    %2347 = vmatprep.subr.mxu0 0.0
    %2348 = vmatpush1.msra.mxu0 %v2299
    %2349 = vmatprep.subr.mxu0 0.0
    %2350 = vmatpush1.msra.mxu0 %v2304
    %2351 = vmatprep.subr.mxu0 0.0
    %2352 = vmatpush1.msra.mxu0 %v2309
    %2353 = vmatprep.subr.mxu0 0.0
    %2354 = vmatpush1.msra.mxu0 %v2314
    %2355 = vmatprep.subr.mxu0 0.0
    %2356 = vmatpush1.msra.mxu0 %v2319
    %2357 = vmatprep.subr.mxu0 0.0
    %2358 = vmatpush1.msra.mxu0 %v2324
    %2359 = vmatprep.subr.mxu0 0.0
    %2360 = vmatpush1.msra.mxu0 0.0
    %2361 = vmatprep.subr.mxu0 0.0
    %2362 = vmatpush1.msra.mxu0 0.0
    %2363 = vmatprep.subr.mxu0 0.0
    %2364 = vmatpush1.msra.mxu0 0.0
    %2365 = vmatprep.subr.mxu0 0.0
    %2366 = vmatpush1.msra.mxu0 0.0
    %2367 = vmatprep.subr.mxu0 0.0
    %2368 = vmatpush1.msra.mxu0 0.0
    %2369 = vmatprep.subr.mxu0 0.0
    %2370 = vmatpush1.msra.mxu0 0.0
    %2371 = vmatprep.subr.mxu0 0.0
    %2372 = vmatpush1.msra.mxu0 0.0
    %2373 = vmatprep.subr.mxu0 0.0
    %2374 = vmatpush1.msra.mxu0 0.0
    %2375 = vmatprep.subr.mxu0 0.0
    %2376 = vmatpush1.msra.mxu0 0.0
    %2377 = vmatprep.subr.mxu0 0.0
    %2378 = vmatpush1.msra.mxu0 0.0
    %2379 = vmatprep.subr.mxu0 0.0
    %2380 = vmatpush1.msra.mxu0 0.0
    %2381 = vmatprep.subr.mxu0 0.0
    %2382 = vmatpush1.msra.mxu0 0.0
    %2383 = vmatprep.subr.mxu0 0.0
    %2384 = vmatpush1.msra.mxu0 0.0
    %2385 = vmatprep.subr.mxu0 0.0
    %2386 = vmatpush1.msra.mxu0 0.0
    %2387 = vmatprep.subr.mxu0 0.0
    %2388 = vmatpush1.msra.mxu0 0.0
    %2389 = vmatprep.subr.mxu0 0.0
    %2390 = vmatpush1.msra.mxu0 0.0
    %2391 = vmatprep.mubr.f32.mxu0 0.0
    %2392 = vmatmul.mubr.f32.gmra.mrb[0].mxu0 %v2249
    %v2393 = vpop.f32.mrb[0].mxu0
    %v2394 = vadd.f32 0.0, %v2393
    %v2395 = vpop.f32.mrb[0].mxu0
    %2396 = vmatprep.mubr.f32.mxu0 0.0
    %2397 = vmatmul.mubr.f32.gmra.mrb[0].mxu0 %v2254
    %v2398 = vpop.f32.mrb[0].mxu0
    %v2399 = vadd.f32 0.0, %v2398
    %v2400 = vpop.f32.mrb[0].mxu0
    %2401 = vmatprep.mubr.f32.mxu0 0.0
    %2402 = vmatmul.mubr.f32.gmra.mrb[0].mxu0 %v2259
    %v2403 = vpop.f32.mrb[0].mxu0
    %v2404 = vadd.f32 0.0, %v2403
    %v2405 = vpop.f32.mrb[0].mxu0
    %2406 = vmatprep.mubr.f32.mxu0 0.0
    %2407 = vmatmul.mubr.f32.gmra.mrb[0].mxu0 %v2264
    %v2408 = vpop.f32.mrb[0].mxu0
    %v2409 = vadd.f32 0.0, %v2408
    %v2410 = vpop.f32.mrb[0].mxu0
    %2411 = vmatprep.mubr.f32.mxu0 0.0
    %2412 = vmatmul.mubr.f32.gmra.mrb[0].mxu0 %v2269
    %v2413 = vpop.f32.mrb[0].mxu0
    %v2414 = vadd.f32 0.0, %v2413
    %v2415 = vpop.f32.mrb[0].mxu0
    %2416 = vmatprep.mubr.f32.mxu0 0.0
    %2417 = vmatmul.mubr.f32.gmra.mrb[0].mxu0 %v2274
    %v2418 = vpop.f32.mrb[0].mxu0
    %v2419 = vadd.f32 0.0, %v2418
    %v2420 = vpop.f32.mrb[0].mxu0
    %2421 = vmatprep.mubr.f32.mxu0 0.0
    %2422 = vmatmul.mubr.f32.gmra.mrb[0].mxu0 %v2279
    %v2423 = vpop.f32.mrb[0].mxu0
    %v2424 = vadd.f32 0.0, %v2423
    %v2425 = vpop.f32.mrb[0].mxu0
    %2426 = vmatprep.mubr.f32.mxu0 0.0
    %2427 = vmatmul.mubr.f32.gmra.mrb[0].mxu0 %v2284
    %v2428 = vpop.f32.mrb[0].mxu0
    %v2429 = vadd.f32 0.0, %v2428
    %v2430 = vpop.f32.mrb[0].mxu0
    %2431 = vmatprep.mubr.f32.mxu0 0.0
    %2432 = vmatmul.mubr.f32.gmra.mrb[0].mxu0 %v2289
    %v2433 = vpop.f32.mrb[0].mxu0
    %v2434 = vadd.f32 0.0, %v2433
    %v2435 = vpop.f32.mrb[0].mxu0
    %2436 = vmatprep.mubr.f32.mxu0 0.0
    %2437 = vmatmul.mubr.f32.gmra.mrb[0].mxu0 %v2294
    %v2438 = vpop.f32.mrb[0].mxu0
    %v2439 = vadd.f32 0.0, %v2438
    %v2440 = vpop.f32.mrb[0].mxu0
    %2441 = vmatprep.mubr.f32.mxu0 0.0
    %2442 = vmatmul.mubr.f32.gmra.mrb[0].mxu0 %v2299
    %v2443 = vpop.f32.mrb[0].mxu0
    %v2444 = vadd.f32 0.0, %v2443
    %v2445 = vpop.f32.mrb[0].mxu0
    %2446 = vmatprep.mubr.f32.mxu0 0.0
    %2447 = vmatmul.mubr.f32.gmra.mrb[0].mxu0 %v2304
    %v2448 = vpop.f32.mrb[0].mxu0
    %v2449 = vadd.f32 0.0, %v2448
    %v2450 = vpop.f32.mrb[0].mxu0
    %2451 = vmatprep.mubr.f32.mxu0 0.0
    %2452 = vmatmul.mubr.f32.gmra.mrb[0].mxu0 %v2309
    %v2453 = vpop.f32.mrb[0].mxu0
    %v2454 = vadd.f32 0.0, %v2453
    %v2455 = vpop.f32.mrb[0].mxu0
    %2456 = vmatprep.mubr.f32.mxu0 0.0
    %2457 = vmatmul.mubr.f32.gmra.mrb[0].mxu0 %v2314
    %v2458 = vpop.f32.mrb[0].mxu0
    %v2459 = vadd.f32 0.0, %v2458
    %v2460 = vpop.f32.mrb[0].mxu0
    %2461 = vmatprep.mubr.f32.mxu0 0.0
    %2462 = vmatmul.mubr.f32.gmra.mrb[0].mxu0 %v2319
    %v2463 = vpop.f32.mrb[0].mxu0
    %v2464 = vadd.f32 0.0, %v2463
    %v2465 = vpop.f32.mrb[0].mxu0
    %2466 = vmatprep.mubr.f32.mxu0 0.0
    %2467 = vmatmul.mubr.f32.gmra.mrb[0].mxu0 %v2324
    %v2468 = vpop.f32.mrb[0].mxu0
    %v2469 = vadd.f32 0.0, %v2468
    %v2470 = vpop.f32.mrb[0].mxu0
    %2471 = vdwg.mxu0
    %2472 = vmatprep.subr.mxu0 0.0
    %2473 = vmatpush1.msra.mxu0 %v2394
    %2474 = vmatprep.subr.mxu0 0.0
    %2475 = vmatpush1.msra.mxu0 %v2399
    %2476 = vmatprep.subr.mxu0 0.0
    %2477 = vmatpush1.msra.mxu0 %v2404
    %2478 = vmatprep.subr.mxu0 0.0
    %2479 = vmatpush1.msra.mxu0 %v2409
    %2480 = vmatprep.subr.mxu0 0.0
    %2481 = vmatpush1.msra.mxu0 %v2414
    %2482 = vmatprep.subr.mxu0 0.0
    %2483 = vmatpush1.msra.mxu0 %v2419
    %2484 = vmatprep.subr.mxu0 0.0
    %2485 = vmatpush1.msra.mxu0 %v2424
    %2486 = vmatprep.subr.mxu0 0.0
    %2487 = vmatpush1.msra.mxu0 %v2429
    %2488 = vmatprep.subr.mxu0 0.0
    %2489 = vmatpush1.msra.mxu0 %v2434
    %2490 = vmatprep.subr.mxu0 0.0
    %2491 = vmatpush1.msra.mxu0 %v2439
    %2492 = vmatprep.subr.mxu0 0.0
    %2493 = vmatpush1.msra.mxu0 %v2444
    %2494 = vmatprep.subr.mxu0 0.0
    %2495 = vmatpush1.msra.mxu0 %v2449
    %2496 = vmatprep.subr.mxu0 0.0
    %2497 = vmatpush1.msra.mxu0 %v2454
    %2498 = vmatprep.subr.mxu0 0.0
    %2499 = vmatpush1.msra.mxu0 %v2459
    %2500 = vmatprep.subr.mxu0 0.0
    %2501 = vmatpush1.msra.mxu0 %v2464
    %2502 = vmatprep.subr.mxu0 0.0
    %2503 = vmatpush1.msra.mxu0 %v2469
    %2504 = vmatprep.subr.mxu0 0.0
    %2505 = vmatpush1.msra.mxu0 0.0
    %2506 = vmatprep.subr.mxu0 0.0
    %2507 = vmatpush1.msra.mxu0 0.0
    %2508 = vmatprep.subr.mxu0 0.0
    %2509 = vmatpush1.msra.mxu0 0.0
    %2510 = vmatprep.subr.mxu0 0.0
    %2511 = vmatpush1.msra.mxu0 0.0
    %2512 = vmatprep.subr.mxu0 0.0
    %2513 = vmatpush1.msra.mxu0 0.0
    %2514 = vmatprep.subr.mxu0 0.0
    %2515 = vmatpush1.msra.mxu0 0.0
    %2516 = vmatprep.subr.mxu0 0.0
    %2517 = vmatpush1.msra.mxu0 0.0
    %2518 = vmatprep.subr.mxu0 0.0
    %2519 = vmatpush1.msra.mxu0 0.0
    %2520 = vmatprep.subr.mxu0 0.0
    %2521 = vmatpush1.msra.mxu0 0.0
    %2522 = vmatprep.subr.mxu0 0.0
    %2523 = vmatpush1.msra.mxu0 0.0
    %2524 = vmatprep.subr.mxu0 0.0
    %2525 = vmatpush1.msra.mxu0 0.0
    %2526 = vmatprep.subr.mxu0 0.0
    %2527 = vmatpush1.msra.mxu0 0.0
    %2528 = vmatprep.subr.mxu0 0.0
    %2529 = vmatpush1.msra.mxu0 0.0
    %2530 = vmatprep.subr.mxu0 0.0
    %2531 = vmatpush1.msra.mxu0 0.0
    %2532 = vmatprep.subr.mxu0 0.0
    %2533 = vmatpush1.msra.mxu0 0.0
    %2534 = vmatprep.subr.mxu0 0.0
    %2535 = vmatpush1.msra.mxu0 0.0
    %2536 = vmatprep.mubr.f32.mxu0 0.0
    %2537 = vmatmul.mubr.f32.gmra.mrb[0].mxu0 %v2394
    %v2538 = vpop.f32.mrb[0].mxu0
    %v2539 = vadd.f32 0.0, %v2538
    %v2540 = vpop.f32.mrb[0].mxu0
    %2541 = vmatprep.mubr.f32.mxu0 0.0
    %2542 = vmatmul.mubr.f32.gmra.mrb[0].mxu0 %v2399
    %v2543 = vpop.f32.mrb[0].mxu0
    %v2544 = vadd.f32 0.0, %v2543
    %v2545 = vpop.f32.mrb[0].mxu0
    %2546 = vmatprep.mubr.f32.mxu0 0.0
    %2547 = vmatmul.mubr.f32.gmra.mrb[0].mxu0 %v2404
    %v2548 = vpop.f32.mrb[0].mxu0
    %v2549 = vadd.f32 0.0, %v2548
    %v2550 = vpop.f32.mrb[0].mxu0
    %2551 = vmatprep.mubr.f32.mxu0 0.0
    %2552 = vmatmul.mubr.f32.gmra.mrb[0].mxu0 %v2409
    %v2553 = vpop.f32.mrb[0].mxu0
    %v2554 = vadd.f32 0.0, %v2553
    %v2555 = vpop.f32.mrb[0].mxu0
    %2556 = vmatprep.mubr.f32.mxu0 0.0
    %2557 = vmatmul.mubr.f32.gmra.mrb[0].mxu0 %v2414
    %v2558 = vpop.f32.mrb[0].mxu0
    %v2559 = vadd.f32 0.0, %v2558
    %v2560 = vpop.f32.mrb[0].mxu0
    %2561 = vmatprep.mubr.f32.mxu0 0.0
    %2562 = vmatmul.mubr.f32.gmra.mrb[0].mxu0 %v2419
    %v2563 = vpop.f32.mrb[0].mxu0
    %v2564 = vadd.f32 0.0, %v2563
    %v2565 = vpop.f32.mrb[0].mxu0
    %2566 = vmatprep.mubr.f32.mxu0 0.0
    %2567 = vmatmul.mubr.f32.gmra.mrb[0].mxu0 %v2424
    %v2568 = vpop.f32.mrb[0].mxu0
    %v2569 = vadd.f32 0.0, %v2568
    %v2570 = vpop.f32.mrb[0].mxu0
    %2571 = vmatprep.mubr.f32.mxu0 0.0
    %2572 = vmatmul.mubr.f32.gmra.mrb[0].mxu0 %v2429
    %v2573 = vpop.f32.mrb[0].mxu0
    %v2574 = vadd.f32 0.0, %v2573
    %v2575 = vpop.f32.mrb[0].mxu0
    %2576 = vmatprep.mubr.f32.mxu0 0.0
    %2577 = vmatmul.mubr.f32.gmra.mrb[0].mxu0 %v2434
    %v2578 = vpop.f32.mrb[0].mxu0
    %v2579 = vadd.f32 0.0, %v2578
    %v2580 = vpop.f32.mrb[0].mxu0
    %2581 = vmatprep.mubr.f32.mxu0 0.0
    %2582 = vmatmul.mubr.f32.gmra.mrb[0].mxu0 %v2439
    %v2583 = vpop.f32.mrb[0].mxu0
    %v2584 = vadd.f32 0.0, %v2583
    %v2585 = vpop.f32.mrb[0].mxu0
    %2586 = vmatprep.mubr.f32.mxu0 0.0
    %2587 = vmatmul.mubr.f32.gmra.mrb[0].mxu0 %v2444
    %v2588 = vpop.f32.mrb[0].mxu0
    %v2589 = vadd.f32 0.0, %v2588
    %v2590 = vpop.f32.mrb[0].mxu0
    %2591 = vmatprep.mubr.f32.mxu0 0.0
    %2592 = vmatmul.mubr.f32.gmra.mrb[0].mxu0 %v2449
    %v2593 = vpop.f32.mrb[0].mxu0
    %v2594 = vadd.f32 0.0, %v2593
    %v2595 = vpop.f32.mrb[0].mxu0
    %2596 = vmatprep.mubr.f32.mxu0 0.0
    %2597 = vmatmul.mubr.f32.gmra.mrb[0].mxu0 %v2454
    %v2598 = vpop.f32.mrb[0].mxu0
    %v2599 = vadd.f32 0.0, %v2598
    %v2600 = vpop.f32.mrb[0].mxu0
    %2601 = vmatprep.mubr.f32.mxu0 0.0
    %2602 = vmatmul.mubr.f32.gmra.mrb[0].mxu0 %v2459
    %v2603 = vpop.f32.mrb[0].mxu0
    %v2604 = vadd.f32 0.0, %v2603
    %v2605 = vpop.f32.mrb[0].mxu0
    %2606 = vmatprep.mubr.f32.mxu0 0.0
    %2607 = vmatmul.mubr.f32.gmra.mrb[0].mxu0 %v2464
    %v2608 = vpop.f32.mrb[0].mxu0
    %v2609 = vadd.f32 0.0, %v2608
    %v2610 = vpop.f32.mrb[0].mxu0
    %2611 = vmatprep.mubr.f32.mxu0 0.0
    %2612 = vmatmul.mubr.f32.gmra.mrb[0].mxu0 %v2469
    %v2613 = vpop.f32.mrb[0].mxu0
    %v2614 = vadd.f32 0.0, %v2613
    %v2615 = vpop.f32.mrb[0].mxu0
    %2616 = vdwg.mxu0
    %2617 = vmatprep.subr.mxu0 0.0
    %2618 = vmatpush1.msra.mxu0 %v2539
    %2619 = vmatprep.subr.mxu0 0.0
    %2620 = vmatpush1.msra.mxu0 %v2544
    %2621 = vmatprep.subr.mxu0 0.0
    %2622 = vmatpush1.msra.mxu0 %v2549
    %2623 = vmatprep.subr.mxu0 0.0
    %2624 = vmatpush1.msra.mxu0 %v2554
    %2625 = vmatprep.subr.mxu0 0.0
    %2626 = vmatpush1.msra.mxu0 %v2559
    %2627 = vmatprep.subr.mxu0 0.0
    %2628 = vmatpush1.msra.mxu0 %v2564
    %2629 = vmatprep.subr.mxu0 0.0
    %2630 = vmatpush1.msra.mxu0 %v2569
    %2631 = vmatprep.subr.mxu0 0.0
    %2632 = vmatpush1.msra.mxu0 %v2574
    %2633 = vmatprep.subr.mxu0 0.0
    %2634 = vmatpush1.msra.mxu0 %v2579
    %2635 = vmatprep.subr.mxu0 0.0
    %2636 = vmatpush1.msra.mxu0 %v2584
    %2637 = vmatprep.subr.mxu0 0.0
    %2638 = vmatpush1.msra.mxu0 %v2589
    %2639 = vmatprep.subr.mxu0 0.0
    %2640 = vmatpush1.msra.mxu0 %v2594
    %2641 = vmatprep.subr.mxu0 0.0
    %2642 = vmatpush1.msra.mxu0 %v2599
    %2643 = vmatprep.subr.mxu0 0.0
    %2644 = vmatpush1.msra.mxu0 %v2604
    %2645 = vmatprep.subr.mxu0 0.0
    %2646 = vmatpush1.msra.mxu0 %v2609
    %2647 = vmatprep.subr.mxu0 0.0
    %2648 = vmatpush1.msra.mxu0 %v2614
    %2649 = vmatprep.subr.mxu0 0.0
    %2650 = vmatpush1.msra.mxu0 0.0
    %2651 = vmatprep.subr.mxu0 0.0
    %2652 = vmatpush1.msra.mxu0 0.0
    %2653 = vmatprep.subr.mxu0 0.0
    %2654 = vmatpush1.msra.mxu0 0.0
    %2655 = vmatprep.subr.mxu0 0.0
    %2656 = vmatpush1.msra.mxu0 0.0
    %2657 = vmatprep.subr.mxu0 0.0
    %2658 = vmatpush1.msra.mxu0 0.0
    %2659 = vmatprep.subr.mxu0 0.0
    %2660 = vmatpush1.msra.mxu0 0.0
    %2661 = vmatprep.subr.mxu0 0.0
    %2662 = vmatpush1.msra.mxu0 0.0
    %2663 = vmatprep.subr.mxu0 0.0
    %2664 = vmatpush1.msra.mxu0 0.0
    %2665 = vmatprep.subr.mxu0 0.0
    %2666 = vmatpush1.msra.mxu0 0.0
    %2667 = vmatprep.subr.mxu0 0.0
    %2668 = vmatpush1.msra.mxu0 0.0
    %2669 = vmatprep.subr.mxu0 0.0
    %2670 = vmatpush1.msra.mxu0 0.0
    %2671 = vmatprep.subr.mxu0 0.0
    %2672 = vmatpush1.msra.mxu0 0.0
    %2673 = vmatprep.subr.mxu0 0.0
    %2674 = vmatpush1.msra.mxu0 0.0
    %2675 = vmatprep.subr.mxu0 0.0
    %2676 = vmatpush1.msra.mxu0 0.0
    %2677 = vmatprep.subr.mxu0 0.0
    %2678 = vmatpush1.msra.mxu0 0.0
    %2679 = vmatprep.subr.mxu0 0.0
    %2680 = vmatpush1.msra.mxu0 0.0
    %2681 = vmatprep.mubr.f32.mxu0 0.0
    %2682 = vmatmul.mubr.f32.gmra.mrb[0].mxu0 %v2249
    %v2683 = vpop.f32.mrb[0].mxu0
    %v2684 = vadd.f32 0.0, %v2683
    %v2685 = vpop.f32.mrb[0].mxu0
    %2686 = vmatprep.mubr.f32.mxu0 0.0
    %2687 = vmatmul.mubr.f32.gmra.mrb[0].mxu0 %v2254
    %v2688 = vpop.f32.mrb[0].mxu0
    %v2689 = vadd.f32 0.0, %v2688
    %v2690 = vpop.f32.mrb[0].mxu0
    %2691 = vmatprep.mubr.f32.mxu0 0.0
    %2692 = vmatmul.mubr.f32.gmra.mrb[0].mxu0 %v2259
    %v2693 = vpop.f32.mrb[0].mxu0
    %v2694 = vadd.f32 0.0, %v2693
    %v2695 = vpop.f32.mrb[0].mxu0
    %2696 = vmatprep.mubr.f32.mxu0 0.0
    %2697 = vmatmul.mubr.f32.gmra.mrb[0].mxu0 %v2264
    %v2698 = vpop.f32.mrb[0].mxu0
    %v2699 = vadd.f32 0.0, %v2698
    %v2700 = vpop.f32.mrb[0].mxu0
    %2701 = vmatprep.mubr.f32.mxu0 0.0
    %2702 = vmatmul.mubr.f32.gmra.mrb[0].mxu0 %v2269
    %v2703 = vpop.f32.mrb[0].mxu0
    %v2704 = vadd.f32 0.0, %v2703
    %v2705 = vpop.f32.mrb[0].mxu0
    %2706 = vmatprep.mubr.f32.mxu0 0.0
    %2707 = vmatmul.mubr.f32.gmra.mrb[0].mxu0 %v2274
    %v2708 = vpop.f32.mrb[0].mxu0
    %v2709 = vadd.f32 0.0, %v2708
    %v2710 = vpop.f32.mrb[0].mxu0
    %2711 = vmatprep.mubr.f32.mxu0 0.0
    %2712 = vmatmul.mubr.f32.gmra.mrb[0].mxu0 %v2279
    %v2713 = vpop.f32.mrb[0].mxu0
    %v2714 = vadd.f32 0.0, %v2713
    %v2715 = vpop.f32.mrb[0].mxu0
    %2716 = vmatprep.mubr.f32.mxu0 0.0
    %2717 = vmatmul.mubr.f32.gmra.mrb[0].mxu0 %v2284
    %v2718 = vpop.f32.mrb[0].mxu0
    %v2719 = vadd.f32 0.0, %v2718
    %v2720 = vpop.f32.mrb[0].mxu0
    %2721 = vmatprep.mubr.f32.mxu0 0.0
    %2722 = vmatmul.mubr.f32.gmra.mrb[0].mxu0 %v2289
    %v2723 = vpop.f32.mrb[0].mxu0
    %v2724 = vadd.f32 0.0, %v2723
    %v2725 = vpop.f32.mrb[0].mxu0
    %2726 = vmatprep.mubr.f32.mxu0 0.0
    %2727 = vmatmul.mubr.f32.gmra.mrb[0].mxu0 %v2294
    %v2728 = vpop.f32.mrb[0].mxu0
    %v2729 = vadd.f32 0.0, %v2728
    %v2730 = vpop.f32.mrb[0].mxu0
    %2731 = vmatprep.mubr.f32.mxu0 0.0
    %2732 = vmatmul.mubr.f32.gmra.mrb[0].mxu0 %v2299
    %v2733 = vpop.f32.mrb[0].mxu0
    %v2734 = vadd.f32 0.0, %v2733
    %v2735 = vpop.f32.mrb[0].mxu0
    %2736 = vmatprep.mubr.f32.mxu0 0.0
    %2737 = vmatmul.mubr.f32.gmra.mrb[0].mxu0 %v2304
    %v2738 = vpop.f32.mrb[0].mxu0
    %v2739 = vadd.f32 0.0, %v2738
    %v2740 = vpop.f32.mrb[0].mxu0
    %2741 = vmatprep.mubr.f32.mxu0 0.0
    %2742 = vmatmul.mubr.f32.gmra.mrb[0].mxu0 %v2309
    %v2743 = vpop.f32.mrb[0].mxu0
    %v2744 = vadd.f32 0.0, %v2743
    %v2745 = vpop.f32.mrb[0].mxu0
    %2746 = vmatprep.mubr.f32.mxu0 0.0
    %2747 = vmatmul.mubr.f32.gmra.mrb[0].mxu0 %v2314
    %v2748 = vpop.f32.mrb[0].mxu0
    %v2749 = vadd.f32 0.0, %v2748
    %v2750 = vpop.f32.mrb[0].mxu0
    %2751 = vmatprep.mubr.f32.mxu0 0.0
    %2752 = vmatmul.mubr.f32.gmra.mrb[0].mxu0 %v2319
    %v2753 = vpop.f32.mrb[0].mxu0
    %v2754 = vadd.f32 0.0, %v2753
    %v2755 = vpop.f32.mrb[0].mxu0
    %2756 = vmatprep.mubr.f32.mxu0 0.0
    %2757 = vmatmul.mubr.f32.gmra.mrb[0].mxu0 %v2324
    %v2758 = vpop.f32.mrb[0].mxu0
    %v2759 = vadd.f32 0.0, %v2758
    %v2760 = vpop.f32.mrb[0].mxu0
    %2761 = vdwg.mxu0
    %2762 = vmatprep.subr.mxu0 0.0
    %2763 = vmatpush1.msra.mxu0 %v2684
    %2764 = vmatprep.subr.mxu0 0.0
    %2765 = vmatpush1.msra.mxu0 %v2689
    %2766 = vmatprep.subr.mxu0 0.0
    %2767 = vmatpush1.msra.mxu0 %v2694
    %2768 = vmatprep.subr.mxu0 0.0
    %2769 = vmatpush1.msra.mxu0 %v2699
    %2770 = vmatprep.subr.mxu0 0.0
    %2771 = vmatpush1.msra.mxu0 %v2704
    %2772 = vmatprep.subr.mxu0 0.0
    %2773 = vmatpush1.msra.mxu0 %v2709
    %2774 = vmatprep.subr.mxu0 0.0
    %2775 = vmatpush1.msra.mxu0 %v2714
    %2776 = vmatprep.subr.mxu0 0.0
    %2777 = vmatpush1.msra.mxu0 %v2719
    %2778 = vmatprep.subr.mxu0 0.0
    %2779 = vmatpush1.msra.mxu0 %v2724
    %2780 = vmatprep.subr.mxu0 0.0
    %2781 = vmatpush1.msra.mxu0 %v2729
    %2782 = vmatprep.subr.mxu0 0.0
    %2783 = vmatpush1.msra.mxu0 %v2734
    %2784 = vmatprep.subr.mxu0 0.0
    %2785 = vmatpush1.msra.mxu0 %v2739
    %2786 = vmatprep.subr.mxu0 0.0
    %2787 = vmatpush1.msra.mxu0 %v2744
    %2788 = vmatprep.subr.mxu0 0.0
    %2789 = vmatpush1.msra.mxu0 %v2749
    %2790 = vmatprep.subr.mxu0 0.0
    %2791 = vmatpush1.msra.mxu0 %v2754
    %2792 = vmatprep.subr.mxu0 0.0
    %2793 = vmatpush1.msra.mxu0 %v2759
    %2794 = vmatprep.subr.mxu0 0.0
    %2795 = vmatpush1.msra.mxu0 0.0
    %2796 = vmatprep.subr.mxu0 0.0
    %2797 = vmatpush1.msra.mxu0 0.0
    %2798 = vmatprep.subr.mxu0 0.0
    %2799 = vmatpush1.msra.mxu0 0.0
    %2800 = vmatprep.subr.mxu0 0.0
    %2801 = vmatpush1.msra.mxu0 0.0
    %2802 = vmatprep.subr.mxu0 0.0
    %2803 = vmatpush1.msra.mxu0 0.0
    %2804 = vmatprep.subr.mxu0 0.0
    %2805 = vmatpush1.msra.mxu0 0.0
    %2806 = vmatprep.subr.mxu0 0.0
    %2807 = vmatpush1.msra.mxu0 0.0
    %2808 = vmatprep.subr.mxu0 0.0
    %2809 = vmatpush1.msra.mxu0 0.0
    %2810 = vmatprep.subr.mxu0 0.0
    %2811 = vmatpush1.msra.mxu0 0.0
    %2812 = vmatprep.subr.mxu0 0.0
    %2813 = vmatpush1.msra.mxu0 0.0
    %2814 = vmatprep.subr.mxu0 0.0
    %2815 = vmatpush1.msra.mxu0 0.0
    %2816 = vmatprep.subr.mxu0 0.0
    %2817 = vmatpush1.msra.mxu0 0.0
    %2818 = vmatprep.subr.mxu0 0.0
    %2819 = vmatpush1.msra.mxu0 0.0
    %2820 = vmatprep.subr.mxu0 0.0
    %2821 = vmatpush1.msra.mxu0 0.0
    %2822 = vmatprep.subr.mxu0 0.0
    %2823 = vmatpush1.msra.mxu0 0.0
    %2824 = vmatprep.subr.mxu0 0.0
    %2825 = vmatpush1.msra.mxu0 0.0
    %2826 = vmatprep.mubr.f32.mxu0 0.0
    %2827 = vmatmul.mubr.f32.gmra.mrb[0].mxu0 %v1468
    %v2828 = vpop.f32.mrb[0].mxu0
    %v2829 = vadd.f32 0.0, %v2828
    %v2830 = vpop.f32.mrb[0].mxu0
    %2831 = vdwg.mxu0
    %s2832 = scalar_lea.vmem %s3, 8
    %2833 = vst [vmem:[%s2832] sm:$0xff] %v2829
    %s2834 = sld [smem:[#allocation2 + $0x2]]
    %v2835 = vstv %s2834
    %v2836 = vmul.f32 %v2835, %v27
    %v2837 = vmul.f32 %v2835, %v28
    %v2838 = vmul.f32 %v2835, %v29
    %v2839 = vmul.f32 %v2835, %v30
    %v2840 = vmul.f32 %v2835, %v31
    %v2841 = vmul.f32 %v2835, %v32
    %v2842 = vmul.f32 %v2835, %v33
    %v2843 = vmul.f32 %v2835, %v34
    %v2844 = vmul.f32 %v2835, %v35
    %v2845 = vmul.f32 %v2835, %v36
    %v2846 = vmul.f32 %v2835, %v37
    %v2847 = vmul.f32 %v2835, %v38
    %v2848 = vmul.f32 %v2835, %v39
    %v2849 = vmul.f32 %v2835, %v40
    %v2850 = vmul.f32 %v2835, %v41
    %v2851 = vmul.f32 %v2835, %v42
    %2852 = vmatprep.subr.mxu0 0.0
    %2853 = vmatpush1.msra.mxu0 %v2836
    %2854 = vmatprep.subr.mxu0 0.0
    %2855 = vmatpush1.msra.mxu0 %v2837
    %2856 = vmatprep.subr.mxu0 0.0
    %2857 = vmatpush1.msra.mxu0 %v2838
    %2858 = vmatprep.subr.mxu0 0.0
    %2859 = vmatpush1.msra.mxu0 %v2839
    %2860 = vmatprep.subr.mxu0 0.0
    %2861 = vmatpush1.msra.mxu0 %v2840
    %2862 = vmatprep.subr.mxu0 0.0
    %2863 = vmatpush1.msra.mxu0 %v2841
    %2864 = vmatprep.subr.mxu0 0.0
    %2865 = vmatpush1.msra.mxu0 %v2842
    %2866 = vmatprep.subr.mxu0 0.0
    %2867 = vmatpush1.msra.mxu0 %v2843
    %2868 = vmatprep.subr.mxu0 0.0
    %2869 = vmatpush1.msra.mxu0 %v2844
    %2870 = vmatprep.subr.mxu0 0.0
    %2871 = vmatpush1.msra.mxu0 %v2845
    %2872 = vmatprep.subr.mxu0 0.0
    %2873 = vmatpush1.msra.mxu0 %v2846
    %2874 = vmatprep.subr.mxu0 0.0
    %2875 = vmatpush1.msra.mxu0 %v2847
    %2876 = vmatprep.subr.mxu0 0.0
    %2877 = vmatpush1.msra.mxu0 %v2848
    %2878 = vmatprep.subr.mxu0 0.0
    %2879 = vmatpush1.msra.mxu0 %v2849
    %2880 = vmatprep.subr.mxu0 0.0
    %2881 = vmatpush1.msra.mxu0 %v2850
    %2882 = vmatprep.subr.mxu0 0.0
    %2883 = vmatpush1.msra.mxu0 %v2851
    %2884 = vmatprep.subr.mxu0 0.0
    %2885 = vmatpush1.msra.mxu0 0.0
    %2886 = vmatprep.subr.mxu0 0.0
    %2887 = vmatpush1.msra.mxu0 0.0
    %2888 = vmatprep.subr.mxu0 0.0
    %2889 = vmatpush1.msra.mxu0 0.0
    %2890 = vmatprep.subr.mxu0 0.0
    %2891 = vmatpush1.msra.mxu0 0.0
    %2892 = vmatprep.subr.mxu0 0.0
    %2893 = vmatpush1.msra.mxu0 0.0
    %2894 = vmatprep.subr.mxu0 0.0
    %2895 = vmatpush1.msra.mxu0 0.0
    %2896 = vmatprep.subr.mxu0 0.0
    %2897 = vmatpush1.msra.mxu0 0.0
    %2898 = vmatprep.subr.mxu0 0.0
    %2899 = vmatpush1.msra.mxu0 0.0
    %2900 = vmatprep.subr.mxu0 0.0
    %2901 = vmatpush1.msra.mxu0 0.0
    %2902 = vmatprep.subr.mxu0 0.0
    %2903 = vmatpush1.msra.mxu0 0.0
    %2904 = vmatprep.subr.mxu0 0.0
    %2905 = vmatpush1.msra.mxu0 0.0
    %2906 = vmatprep.subr.mxu0 0.0
    %2907 = vmatpush1.msra.mxu0 0.0
    %2908 = vmatprep.subr.mxu0 0.0
    %2909 = vmatpush1.msra.mxu0 0.0
    %2910 = vmatprep.subr.mxu0 0.0
    %2911 = vmatpush1.msra.mxu0 0.0
    %2912 = vmatprep.subr.mxu0 0.0
    %2913 = vmatpush1.msra.mxu0 0.0
    %2914 = vmatprep.subr.mxu0 0.0
    %2915 = vmatpush1.msra.mxu0 0.0
    %2916 = vmatprep.mubr.f32.mxu0 0.0
    %2917 = vmatmul.mubr.f32.gmra.mrb[0].mxu0 %v2836
    %v2918 = vpop.f32.mrb[0].mxu0
    %v2919 = vadd.f32 0.0, %v2918
    %v2920 = vpop.f32.mrb[0].mxu0
    %2921 = vmatprep.mubr.f32.mxu0 0.0
    %2922 = vmatmul.mubr.f32.gmra.mrb[0].mxu0 %v2837
    %v2923 = vpop.f32.mrb[0].mxu0
    %v2924 = vadd.f32 0.0, %v2923
    %v2925 = vpop.f32.mrb[0].mxu0
    %2926 = vmatprep.mubr.f32.mxu0 0.0
    %2927 = vmatmul.mubr.f32.gmra.mrb[0].mxu0 %v2838
    %v2928 = vpop.f32.mrb[0].mxu0
    %v2929 = vadd.f32 0.0, %v2928
    %v2930 = vpop.f32.mrb[0].mxu0
    %2931 = vmatprep.mubr.f32.mxu0 0.0
    %2932 = vmatmul.mubr.f32.gmra.mrb[0].mxu0 %v2839
    %v2933 = vpop.f32.mrb[0].mxu0
    %v2934 = vadd.f32 0.0, %v2933
    %v2935 = vpop.f32.mrb[0].mxu0
    %2936 = vmatprep.mubr.f32.mxu0 0.0
    %2937 = vmatmul.mubr.f32.gmra.mrb[0].mxu0 %v2840
    %v2938 = vpop.f32.mrb[0].mxu0
    %v2939 = vadd.f32 0.0, %v2938
    %v2940 = vpop.f32.mrb[0].mxu0
    %2941 = vmatprep.mubr.f32.mxu0 0.0
    %2942 = vmatmul.mubr.f32.gmra.mrb[0].mxu0 %v2841
    %v2943 = vpop.f32.mrb[0].mxu0
    %v2944 = vadd.f32 0.0, %v2943
    %v2945 = vpop.f32.mrb[0].mxu0
    %2946 = vmatprep.mubr.f32.mxu0 0.0
    %2947 = vmatmul.mubr.f32.gmra.mrb[0].mxu0 %v2842
    %v2948 = vpop.f32.mrb[0].mxu0
    %v2949 = vadd.f32 0.0, %v2948
    %v2950 = vpop.f32.mrb[0].mxu0
    %2951 = vmatprep.mubr.f32.mxu0 0.0
    %2952 = vmatmul.mubr.f32.gmra.mrb[0].mxu0 %v2843
    %v2953 = vpop.f32.mrb[0].mxu0
    %v2954 = vadd.f32 0.0, %v2953
    %v2955 = vpop.f32.mrb[0].mxu0
    %2956 = vmatprep.mubr.f32.mxu0 0.0
    %2957 = vmatmul.mubr.f32.gmra.mrb[0].mxu0 %v2844
    %v2958 = vpop.f32.mrb[0].mxu0
    %v2959 = vadd.f32 0.0, %v2958
    %v2960 = vpop.f32.mrb[0].mxu0
    %2961 = vmatprep.mubr.f32.mxu0 0.0
    %2962 = vmatmul.mubr.f32.gmra.mrb[0].mxu0 %v2845
    %v2963 = vpop.f32.mrb[0].mxu0
    %v2964 = vadd.f32 0.0, %v2963
    %v2965 = vpop.f32.mrb[0].mxu0
    %2966 = vmatprep.mubr.f32.mxu0 0.0
    %2967 = vmatmul.mubr.f32.gmra.mrb[0].mxu0 %v2846
    %v2968 = vpop.f32.mrb[0].mxu0
    %v2969 = vadd.f32 0.0, %v2968
    %v2970 = vpop.f32.mrb[0].mxu0
    %2971 = vmatprep.mubr.f32.mxu0 0.0
    %2972 = vmatmul.mubr.f32.gmra.mrb[0].mxu0 %v2847
    %v2973 = vpop.f32.mrb[0].mxu0
    %v2974 = vadd.f32 0.0, %v2973
    %v2975 = vpop.f32.mrb[0].mxu0
    %2976 = vmatprep.mubr.f32.mxu0 0.0
    %2977 = vmatmul.mubr.f32.gmra.mrb[0].mxu0 %v2848
    %v2978 = vpop.f32.mrb[0].mxu0
    %v2979 = vadd.f32 0.0, %v2978
    %v2980 = vpop.f32.mrb[0].mxu0
    %2981 = vmatprep.mubr.f32.mxu0 0.0
    %2982 = vmatmul.mubr.f32.gmra.mrb[0].mxu0 %v2849
    %v2983 = vpop.f32.mrb[0].mxu0
    %v2984 = vadd.f32 0.0, %v2983
    %v2985 = vpop.f32.mrb[0].mxu0
    %2986 = vmatprep.mubr.f32.mxu0 0.0
    %2987 = vmatmul.mubr.f32.gmra.mrb[0].mxu0 %v2850
    %v2988 = vpop.f32.mrb[0].mxu0
    %v2989 = vadd.f32 0.0, %v2988
    %v2990 = vpop.f32.mrb[0].mxu0
    %2991 = vmatprep.mubr.f32.mxu0 0.0
    %2992 = vmatmul.mubr.f32.gmra.mrb[0].mxu0 %v2851
    %v2993 = vpop.f32.mrb[0].mxu0
    %v2994 = vadd.f32 0.0, %v2993
    %v2995 = vpop.f32.mrb[0].mxu0
    %2996 = vdwg.mxu0
    %2997 = vmatprep.subr.mxu0 0.0
    %2998 = vmatpush1.msra.mxu0 %v2836
    %2999 = vmatprep.subr.mxu0 0.0
    %3000 = vmatpush1.msra.mxu0 %v2837
    %3001 = vmatprep.subr.mxu0 0.0
    %3002 = vmatpush1.msra.mxu0 %v2838
    %3003 = vmatprep.subr.mxu0 0.0
    %3004 = vmatpush1.msra.mxu0 %v2839
    %3005 = vmatprep.subr.mxu0 0.0
    %3006 = vmatpush1.msra.mxu0 %v2840
    %3007 = vmatprep.subr.mxu0 0.0
    %3008 = vmatpush1.msra.mxu0 %v2841
    %3009 = vmatprep.subr.mxu0 0.0
    %3010 = vmatpush1.msra.mxu0 %v2842
    %3011 = vmatprep.subr.mxu0 0.0
    %3012 = vmatpush1.msra.mxu0 %v2843
    %3013 = vmatprep.subr.mxu0 0.0
    %3014 = vmatpush1.msra.mxu0 %v2844
    %3015 = vmatprep.subr.mxu0 0.0
    %3016 = vmatpush1.msra.mxu0 %v2845
    %3017 = vmatprep.subr.mxu0 0.0
    %3018 = vmatpush1.msra.mxu0 %v2846
    %3019 = vmatprep.subr.mxu0 0.0
    %3020 = vmatpush1.msra.mxu0 %v2847
    %3021 = vmatprep.subr.mxu0 0.0
    %3022 = vmatpush1.msra.mxu0 %v2848
    %3023 = vmatprep.subr.mxu0 0.0
    %3024 = vmatpush1.msra.mxu0 %v2849
    %3025 = vmatprep.subr.mxu0 0.0
    %3026 = vmatpush1.msra.mxu0 %v2850
    %3027 = vmatprep.subr.mxu0 0.0
    %3028 = vmatpush1.msra.mxu0 %v2851
    %3029 = vmatprep.subr.mxu0 0.0
    %3030 = vmatpush1.msra.mxu0 0.0
    %3031 = vmatprep.subr.mxu0 0.0
    %3032 = vmatpush1.msra.mxu0 0.0
    %3033 = vmatprep.subr.mxu0 0.0
    %3034 = vmatpush1.msra.mxu0 0.0
    %3035 = vmatprep.subr.mxu0 0.0
    %3036 = vmatpush1.msra.mxu0 0.0
    %3037 = vmatprep.subr.mxu0 0.0
    %3038 = vmatpush1.msra.mxu0 0.0
    %3039 = vmatprep.subr.mxu0 0.0
    %3040 = vmatpush1.msra.mxu0 0.0
    %3041 = vmatprep.subr.mxu0 0.0
    %3042 = vmatpush1.msra.mxu0 0.0
    %3043 = vmatprep.subr.mxu0 0.0
    %3044 = vmatpush1.msra.mxu0 0.0
    %3045 = vmatprep.subr.mxu0 0.0
    %3046 = vmatpush1.msra.mxu0 0.0
    %3047 = vmatprep.subr.mxu0 0.0
    %3048 = vmatpush1.msra.mxu0 0.0
    %3049 = vmatprep.subr.mxu0 0.0
    %3050 = vmatpush1.msra.mxu0 0.0
    %3051 = vmatprep.subr.mxu0 0.0
    %3052 = vmatpush1.msra.mxu0 0.0
    %3053 = vmatprep.subr.mxu0 0.0
    %3054 = vmatpush1.msra.mxu0 0.0
    %3055 = vmatprep.subr.mxu0 0.0
    %3056 = vmatpush1.msra.mxu0 0.0
    %3057 = vmatprep.subr.mxu0 0.0
    %3058 = vmatpush1.msra.mxu0 0.0
    %3059 = vmatprep.subr.mxu0 0.0
    %3060 = vmatpush1.msra.mxu0 0.0
    %3061 = vmatprep.mubr.f32.mxu0 0.0
    %3062 = vmatmul.mubr.f32.gmra.mrb[0].mxu0 %v2919
    %v3063 = vpop.f32.mrb[0].mxu0
    %v3064 = vadd.f32 0.0, %v3063
    %v3065 = vpop.f32.mrb[0].mxu0
    %3066 = vmatprep.mubr.f32.mxu0 0.0
    %3067 = vmatmul.mubr.f32.gmra.mrb[0].mxu0 %v2924
    %v3068 = vpop.f32.mrb[0].mxu0
    %v3069 = vadd.f32 0.0, %v3068
    %v3070 = vpop.f32.mrb[0].mxu0
    %3071 = vmatprep.mubr.f32.mxu0 0.0
    %3072 = vmatmul.mubr.f32.gmra.mrb[0].mxu0 %v2929
    %v3073 = vpop.f32.mrb[0].mxu0
    %v3074 = vadd.f32 0.0, %v3073
    %v3075 = vpop.f32.mrb[0].mxu0
    %3076 = vmatprep.mubr.f32.mxu0 0.0
    %3077 = vmatmul.mubr.f32.gmra.mrb[0].mxu0 %v2934
    %v3078 = vpop.f32.mrb[0].mxu0
    %v3079 = vadd.f32 0.0, %v3078
    %v3080 = vpop.f32.mrb[0].mxu0
    %3081 = vmatprep.mubr.f32.mxu0 0.0
    %3082 = vmatmul.mubr.f32.gmra.mrb[0].mxu0 %v2939
    %v3083 = vpop.f32.mrb[0].mxu0
    %v3084 = vadd.f32 0.0, %v3083
    %v3085 = vpop.f32.mrb[0].mxu0
    %3086 = vmatprep.mubr.f32.mxu0 0.0
    %3087 = vmatmul.mubr.f32.gmra.mrb[0].mxu0 %v2944
    %v3088 = vpop.f32.mrb[0].mxu0
    %v3089 = vadd.f32 0.0, %v3088
    %v3090 = vpop.f32.mrb[0].mxu0
    %3091 = vmatprep.mubr.f32.mxu0 0.0
    %3092 = vmatmul.mubr.f32.gmra.mrb[0].mxu0 %v2949
    %v3093 = vpop.f32.mrb[0].mxu0
    %v3094 = vadd.f32 0.0, %v3093
    %v3095 = vpop.f32.mrb[0].mxu0
    %3096 = vmatprep.mubr.f32.mxu0 0.0
    %3097 = vmatmul.mubr.f32.gmra.mrb[0].mxu0 %v2954
    %v3098 = vpop.f32.mrb[0].mxu0
    %v3099 = vadd.f32 0.0, %v3098
    %v3100 = vpop.f32.mrb[0].mxu0
    %3101 = vmatprep.mubr.f32.mxu0 0.0
    %3102 = vmatmul.mubr.f32.gmra.mrb[0].mxu0 %v2959
    %v3103 = vpop.f32.mrb[0].mxu0
    %v3104 = vadd.f32 0.0, %v3103
    %v3105 = vpop.f32.mrb[0].mxu0
    %3106 = vmatprep.mubr.f32.mxu0 0.0
    %3107 = vmatmul.mubr.f32.gmra.mrb[0].mxu0 %v2964
    %v3108 = vpop.f32.mrb[0].mxu0
    %v3109 = vadd.f32 0.0, %v3108
    %v3110 = vpop.f32.mrb[0].mxu0
    %3111 = vmatprep.mubr.f32.mxu0 0.0
    %3112 = vmatmul.mubr.f32.gmra.mrb[0].mxu0 %v2969
    %v3113 = vpop.f32.mrb[0].mxu0
    %v3114 = vadd.f32 0.0, %v3113
    %v3115 = vpop.f32.mrb[0].mxu0
    %3116 = vmatprep.mubr.f32.mxu0 0.0
    %3117 = vmatmul.mubr.f32.gmra.mrb[0].mxu0 %v2974
    %v3118 = vpop.f32.mrb[0].mxu0
    %v3119 = vadd.f32 0.0, %v3118
    %v3120 = vpop.f32.mrb[0].mxu0
    %3121 = vmatprep.mubr.f32.mxu0 0.0
    %3122 = vmatmul.mubr.f32.gmra.mrb[0].mxu0 %v2979
    %v3123 = vpop.f32.mrb[0].mxu0
    %v3124 = vadd.f32 0.0, %v3123
    %v3125 = vpop.f32.mrb[0].mxu0
    %3126 = vmatprep.mubr.f32.mxu0 0.0
    %3127 = vmatmul.mubr.f32.gmra.mrb[0].mxu0 %v2984
    %v3128 = vpop.f32.mrb[0].mxu0
    %v3129 = vadd.f32 0.0, %v3128
    %v3130 = vpop.f32.mrb[0].mxu0
    %3131 = vmatprep.mubr.f32.mxu0 0.0
    %3132 = vmatmul.mubr.f32.gmra.mrb[0].mxu0 %v2989
    %v3133 = vpop.f32.mrb[0].mxu0
    %v3134 = vadd.f32 0.0, %v3133
    %v3135 = vpop.f32.mrb[0].mxu0
    %3136 = vmatprep.mubr.f32.mxu0 0.0
    %3137 = vmatmul.mubr.f32.gmra.mrb[0].mxu0 %v2994
    %v3138 = vpop.f32.mrb[0].mxu0
    %v3139 = vadd.f32 0.0, %v3138
    %v3140 = vpop.f32.mrb[0].mxu0
    %3141 = vdwg.mxu0
    %3142 = vmatprep.subr.mxu0 0.0
    %3143 = vmatpush1.msra.mxu0 %v2836
    %3144 = vmatprep.subr.mxu0 0.0
    %3145 = vmatpush1.msra.mxu0 %v2837
    %3146 = vmatprep.subr.mxu0 0.0
    %3147 = vmatpush1.msra.mxu0 %v2838
    %3148 = vmatprep.subr.mxu0 0.0
    %3149 = vmatpush1.msra.mxu0 %v2839
    %3150 = vmatprep.subr.mxu0 0.0
    %3151 = vmatpush1.msra.mxu0 %v2840
    %3152 = vmatprep.subr.mxu0 0.0
    %3153 = vmatpush1.msra.mxu0 %v2841
    %3154 = vmatprep.subr.mxu0 0.0
    %3155 = vmatpush1.msra.mxu0 %v2842
    %3156 = vmatprep.subr.mxu0 0.0
    %3157 = vmatpush1.msra.mxu0 %v2843
    %3158 = vmatprep.subr.mxu0 0.0
    %3159 = vmatpush1.msra.mxu0 %v2844
    %3160 = vmatprep.subr.mxu0 0.0
    %3161 = vmatpush1.msra.mxu0 %v2845
    %3162 = vmatprep.subr.mxu0 0.0
    %3163 = vmatpush1.msra.mxu0 %v2846
    %3164 = vmatprep.subr.mxu0 0.0
    %3165 = vmatpush1.msra.mxu0 %v2847
    %3166 = vmatprep.subr.mxu0 0.0
    %3167 = vmatpush1.msra.mxu0 %v2848
    %3168 = vmatprep.subr.mxu0 0.0
    %3169 = vmatpush1.msra.mxu0 %v2849
    %3170 = vmatprep.subr.mxu0 0.0
    %3171 = vmatpush1.msra.mxu0 %v2850
    %3172 = vmatprep.subr.mxu0 0.0
    %3173 = vmatpush1.msra.mxu0 %v2851
    %3174 = vmatprep.subr.mxu0 0.0
    %3175 = vmatpush1.msra.mxu0 0.0
    %3176 = vmatprep.subr.mxu0 0.0
    %3177 = vmatpush1.msra.mxu0 0.0
    %3178 = vmatprep.subr.mxu0 0.0
    %3179 = vmatpush1.msra.mxu0 0.0
    %3180 = vmatprep.subr.mxu0 0.0
    %3181 = vmatpush1.msra.mxu0 0.0
    %3182 = vmatprep.subr.mxu0 0.0
    %3183 = vmatpush1.msra.mxu0 0.0
    %3184 = vmatprep.subr.mxu0 0.0
    %3185 = vmatpush1.msra.mxu0 0.0
    %3186 = vmatprep.subr.mxu0 0.0
    %3187 = vmatpush1.msra.mxu0 0.0
    %3188 = vmatprep.subr.mxu0 0.0
    %3189 = vmatpush1.msra.mxu0 0.0
    %3190 = vmatprep.subr.mxu0 0.0
    %3191 = vmatpush1.msra.mxu0 0.0
    %3192 = vmatprep.subr.mxu0 0.0
    %3193 = vmatpush1.msra.mxu0 0.0
    %3194 = vmatprep.subr.mxu0 0.0
    %3195 = vmatpush1.msra.mxu0 0.0
    %3196 = vmatprep.subr.mxu0 0.0
    %3197 = vmatpush1.msra.mxu0 0.0
    %3198 = vmatprep.subr.mxu0 0.0
    %3199 = vmatpush1.msra.mxu0 0.0
    %3200 = vmatprep.subr.mxu0 0.0
    %3201 = vmatpush1.msra.mxu0 0.0
    %3202 = vmatprep.subr.mxu0 0.0
    %3203 = vmatpush1.msra.mxu0 0.0
    %3204 = vmatprep.subr.mxu0 0.0
    %3205 = vmatpush1.msra.mxu0 0.0
    %3206 = vmatprep.mubr.f32.mxu0 0.0
    %3207 = vmatmul.mubr.f32.gmra.mrb[0].mxu0 %v3064
    %v3208 = vpop.f32.mrb[0].mxu0
    %v3209 = vadd.f32 0.0, %v3208
    %v3210 = vpop.f32.mrb[0].mxu0
    %3211 = vmatprep.mubr.f32.mxu0 0.0
    %3212 = vmatmul.mubr.f32.gmra.mrb[0].mxu0 %v3069
    %v3213 = vpop.f32.mrb[0].mxu0
    %v3214 = vadd.f32 0.0, %v3213
    %v3215 = vpop.f32.mrb[0].mxu0
    %3216 = vmatprep.mubr.f32.mxu0 0.0
    %3217 = vmatmul.mubr.f32.gmra.mrb[0].mxu0 %v3074
    %v3218 = vpop.f32.mrb[0].mxu0
    %v3219 = vadd.f32 0.0, %v3218
    %v3220 = vpop.f32.mrb[0].mxu0
    %3221 = vmatprep.mubr.f32.mxu0 0.0
    %3222 = vmatmul.mubr.f32.gmra.mrb[0].mxu0 %v3079
    %v3223 = vpop.f32.mrb[0].mxu0
    %v3224 = vadd.f32 0.0, %v3223
    %v3225 = vpop.f32.mrb[0].mxu0
    %3226 = vmatprep.mubr.f32.mxu0 0.0
    %3227 = vmatmul.mubr.f32.gmra.mrb[0].mxu0 %v3084
    %v3228 = vpop.f32.mrb[0].mxu0
    %v3229 = vadd.f32 0.0, %v3228
    %v3230 = vpop.f32.mrb[0].mxu0
    %3231 = vmatprep.mubr.f32.mxu0 0.0
    %3232 = vmatmul.mubr.f32.gmra.mrb[0].mxu0 %v3089
    %v3233 = vpop.f32.mrb[0].mxu0
    %v3234 = vadd.f32 0.0, %v3233
    %v3235 = vpop.f32.mrb[0].mxu0
    %3236 = vmatprep.mubr.f32.mxu0 0.0
    %3237 = vmatmul.mubr.f32.gmra.mrb[0].mxu0 %v3094
    %v3238 = vpop.f32.mrb[0].mxu0
    %v3239 = vadd.f32 0.0, %v3238
    %v3240 = vpop.f32.mrb[0].mxu0
    %3241 = vmatprep.mubr.f32.mxu0 0.0
    %3242 = vmatmul.mubr.f32.gmra.mrb[0].mxu0 %v3099
    %v3243 = vpop.f32.mrb[0].mxu0
    %v3244 = vadd.f32 0.0, %v3243
    %v3245 = vpop.f32.mrb[0].mxu0
    %3246 = vmatprep.mubr.f32.mxu0 0.0
    %3247 = vmatmul.mubr.f32.gmra.mrb[0].mxu0 %v3104
    %v3248 = vpop.f32.mrb[0].mxu0
    %v3249 = vadd.f32 0.0, %v3248
    %v3250 = vpop.f32.mrb[0].mxu0
    %3251 = vmatprep.mubr.f32.mxu0 0.0
    %3252 = vmatmul.mubr.f32.gmra.mrb[0].mxu0 %v3109
    %v3253 = vpop.f32.mrb[0].mxu0
    %v3254 = vadd.f32 0.0, %v3253
    %v3255 = vpop.f32.mrb[0].mxu0
    %3256 = vmatprep.mubr.f32.mxu0 0.0
    %3257 = vmatmul.mubr.f32.gmra.mrb[0].mxu0 %v3114
    %v3258 = vpop.f32.mrb[0].mxu0
    %v3259 = vadd.f32 0.0, %v3258
    %v3260 = vpop.f32.mrb[0].mxu0
    %3261 = vmatprep.mubr.f32.mxu0 0.0
    %3262 = vmatmul.mubr.f32.gmra.mrb[0].mxu0 %v3119
    %v3263 = vpop.f32.mrb[0].mxu0
    %v3264 = vadd.f32 0.0, %v3263
    %v3265 = vpop.f32.mrb[0].mxu0
    %3266 = vmatprep.mubr.f32.mxu0 0.0
    %3267 = vmatmul.mubr.f32.gmra.mrb[0].mxu0 %v3124
    %v3268 = vpop.f32.mrb[0].mxu0
    %v3269 = vadd.f32 0.0, %v3268
    %v3270 = vpop.f32.mrb[0].mxu0
    %3271 = vmatprep.mubr.f32.mxu0 0.0
    %3272 = vmatmul.mubr.f32.gmra.mrb[0].mxu0 %v3129
    %v3273 = vpop.f32.mrb[0].mxu0
    %v3274 = vadd.f32 0.0, %v3273
    %v3275 = vpop.f32.mrb[0].mxu0
    %3276 = vmatprep.mubr.f32.mxu0 0.0
    %3277 = vmatmul.mubr.f32.gmra.mrb[0].mxu0 %v3134
    %v3278 = vpop.f32.mrb[0].mxu0
    %v3279 = vadd.f32 0.0, %v3278
    %v3280 = vpop.f32.mrb[0].mxu0
    %3281 = vmatprep.mubr.f32.mxu0 0.0
    %3282 = vmatmul.mubr.f32.gmra.mrb[0].mxu0 %v3139
    %v3283 = vpop.f32.mrb[0].mxu0
    %v3284 = vadd.f32 0.0, %v3283
    %v3285 = vpop.f32.mrb[0].mxu0
    %3286 = vdwg.mxu0
    %v3287 = vadd.f32 %v94, %v2836
    %v3288 = vadd.f32 %v95, %v2837
    %v3289 = vadd.f32 %v96, %v2838
    %v3290 = vadd.f32 %v97, %v2839
    %v3291 = vadd.f32 %v98, %v2840
    %v3292 = vadd.f32 %v99, %v2841
    %v3293 = vadd.f32 %v100, %v2842
    %v3294 = vadd.f32 %v101, %v2843
    %v3295 = vadd.f32 %v102, %v2844
    %v3296 = vadd.f32 %v103, %v2845
    %v3297 = vadd.f32 %v104, %v2846
    %v3298 = vadd.f32 %v105, %v2847
    %v3299 = vadd.f32 %v106, %v2848
    %v3300 = vadd.f32 %v107, %v2849
    %v3301 = vadd.f32 %v108, %v2850
    %v3302 = vadd.f32 %v109, %v2851
    %v3303 = vmul.f32 %v2919, 0.5
    %v3304 = vmul.f32 %v2924, 0.5
    %v3305 = vmul.f32 %v2929, 0.5
    %v3306 = vmul.f32 %v2934, 0.5
    %v3307 = vmul.f32 %v2939, 0.5
    %v3308 = vmul.f32 %v2944, 0.5
    %v3309 = vmul.f32 %v2949, 0.5
    %v3310 = vmul.f32 %v2954, 0.5
    %v3311 = vmul.f32 %v2959, 0.5
    %v3312 = vmul.f32 %v2964, 0.5
    %v3313 = vmul.f32 %v2969, 0.5
    %v3314 = vmul.f32 %v2974, 0.5
    %v3315 = vmul.f32 %v2979, 0.5
    %v3316 = vmul.f32 %v2984, 0.5
    %v3317 = vmul.f32 %v2989, 0.5
    %v3318 = vmul.f32 %v2994, 0.5
    %v3319 = vadd.f32 %v3287, %v3303
    %v3320 = vadd.f32 %v3288, %v3304
    %v3321 = vadd.f32 %v3289, %v3305
    %v3322 = vadd.f32 %v3290, %v3306
    %v3323 = vadd.f32 %v3291, %v3307
    %v3324 = vadd.f32 %v3292, %v3308
    %v3325 = vadd.f32 %v3293, %v3309
    %v3326 = vadd.f32 %v3294, %v3310
    %v3327 = vadd.f32 %v3295, %v3311
    %v3328 = vadd.f32 %v3296, %v3312
    %v3329 = vadd.f32 %v3297, %v3313
    %v3330 = vadd.f32 %v3298, %v3314
    %v3331 = vadd.f32 %v3299, %v3315
    %v3332 = vadd.f32 %v3300, %v3316
    %v3333 = vadd.f32 %v3301, %v3317
    %v3334 = vadd.f32 %v3302, %v3318
    %v3335 = vmul.f32 %v3064, 0.16666667
    %v3336 = vmul.f32 %v3069, 0.16666667
    %v3337 = vmul.f32 %v3074, 0.16666667
    %v3338 = vmul.f32 %v3079, 0.16666667
    %v3339 = vmul.f32 %v3084, 0.16666667
    %v3340 = vmul.f32 %v3089, 0.16666667
    %v3341 = vmul.f32 %v3094, 0.16666667
    %v3342 = vmul.f32 %v3099, 0.16666667
    %v3343 = vmul.f32 %v3104, 0.16666667
    %v3344 = vmul.f32 %v3109, 0.16666667
    %v3345 = vmul.f32 %v3114, 0.16666667
    %v3346 = vmul.f32 %v3119, 0.16666667
    %v3347 = vmul.f32 %v3124, 0.16666667
    %v3348 = vmul.f32 %v3129, 0.16666667
    %v3349 = vmul.f32 %v3134, 0.16666667
    %v3350 = vmul.f32 %v3139, 0.16666667
    %v3351 = vadd.f32 %v3319, %v3335
    %v3352 = vadd.f32 %v3320, %v3336
    %v3353 = vadd.f32 %v3321, %v3337
    %v3354 = vadd.f32 %v3322, %v3338
    %v3355 = vadd.f32 %v3323, %v3339
    %v3356 = vadd.f32 %v3324, %v3340
    %v3357 = vadd.f32 %v3325, %v3341
    %v3358 = vadd.f32 %v3326, %v3342
    %v3359 = vadd.f32 %v3327, %v3343
    %v3360 = vadd.f32 %v3328, %v3344
    %v3361 = vadd.f32 %v3329, %v3345
    %v3362 = vadd.f32 %v3330, %v3346
    %v3363 = vadd.f32 %v3331, %v3347
    %v3364 = vadd.f32 %v3332, %v3348
    %v3365 = vadd.f32 %v3333, %v3349
    %v3366 = vadd.f32 %v3334, %v3350
    %v3367 = vmul.f32 %v3209, 0.041666668
    %v3368 = vmul.f32 %v3214, 0.041666668
    %v3369 = vmul.f32 %v3219, 0.041666668
    %v3370 = vmul.f32 %v3224, 0.041666668
    %v3371 = vmul.f32 %v3229, 0.041666668
    %v3372 = vmul.f32 %v3234, 0.041666668
    %v3373 = vmul.f32 %v3239, 0.041666668
    %v3374 = vmul.f32 %v3244, 0.041666668
    %v3375 = vmul.f32 %v3249, 0.041666668
    %v3376 = vmul.f32 %v3254, 0.041666668
    %v3377 = vmul.f32 %v3259, 0.041666668
    %v3378 = vmul.f32 %v3264, 0.041666668
    %v3379 = vmul.f32 %v3269, 0.041666668
    %v3380 = vmul.f32 %v3274, 0.041666668
    %v3381 = vmul.f32 %v3279, 0.041666668
    %v3382 = vmul.f32 %v3284, 0.041666668
    %v3383 = vadd.f32 %v3351, %v3367
    %v3384 = vadd.f32 %v3352, %v3368
    %v3385 = vadd.f32 %v3353, %v3369
    %v3386 = vadd.f32 %v3354, %v3370
    %v3387 = vadd.f32 %v3355, %v3371
    %v3388 = vadd.f32 %v3356, %v3372
    %v3389 = vadd.f32 %v3357, %v3373
    %v3390 = vadd.f32 %v3358, %v3374
    %v3391 = vadd.f32 %v3359, %v3375
    %v3392 = vadd.f32 %v3360, %v3376
    %v3393 = vadd.f32 %v3361, %v3377
    %v3394 = vadd.f32 %v3362, %v3378
    %v3395 = vadd.f32 %v3363, %v3379
    %v3396 = vadd.f32 %v3364, %v3380
    %v3397 = vadd.f32 %v3365, %v3381
    %v3398 = vadd.f32 %v3366, %v3382
    %3399 = vmatprep.subr.mxu0 0.0
    %3400 = vmatpush1.msra.mxu0 %v3383
    %3401 = vmatprep.subr.mxu0 0.0
    %3402 = vmatpush1.msra.mxu0 %v3384
    %3403 = vmatprep.subr.mxu0 0.0
    %3404 = vmatpush1.msra.mxu0 %v3385
    %3405 = vmatprep.subr.mxu0 0.0
    %3406 = vmatpush1.msra.mxu0 %v3386
    %3407 = vmatprep.subr.mxu0 0.0
    %3408 = vmatpush1.msra.mxu0 %v3387
    %3409 = vmatprep.subr.mxu0 0.0
    %3410 = vmatpush1.msra.mxu0 %v3388
    %3411 = vmatprep.subr.mxu0 0.0
    %3412 = vmatpush1.msra.mxu0 %v3389
    %3413 = vmatprep.subr.mxu0 0.0
    %3414 = vmatpush1.msra.mxu0 %v3390
    %3415 = vmatprep.subr.mxu0 0.0
    %3416 = vmatpush1.msra.mxu0 %v3391
    %3417 = vmatprep.subr.mxu0 0.0
    %3418 = vmatpush1.msra.mxu0 %v3392
    %3419 = vmatprep.subr.mxu0 0.0
    %3420 = vmatpush1.msra.mxu0 %v3393
    %3421 = vmatprep.subr.mxu0 0.0
    %3422 = vmatpush1.msra.mxu0 %v3394
    %3423 = vmatprep.subr.mxu0 0.0
    %3424 = vmatpush1.msra.mxu0 %v3395
    %3425 = vmatprep.subr.mxu0 0.0
    %3426 = vmatpush1.msra.mxu0 %v3396
    %3427 = vmatprep.subr.mxu0 0.0
    %3428 = vmatpush1.msra.mxu0 %v3397
    %3429 = vmatprep.subr.mxu0 0.0
    %3430 = vmatpush1.msra.mxu0 %v3398
    %3431 = vmatprep.subr.mxu0 0.0
    %3432 = vmatpush1.msra.mxu0 0.0
    %3433 = vmatprep.subr.mxu0 0.0
    %3434 = vmatpush1.msra.mxu0 0.0
    %3435 = vmatprep.subr.mxu0 0.0
    %3436 = vmatpush1.msra.mxu0 0.0
    %3437 = vmatprep.subr.mxu0 0.0
    %3438 = vmatpush1.msra.mxu0 0.0
    %3439 = vmatprep.subr.mxu0 0.0
    %3440 = vmatpush1.msra.mxu0 0.0
    %3441 = vmatprep.subr.mxu0 0.0
    %3442 = vmatpush1.msra.mxu0 0.0
    %3443 = vmatprep.subr.mxu0 0.0
    %3444 = vmatpush1.msra.mxu0 0.0
    %3445 = vmatprep.subr.mxu0 0.0
    %3446 = vmatpush1.msra.mxu0 0.0
    %3447 = vmatprep.subr.mxu0 0.0
    %3448 = vmatpush1.msra.mxu0 0.0
    %3449 = vmatprep.subr.mxu0 0.0
    %3450 = vmatpush1.msra.mxu0 0.0
    %3451 = vmatprep.subr.mxu0 0.0
    %3452 = vmatpush1.msra.mxu0 0.0
    %3453 = vmatprep.subr.mxu0 0.0
    %3454 = vmatpush1.msra.mxu0 0.0
    %3455 = vmatprep.subr.mxu0 0.0
    %3456 = vmatpush1.msra.mxu0 0.0
    %3457 = vmatprep.subr.mxu0 0.0
    %3458 = vmatpush1.msra.mxu0 0.0
    %3459 = vmatprep.subr.mxu0 0.0
    %3460 = vmatpush1.msra.mxu0 0.0
    %3461 = vmatprep.subr.mxu0 0.0
    %3462 = vmatpush1.msra.mxu0 0.0
    %3463 = vmatprep.mubr.f32.mxu0 0.0
    %3464 = vmatmul.mubr.f32.gmra.mrb[0].mxu0 %v3383
    %v3465 = vpop.f32.mrb[0].mxu0
    %v3466 = vadd.f32 0.0, %v3465
    %v3467 = vpop.f32.mrb[0].mxu0
    %3468 = vmatprep.mubr.f32.mxu0 0.0
    %3469 = vmatmul.mubr.f32.gmra.mrb[0].mxu0 %v3384
    %v3470 = vpop.f32.mrb[0].mxu0
    %v3471 = vadd.f32 0.0, %v3470
    %v3472 = vpop.f32.mrb[0].mxu0
    %3473 = vmatprep.mubr.f32.mxu0 0.0
    %3474 = vmatmul.mubr.f32.gmra.mrb[0].mxu0 %v3385
    %v3475 = vpop.f32.mrb[0].mxu0
    %v3476 = vadd.f32 0.0, %v3475
    %v3477 = vpop.f32.mrb[0].mxu0
    %3478 = vmatprep.mubr.f32.mxu0 0.0
    %3479 = vmatmul.mubr.f32.gmra.mrb[0].mxu0 %v3386
    %v3480 = vpop.f32.mrb[0].mxu0
    %v3481 = vadd.f32 0.0, %v3480
    %v3482 = vpop.f32.mrb[0].mxu0
    %3483 = vmatprep.mubr.f32.mxu0 0.0
    %3484 = vmatmul.mubr.f32.gmra.mrb[0].mxu0 %v3387
    %v3485 = vpop.f32.mrb[0].mxu0
    %v3486 = vadd.f32 0.0, %v3485
    %v3487 = vpop.f32.mrb[0].mxu0
    %3488 = vmatprep.mubr.f32.mxu0 0.0
    %3489 = vmatmul.mubr.f32.gmra.mrb[0].mxu0 %v3388
    %v3490 = vpop.f32.mrb[0].mxu0
    %v3491 = vadd.f32 0.0, %v3490
    %v3492 = vpop.f32.mrb[0].mxu0
    %3493 = vmatprep.mubr.f32.mxu0 0.0
    %3494 = vmatmul.mubr.f32.gmra.mrb[0].mxu0 %v3389
    %v3495 = vpop.f32.mrb[0].mxu0
    %v3496 = vadd.f32 0.0, %v3495
    %v3497 = vpop.f32.mrb[0].mxu0
    %3498 = vmatprep.mubr.f32.mxu0 0.0
    %3499 = vmatmul.mubr.f32.gmra.mrb[0].mxu0 %v3390
    %v3500 = vpop.f32.mrb[0].mxu0
    %v3501 = vadd.f32 0.0, %v3500
    %v3502 = vpop.f32.mrb[0].mxu0
    %3503 = vmatprep.mubr.f32.mxu0 0.0
    %3504 = vmatmul.mubr.f32.gmra.mrb[0].mxu0 %v3391
    %v3505 = vpop.f32.mrb[0].mxu0
    %v3506 = vadd.f32 0.0, %v3505
    %v3507 = vpop.f32.mrb[0].mxu0
    %3508 = vmatprep.mubr.f32.mxu0 0.0
    %3509 = vmatmul.mubr.f32.gmra.mrb[0].mxu0 %v3392
    %v3510 = vpop.f32.mrb[0].mxu0
    %v3511 = vadd.f32 0.0, %v3510
    %v3512 = vpop.f32.mrb[0].mxu0
    %3513 = vmatprep.mubr.f32.mxu0 0.0
    %3514 = vmatmul.mubr.f32.gmra.mrb[0].mxu0 %v3393
    %v3515 = vpop.f32.mrb[0].mxu0
    %v3516 = vadd.f32 0.0, %v3515
    %v3517 = vpop.f32.mrb[0].mxu0
    %3518 = vmatprep.mubr.f32.mxu0 0.0
    %3519 = vmatmul.mubr.f32.gmra.mrb[0].mxu0 %v3394
    %v3520 = vpop.f32.mrb[0].mxu0
    %v3521 = vadd.f32 0.0, %v3520
    %v3522 = vpop.f32.mrb[0].mxu0
    %3523 = vmatprep.mubr.f32.mxu0 0.0
    %3524 = vmatmul.mubr.f32.gmra.mrb[0].mxu0 %v3395
    %v3525 = vpop.f32.mrb[0].mxu0
    %v3526 = vadd.f32 0.0, %v3525
    %v3527 = vpop.f32.mrb[0].mxu0
    %3528 = vmatprep.mubr.f32.mxu0 0.0
    %3529 = vmatmul.mubr.f32.gmra.mrb[0].mxu0 %v3396
    %v3530 = vpop.f32.mrb[0].mxu0
    %v3531 = vadd.f32 0.0, %v3530
    %v3532 = vpop.f32.mrb[0].mxu0
    %3533 = vmatprep.mubr.f32.mxu0 0.0
    %3534 = vmatmul.mubr.f32.gmra.mrb[0].mxu0 %v3397
    %v3535 = vpop.f32.mrb[0].mxu0
    %v3536 = vadd.f32 0.0, %v3535
    %v3537 = vpop.f32.mrb[0].mxu0
    %3538 = vmatprep.mubr.f32.mxu0 0.0
    %3539 = vmatmul.mubr.f32.gmra.mrb[0].mxu0 %v3398
    %v3540 = vpop.f32.mrb[0].mxu0
    %v3541 = vadd.f32 0.0, %v3540
    %v3542 = vpop.f32.mrb[0].mxu0
    %3543 = vdwg.mxu0
    %3544 = vmatprep.subr.mxu0 0.0
    %3545 = vmatpush1.msra.mxu0 %v3466
    %3546 = vmatprep.subr.mxu0 0.0
    %3547 = vmatpush1.msra.mxu0 %v3471
    %3548 = vmatprep.subr.mxu0 0.0
    %3549 = vmatpush1.msra.mxu0 %v3476
    %3550 = vmatprep.subr.mxu0 0.0
    %3551 = vmatpush1.msra.mxu0 %v3481
    %3552 = vmatprep.subr.mxu0 0.0
    %3553 = vmatpush1.msra.mxu0 %v3486
    %3554 = vmatprep.subr.mxu0 0.0
    %3555 = vmatpush1.msra.mxu0 %v3491
    %3556 = vmatprep.subr.mxu0 0.0
    %3557 = vmatpush1.msra.mxu0 %v3496
    %3558 = vmatprep.subr.mxu0 0.0
    %3559 = vmatpush1.msra.mxu0 %v3501
    %3560 = vmatprep.subr.mxu0 0.0
    %3561 = vmatpush1.msra.mxu0 %v3506
    %3562 = vmatprep.subr.mxu0 0.0
    %3563 = vmatpush1.msra.mxu0 %v3511
    %3564 = vmatprep.subr.mxu0 0.0
    %3565 = vmatpush1.msra.mxu0 %v3516
    %3566 = vmatprep.subr.mxu0 0.0
    %3567 = vmatpush1.msra.mxu0 %v3521
    %3568 = vmatprep.subr.mxu0 0.0
    %3569 = vmatpush1.msra.mxu0 %v3526
    %3570 = vmatprep.subr.mxu0 0.0
    %3571 = vmatpush1.msra.mxu0 %v3531
    %3572 = vmatprep.subr.mxu0 0.0
    %3573 = vmatpush1.msra.mxu0 %v3536
    %3574 = vmatprep.subr.mxu0 0.0
    %3575 = vmatpush1.msra.mxu0 %v3541
    %3576 = vmatprep.subr.mxu0 0.0
    %3577 = vmatpush1.msra.mxu0 0.0
    %3578 = vmatprep.subr.mxu0 0.0
    %3579 = vmatpush1.msra.mxu0 0.0
    %3580 = vmatprep.subr.mxu0 0.0
    %3581 = vmatpush1.msra.mxu0 0.0
    %3582 = vmatprep.subr.mxu0 0.0
    %3583 = vmatpush1.msra.mxu0 0.0
    %3584 = vmatprep.subr.mxu0 0.0
    %3585 = vmatpush1.msra.mxu0 0.0
    %3586 = vmatprep.subr.mxu0 0.0
    %3587 = vmatpush1.msra.mxu0 0.0
    %3588 = vmatprep.subr.mxu0 0.0
    %3589 = vmatpush1.msra.mxu0 0.0
    %3590 = vmatprep.subr.mxu0 0.0
    %3591 = vmatpush1.msra.mxu0 0.0
    %3592 = vmatprep.subr.mxu0 0.0
    %3593 = vmatpush1.msra.mxu0 0.0
    %3594 = vmatprep.subr.mxu0 0.0
    %3595 = vmatpush1.msra.mxu0 0.0
    %3596 = vmatprep.subr.mxu0 0.0
    %3597 = vmatpush1.msra.mxu0 0.0
    %3598 = vmatprep.subr.mxu0 0.0
    %3599 = vmatpush1.msra.mxu0 0.0
    %3600 = vmatprep.subr.mxu0 0.0
    %3601 = vmatpush1.msra.mxu0 0.0
    %3602 = vmatprep.subr.mxu0 0.0
    %3603 = vmatpush1.msra.mxu0 0.0
    %3604 = vmatprep.subr.mxu0 0.0
    %3605 = vmatpush1.msra.mxu0 0.0
    %3606 = vmatprep.subr.mxu0 0.0
    %3607 = vmatpush1.msra.mxu0 0.0
    %3608 = vmatprep.mubr.f32.mxu0 0.0
    %3609 = vmatmul.mubr.f32.gmra.mrb[0].mxu0 %v3466
    %v3610 = vpop.f32.mrb[0].mxu0
    %v3611 = vadd.f32 0.0, %v3610
    %v3612 = vpop.f32.mrb[0].mxu0
    %3613 = vmatprep.mubr.f32.mxu0 0.0
    %3614 = vmatmul.mubr.f32.gmra.mrb[0].mxu0 %v3471
    %v3615 = vpop.f32.mrb[0].mxu0
    %v3616 = vadd.f32 0.0, %v3615
    %v3617 = vpop.f32.mrb[0].mxu0
    %3618 = vmatprep.mubr.f32.mxu0 0.0
    %3619 = vmatmul.mubr.f32.gmra.mrb[0].mxu0 %v3476
    %v3620 = vpop.f32.mrb[0].mxu0
    %v3621 = vadd.f32 0.0, %v3620
    %v3622 = vpop.f32.mrb[0].mxu0
    %3623 = vmatprep.mubr.f32.mxu0 0.0
    %3624 = vmatmul.mubr.f32.gmra.mrb[0].mxu0 %v3481
    %v3625 = vpop.f32.mrb[0].mxu0
    %v3626 = vadd.f32 0.0, %v3625
    %v3627 = vpop.f32.mrb[0].mxu0
    %3628 = vmatprep.mubr.f32.mxu0 0.0
    %3629 = vmatmul.mubr.f32.gmra.mrb[0].mxu0 %v3486
    %v3630 = vpop.f32.mrb[0].mxu0
    %v3631 = vadd.f32 0.0, %v3630
    %v3632 = vpop.f32.mrb[0].mxu0
    %3633 = vmatprep.mubr.f32.mxu0 0.0
    %3634 = vmatmul.mubr.f32.gmra.mrb[0].mxu0 %v3491
    %v3635 = vpop.f32.mrb[0].mxu0
    %v3636 = vadd.f32 0.0, %v3635
    %v3637 = vpop.f32.mrb[0].mxu0
    %3638 = vmatprep.mubr.f32.mxu0 0.0
    %3639 = vmatmul.mubr.f32.gmra.mrb[0].mxu0 %v3496
    %v3640 = vpop.f32.mrb[0].mxu0
    %v3641 = vadd.f32 0.0, %v3640
    %v3642 = vpop.f32.mrb[0].mxu0
    %3643 = vmatprep.mubr.f32.mxu0 0.0
    %3644 = vmatmul.mubr.f32.gmra.mrb[0].mxu0 %v3501
    %v3645 = vpop.f32.mrb[0].mxu0
    %v3646 = vadd.f32 0.0, %v3645
    %v3647 = vpop.f32.mrb[0].mxu0
    %3648 = vmatprep.mubr.f32.mxu0 0.0
    %3649 = vmatmul.mubr.f32.gmra.mrb[0].mxu0 %v3506
    %v3650 = vpop.f32.mrb[0].mxu0
    %v3651 = vadd.f32 0.0, %v3650
    %v3652 = vpop.f32.mrb[0].mxu0
    %3653 = vmatprep.mubr.f32.mxu0 0.0
    %3654 = vmatmul.mubr.f32.gmra.mrb[0].mxu0 %v3511
    %v3655 = vpop.f32.mrb[0].mxu0
    %v3656 = vadd.f32 0.0, %v3655
    %v3657 = vpop.f32.mrb[0].mxu0
    %3658 = vmatprep.mubr.f32.mxu0 0.0
    %3659 = vmatmul.mubr.f32.gmra.mrb[0].mxu0 %v3516
    %v3660 = vpop.f32.mrb[0].mxu0
    %v3661 = vadd.f32 0.0, %v3660
    %v3662 = vpop.f32.mrb[0].mxu0
    %3663 = vmatprep.mubr.f32.mxu0 0.0
    %3664 = vmatmul.mubr.f32.gmra.mrb[0].mxu0 %v3521
    %v3665 = vpop.f32.mrb[0].mxu0
    %v3666 = vadd.f32 0.0, %v3665
    %v3667 = vpop.f32.mrb[0].mxu0
    %3668 = vmatprep.mubr.f32.mxu0 0.0
    %3669 = vmatmul.mubr.f32.gmra.mrb[0].mxu0 %v3526
    %v3670 = vpop.f32.mrb[0].mxu0
    %v3671 = vadd.f32 0.0, %v3670
    %v3672 = vpop.f32.mrb[0].mxu0
    %3673 = vmatprep.mubr.f32.mxu0 0.0
    %3674 = vmatmul.mubr.f32.gmra.mrb[0].mxu0 %v3531
    %v3675 = vpop.f32.mrb[0].mxu0
    %v3676 = vadd.f32 0.0, %v3675
    %v3677 = vpop.f32.mrb[0].mxu0
    %3678 = vmatprep.mubr.f32.mxu0 0.0
    %3679 = vmatmul.mubr.f32.gmra.mrb[0].mxu0 %v3536
    %v3680 = vpop.f32.mrb[0].mxu0
    %v3681 = vadd.f32 0.0, %v3680
    %v3682 = vpop.f32.mrb[0].mxu0
    %3683 = vmatprep.mubr.f32.mxu0 0.0
    %3684 = vmatmul.mubr.f32.gmra.mrb[0].mxu0 %v3541
    %v3685 = vpop.f32.mrb[0].mxu0
    %v3686 = vadd.f32 0.0, %v3685
    %v3687 = vpop.f32.mrb[0].mxu0
    %3688 = vdwg.mxu0
    %3689 = vmatprep.subr.mxu0 0.0
    %3690 = vmatpush1.msra.mxu0 %v3611
    %3691 = vmatprep.subr.mxu0 0.0
    %3692 = vmatpush1.msra.mxu0 %v3616
    %3693 = vmatprep.subr.mxu0 0.0
    %3694 = vmatpush1.msra.mxu0 %v3621
    %3695 = vmatprep.subr.mxu0 0.0
    %3696 = vmatpush1.msra.mxu0 %v3626
    %3697 = vmatprep.subr.mxu0 0.0
    %3698 = vmatpush1.msra.mxu0 %v3631
    %3699 = vmatprep.subr.mxu0 0.0
    %3700 = vmatpush1.msra.mxu0 %v3636
    %3701 = vmatprep.subr.mxu0 0.0
    %3702 = vmatpush1.msra.mxu0 %v3641
    %3703 = vmatprep.subr.mxu0 0.0
    %3704 = vmatpush1.msra.mxu0 %v3646
    %3705 = vmatprep.subr.mxu0 0.0
    %3706 = vmatpush1.msra.mxu0 %v3651
    %3707 = vmatprep.subr.mxu0 0.0
    %3708 = vmatpush1.msra.mxu0 %v3656
    %3709 = vmatprep.subr.mxu0 0.0
    %3710 = vmatpush1.msra.mxu0 %v3661
    %3711 = vmatprep.subr.mxu0 0.0
    %3712 = vmatpush1.msra.mxu0 %v3666
    %3713 = vmatprep.subr.mxu0 0.0
    %3714 = vmatpush1.msra.mxu0 %v3671
    %3715 = vmatprep.subr.mxu0 0.0
    %3716 = vmatpush1.msra.mxu0 %v3676
    %3717 = vmatprep.subr.mxu0 0.0
    %3718 = vmatpush1.msra.mxu0 %v3681
    %3719 = vmatprep.subr.mxu0 0.0
    %3720 = vmatpush1.msra.mxu0 %v3686
    %3721 = vmatprep.subr.mxu0 0.0
    %3722 = vmatpush1.msra.mxu0 0.0
    %3723 = vmatprep.subr.mxu0 0.0
    %3724 = vmatpush1.msra.mxu0 0.0
    %3725 = vmatprep.subr.mxu0 0.0
    %3726 = vmatpush1.msra.mxu0 0.0
    %3727 = vmatprep.subr.mxu0 0.0
    %3728 = vmatpush1.msra.mxu0 0.0
    %3729 = vmatprep.subr.mxu0 0.0
    %3730 = vmatpush1.msra.mxu0 0.0
    %3731 = vmatprep.subr.mxu0 0.0
    %3732 = vmatpush1.msra.mxu0 0.0
    %3733 = vmatprep.subr.mxu0 0.0
    %3734 = vmatpush1.msra.mxu0 0.0
    %3735 = vmatprep.subr.mxu0 0.0
    %3736 = vmatpush1.msra.mxu0 0.0
    %3737 = vmatprep.subr.mxu0 0.0
    %3738 = vmatpush1.msra.mxu0 0.0
    %3739 = vmatprep.subr.mxu0 0.0
    %3740 = vmatpush1.msra.mxu0 0.0
    %3741 = vmatprep.subr.mxu0 0.0
    %3742 = vmatpush1.msra.mxu0 0.0
    %3743 = vmatprep.subr.mxu0 0.0
    %3744 = vmatpush1.msra.mxu0 0.0
    %3745 = vmatprep.subr.mxu0 0.0
    %3746 = vmatpush1.msra.mxu0 0.0
    %3747 = vmatprep.subr.mxu0 0.0
    %3748 = vmatpush1.msra.mxu0 0.0
    %3749 = vmatprep.subr.mxu0 0.0
    %3750 = vmatpush1.msra.mxu0 0.0
    %3751 = vmatprep.subr.mxu0 0.0
    %3752 = vmatpush1.msra.mxu0 0.0
    %3753 = vmatprep.mubr.f32.mxu0 0.0
    %3754 = vmatmul.mubr.f32.gmra.mrb[0].mxu0 %v3611
    %v3755 = vpop.f32.mrb[0].mxu0
    %v3756 = vadd.f32 0.0, %v3755
    %v3757 = vpop.f32.mrb[0].mxu0
    %3758 = vmatprep.mubr.f32.mxu0 0.0
    %3759 = vmatmul.mubr.f32.gmra.mrb[0].mxu0 %v3616
    %v3760 = vpop.f32.mrb[0].mxu0
    %v3761 = vadd.f32 0.0, %v3760
    %v3762 = vpop.f32.mrb[0].mxu0
    %3763 = vmatprep.mubr.f32.mxu0 0.0
    %3764 = vmatmul.mubr.f32.gmra.mrb[0].mxu0 %v3621
    %v3765 = vpop.f32.mrb[0].mxu0
    %v3766 = vadd.f32 0.0, %v3765
    %v3767 = vpop.f32.mrb[0].mxu0
    %3768 = vmatprep.mubr.f32.mxu0 0.0
    %3769 = vmatmul.mubr.f32.gmra.mrb[0].mxu0 %v3626
    %v3770 = vpop.f32.mrb[0].mxu0
    %v3771 = vadd.f32 0.0, %v3770
    %v3772 = vpop.f32.mrb[0].mxu0
    %3773 = vmatprep.mubr.f32.mxu0 0.0
    %3774 = vmatmul.mubr.f32.gmra.mrb[0].mxu0 %v3631
    %v3775 = vpop.f32.mrb[0].mxu0
    %v3776 = vadd.f32 0.0, %v3775
    %v3777 = vpop.f32.mrb[0].mxu0
    %3778 = vmatprep.mubr.f32.mxu0 0.0
    %3779 = vmatmul.mubr.f32.gmra.mrb[0].mxu0 %v3636
    %v3780 = vpop.f32.mrb[0].mxu0
    %v3781 = vadd.f32 0.0, %v3780
    %v3782 = vpop.f32.mrb[0].mxu0
    %3783 = vmatprep.mubr.f32.mxu0 0.0
    %3784 = vmatmul.mubr.f32.gmra.mrb[0].mxu0 %v3641
    %v3785 = vpop.f32.mrb[0].mxu0
    %v3786 = vadd.f32 0.0, %v3785
    %v3787 = vpop.f32.mrb[0].mxu0
    %3788 = vmatprep.mubr.f32.mxu0 0.0
    %3789 = vmatmul.mubr.f32.gmra.mrb[0].mxu0 %v3646
    %v3790 = vpop.f32.mrb[0].mxu0
    %v3791 = vadd.f32 0.0, %v3790
    %v3792 = vpop.f32.mrb[0].mxu0
    %3793 = vmatprep.mubr.f32.mxu0 0.0
    %3794 = vmatmul.mubr.f32.gmra.mrb[0].mxu0 %v3651
    %v3795 = vpop.f32.mrb[0].mxu0
    %v3796 = vadd.f32 0.0, %v3795
    %v3797 = vpop.f32.mrb[0].mxu0
    %3798 = vmatprep.mubr.f32.mxu0 0.0
    %3799 = vmatmul.mubr.f32.gmra.mrb[0].mxu0 %v3656
    %v3800 = vpop.f32.mrb[0].mxu0
    %v3801 = vadd.f32 0.0, %v3800
    %v3802 = vpop.f32.mrb[0].mxu0
    %3803 = vmatprep.mubr.f32.mxu0 0.0
    %3804 = vmatmul.mubr.f32.gmra.mrb[0].mxu0 %v3661
    %v3805 = vpop.f32.mrb[0].mxu0
    %v3806 = vadd.f32 0.0, %v3805
    %v3807 = vpop.f32.mrb[0].mxu0
    %3808 = vmatprep.mubr.f32.mxu0 0.0
    %3809 = vmatmul.mubr.f32.gmra.mrb[0].mxu0 %v3666
    %v3810 = vpop.f32.mrb[0].mxu0
    %v3811 = vadd.f32 0.0, %v3810
    %v3812 = vpop.f32.mrb[0].mxu0
    %3813 = vmatprep.mubr.f32.mxu0 0.0
    %3814 = vmatmul.mubr.f32.gmra.mrb[0].mxu0 %v3671
    %v3815 = vpop.f32.mrb[0].mxu0
    %v3816 = vadd.f32 0.0, %v3815
    %v3817 = vpop.f32.mrb[0].mxu0
    %3818 = vmatprep.mubr.f32.mxu0 0.0
    %3819 = vmatmul.mubr.f32.gmra.mrb[0].mxu0 %v3676
    %v3820 = vpop.f32.mrb[0].mxu0
    %v3821 = vadd.f32 0.0, %v3820
    %v3822 = vpop.f32.mrb[0].mxu0
    %3823 = vmatprep.mubr.f32.mxu0 0.0
    %3824 = vmatmul.mubr.f32.gmra.mrb[0].mxu0 %v3681
    %v3825 = vpop.f32.mrb[0].mxu0
    %v3826 = vadd.f32 0.0, %v3825
    %v3827 = vpop.f32.mrb[0].mxu0
    %3828 = vmatprep.mubr.f32.mxu0 0.0
    %3829 = vmatmul.mubr.f32.gmra.mrb[0].mxu0 %v3686
    %v3830 = vpop.f32.mrb[0].mxu0
    %v3831 = vadd.f32 0.0, %v3830
    %v3832 = vpop.f32.mrb[0].mxu0
    %3833 = vdwg.mxu0
    %3834 = vmatprep.subr.mxu0 0.0
    %3835 = vmatpush1.msra.mxu0 %v3756
    %3836 = vmatprep.subr.mxu0 0.0
    %3837 = vmatpush1.msra.mxu0 %v3761
    %3838 = vmatprep.subr.mxu0 0.0
    %3839 = vmatpush1.msra.mxu0 %v3766
    %3840 = vmatprep.subr.mxu0 0.0
    %3841 = vmatpush1.msra.mxu0 %v3771
    %3842 = vmatprep.subr.mxu0 0.0
    %3843 = vmatpush1.msra.mxu0 %v3776
    %3844 = vmatprep.subr.mxu0 0.0
    %3845 = vmatpush1.msra.mxu0 %v3781
    %3846 = vmatprep.subr.mxu0 0.0
    %3847 = vmatpush1.msra.mxu0 %v3786
    %3848 = vmatprep.subr.mxu0 0.0
    %3849 = vmatpush1.msra.mxu0 %v3791
    %3850 = vmatprep.subr.mxu0 0.0
    %3851 = vmatpush1.msra.mxu0 %v3796
    %3852 = vmatprep.subr.mxu0 0.0
    %3853 = vmatpush1.msra.mxu0 %v3801
    %3854 = vmatprep.subr.mxu0 0.0
    %3855 = vmatpush1.msra.mxu0 %v3806
    %3856 = vmatprep.subr.mxu0 0.0
    %3857 = vmatpush1.msra.mxu0 %v3811
    %3858 = vmatprep.subr.mxu0 0.0
    %3859 = vmatpush1.msra.mxu0 %v3816
    %3860 = vmatprep.subr.mxu0 0.0
    %3861 = vmatpush1.msra.mxu0 %v3821
    %3862 = vmatprep.subr.mxu0 0.0
    %3863 = vmatpush1.msra.mxu0 %v3826
    %3864 = vmatprep.subr.mxu0 0.0
    %3865 = vmatpush1.msra.mxu0 %v3831
    %3866 = vmatprep.subr.mxu0 0.0
    %3867 = vmatpush1.msra.mxu0 0.0
    %3868 = vmatprep.subr.mxu0 0.0
    %3869 = vmatpush1.msra.mxu0 0.0
    %3870 = vmatprep.subr.mxu0 0.0
    %3871 = vmatpush1.msra.mxu0 0.0
    %3872 = vmatprep.subr.mxu0 0.0
    %3873 = vmatpush1.msra.mxu0 0.0
    %3874 = vmatprep.subr.mxu0 0.0
    %3875 = vmatpush1.msra.mxu0 0.0
    %3876 = vmatprep.subr.mxu0 0.0
    %3877 = vmatpush1.msra.mxu0 0.0
    %3878 = vmatprep.subr.mxu0 0.0
    %3879 = vmatpush1.msra.mxu0 0.0
    %3880 = vmatprep.subr.mxu0 0.0
    %3881 = vmatpush1.msra.mxu0 0.0
    %3882 = vmatprep.subr.mxu0 0.0
    %3883 = vmatpush1.msra.mxu0 0.0
    %3884 = vmatprep.subr.mxu0 0.0
    %3885 = vmatpush1.msra.mxu0 0.0
    %3886 = vmatprep.subr.mxu0 0.0
    %3887 = vmatpush1.msra.mxu0 0.0
    %3888 = vmatprep.subr.mxu0 0.0
    %3889 = vmatpush1.msra.mxu0 0.0
    %3890 = vmatprep.subr.mxu0 0.0
    %3891 = vmatpush1.msra.mxu0 0.0
    %3892 = vmatprep.subr.mxu0 0.0
    %3893 = vmatpush1.msra.mxu0 0.0
    %3894 = vmatprep.subr.mxu0 0.0
    %3895 = vmatpush1.msra.mxu0 0.0
    %3896 = vmatprep.subr.mxu0 0.0
    %3897 = vmatpush1.msra.mxu0 0.0
    %3898 = vmatprep.mubr.f32.mxu0 0.0
    %3899 = vmatmul.mubr.f32.gmra.mrb[0].mxu0 %v3756
    %v3900 = vpop.f32.mrb[0].mxu0
    %v3901 = vadd.f32 0.0, %v3900
    %v3902 = vpop.f32.mrb[0].mxu0
    %3903 = vmatprep.mubr.f32.mxu0 0.0
    %3904 = vmatmul.mubr.f32.gmra.mrb[0].mxu0 %v3761
    %v3905 = vpop.f32.mrb[0].mxu0
    %v3906 = vadd.f32 0.0, %v3905
    %v3907 = vpop.f32.mrb[0].mxu0
    %3908 = vmatprep.mubr.f32.mxu0 0.0
    %3909 = vmatmul.mubr.f32.gmra.mrb[0].mxu0 %v3766
    %v3910 = vpop.f32.mrb[0].mxu0
    %v3911 = vadd.f32 0.0, %v3910
    %v3912 = vpop.f32.mrb[0].mxu0
    %3913 = vmatprep.mubr.f32.mxu0 0.0
    %3914 = vmatmul.mubr.f32.gmra.mrb[0].mxu0 %v3771
    %v3915 = vpop.f32.mrb[0].mxu0
    %v3916 = vadd.f32 0.0, %v3915
    %v3917 = vpop.f32.mrb[0].mxu0
    %3918 = vmatprep.mubr.f32.mxu0 0.0
    %3919 = vmatmul.mubr.f32.gmra.mrb[0].mxu0 %v3776
    %v3920 = vpop.f32.mrb[0].mxu0
    %v3921 = vadd.f32 0.0, %v3920
    %v3922 = vpop.f32.mrb[0].mxu0
    %3923 = vmatprep.mubr.f32.mxu0 0.0
    %3924 = vmatmul.mubr.f32.gmra.mrb[0].mxu0 %v3781
    %v3925 = vpop.f32.mrb[0].mxu0
    %v3926 = vadd.f32 0.0, %v3925
    %v3927 = vpop.f32.mrb[0].mxu0
    %3928 = vmatprep.mubr.f32.mxu0 0.0
    %3929 = vmatmul.mubr.f32.gmra.mrb[0].mxu0 %v3786
    %v3930 = vpop.f32.mrb[0].mxu0
    %v3931 = vadd.f32 0.0, %v3930
    %v3932 = vpop.f32.mrb[0].mxu0
    %3933 = vmatprep.mubr.f32.mxu0 0.0
    %3934 = vmatmul.mubr.f32.gmra.mrb[0].mxu0 %v3791
    %v3935 = vpop.f32.mrb[0].mxu0
    %v3936 = vadd.f32 0.0, %v3935
    %v3937 = vpop.f32.mrb[0].mxu0
    %3938 = vmatprep.mubr.f32.mxu0 0.0
    %3939 = vmatmul.mubr.f32.gmra.mrb[0].mxu0 %v3796
    %v3940 = vpop.f32.mrb[0].mxu0
    %v3941 = vadd.f32 0.0, %v3940
    %v3942 = vpop.f32.mrb[0].mxu0
    %3943 = vmatprep.mubr.f32.mxu0 0.0
    %3944 = vmatmul.mubr.f32.gmra.mrb[0].mxu0 %v3801
    %v3945 = vpop.f32.mrb[0].mxu0
    %v3946 = vadd.f32 0.0, %v3945
    %v3947 = vpop.f32.mrb[0].mxu0
    %3948 = vmatprep.mubr.f32.mxu0 0.0
    %3949 = vmatmul.mubr.f32.gmra.mrb[0].mxu0 %v3806
    %v3950 = vpop.f32.mrb[0].mxu0
    %v3951 = vadd.f32 0.0, %v3950
    %v3952 = vpop.f32.mrb[0].mxu0
    %3953 = vmatprep.mubr.f32.mxu0 0.0
    %3954 = vmatmul.mubr.f32.gmra.mrb[0].mxu0 %v3811
    %v3955 = vpop.f32.mrb[0].mxu0
    %v3956 = vadd.f32 0.0, %v3955
    %v3957 = vpop.f32.mrb[0].mxu0
    %3958 = vmatprep.mubr.f32.mxu0 0.0
    %3959 = vmatmul.mubr.f32.gmra.mrb[0].mxu0 %v3816
    %v3960 = vpop.f32.mrb[0].mxu0
    %v3961 = vadd.f32 0.0, %v3960
    %v3962 = vpop.f32.mrb[0].mxu0
    %3963 = vmatprep.mubr.f32.mxu0 0.0
    %3964 = vmatmul.mubr.f32.gmra.mrb[0].mxu0 %v3821
    %v3965 = vpop.f32.mrb[0].mxu0
    %v3966 = vadd.f32 0.0, %v3965
    %v3967 = vpop.f32.mrb[0].mxu0
    %3968 = vmatprep.mubr.f32.mxu0 0.0
    %3969 = vmatmul.mubr.f32.gmra.mrb[0].mxu0 %v3826
    %v3970 = vpop.f32.mrb[0].mxu0
    %v3971 = vadd.f32 0.0, %v3970
    %v3972 = vpop.f32.mrb[0].mxu0
    %3973 = vmatprep.mubr.f32.mxu0 0.0
    %3974 = vmatmul.mubr.f32.gmra.mrb[0].mxu0 %v3831
    %v3975 = vpop.f32.mrb[0].mxu0
    %v3976 = vadd.f32 0.0, %v3975
    %v3977 = vpop.f32.mrb[0].mxu0
    %3978 = vdwg.mxu0
    %3979 = vmatprep.subr.mxu0 0.0
    %3980 = vmatpush1.msra.mxu0 %v3901
    %3981 = vmatprep.subr.mxu0 0.0
    %3982 = vmatpush1.msra.mxu0 %v3906
    %3983 = vmatprep.subr.mxu0 0.0
    %3984 = vmatpush1.msra.mxu0 %v3911
    %3985 = vmatprep.subr.mxu0 0.0
    %3986 = vmatpush1.msra.mxu0 %v3916
    %3987 = vmatprep.subr.mxu0 0.0
    %3988 = vmatpush1.msra.mxu0 %v3921
    %3989 = vmatprep.subr.mxu0 0.0
    %3990 = vmatpush1.msra.mxu0 %v3926
    %3991 = vmatprep.subr.mxu0 0.0
    %3992 = vmatpush1.msra.mxu0 %v3931
    %3993 = vmatprep.subr.mxu0 0.0
    %3994 = vmatpush1.msra.mxu0 %v3936
    %3995 = vmatprep.subr.mxu0 0.0
    %3996 = vmatpush1.msra.mxu0 %v3941
    %3997 = vmatprep.subr.mxu0 0.0
    %3998 = vmatpush1.msra.mxu0 %v3946
    %3999 = vmatprep.subr.mxu0 0.0
    %4000 = vmatpush1.msra.mxu0 %v3951
    %4001 = vmatprep.subr.mxu0 0.0
    %4002 = vmatpush1.msra.mxu0 %v3956
    %4003 = vmatprep.subr.mxu0 0.0
    %4004 = vmatpush1.msra.mxu0 %v3961
    %4005 = vmatprep.subr.mxu0 0.0
    %4006 = vmatpush1.msra.mxu0 %v3966
    %4007 = vmatprep.subr.mxu0 0.0
    %4008 = vmatpush1.msra.mxu0 %v3971
    %4009 = vmatprep.subr.mxu0 0.0
    %4010 = vmatpush1.msra.mxu0 %v3976
    %4011 = vmatprep.subr.mxu0 0.0
    %4012 = vmatpush1.msra.mxu0 0.0
    %4013 = vmatprep.subr.mxu0 0.0
    %4014 = vmatpush1.msra.mxu0 0.0
    %4015 = vmatprep.subr.mxu0 0.0
    %4016 = vmatpush1.msra.mxu0 0.0
    %4017 = vmatprep.subr.mxu0 0.0
    %4018 = vmatpush1.msra.mxu0 0.0
    %4019 = vmatprep.subr.mxu0 0.0
    %4020 = vmatpush1.msra.mxu0 0.0
    %4021 = vmatprep.subr.mxu0 0.0
    %4022 = vmatpush1.msra.mxu0 0.0
    %4023 = vmatprep.subr.mxu0 0.0
    %4024 = vmatpush1.msra.mxu0 0.0
    %4025 = vmatprep.subr.mxu0 0.0
    %4026 = vmatpush1.msra.mxu0 0.0
    %4027 = vmatprep.subr.mxu0 0.0
    %4028 = vmatpush1.msra.mxu0 0.0
    %4029 = vmatprep.subr.mxu0 0.0
    %4030 = vmatpush1.msra.mxu0 0.0
    %4031 = vmatprep.subr.mxu0 0.0
    %4032 = vmatpush1.msra.mxu0 0.0
    %4033 = vmatprep.subr.mxu0 0.0
    %4034 = vmatpush1.msra.mxu0 0.0
    %4035 = vmatprep.subr.mxu0 0.0
    %4036 = vmatpush1.msra.mxu0 0.0
    %4037 = vmatprep.subr.mxu0 0.0
    %4038 = vmatpush1.msra.mxu0 0.0
    %4039 = vmatprep.subr.mxu0 0.0
    %4040 = vmatpush1.msra.mxu0 0.0
    %4041 = vmatprep.subr.mxu0 0.0
    %4042 = vmatpush1.msra.mxu0 0.0
    %4043 = vmatprep.mubr.f32.mxu0 0.0
    %4044 = vmatmul.mubr.f32.gmra.mrb[0].mxu0 %v3611
    %v4045 = vpop.f32.mrb[0].mxu0
    %v4046 = vadd.f32 0.0, %v4045
    %v4047 = vpop.f32.mrb[0].mxu0
    %4048 = vmatprep.mubr.f32.mxu0 0.0
    %4049 = vmatmul.mubr.f32.gmra.mrb[0].mxu0 %v3616
    %v4050 = vpop.f32.mrb[0].mxu0
    %v4051 = vadd.f32 0.0, %v4050
    %v4052 = vpop.f32.mrb[0].mxu0
    %4053 = vmatprep.mubr.f32.mxu0 0.0
    %4054 = vmatmul.mubr.f32.gmra.mrb[0].mxu0 %v3621
    %v4055 = vpop.f32.mrb[0].mxu0
    %v4056 = vadd.f32 0.0, %v4055
    %v4057 = vpop.f32.mrb[0].mxu0
    %4058 = vmatprep.mubr.f32.mxu0 0.0
    %4059 = vmatmul.mubr.f32.gmra.mrb[0].mxu0 %v3626
    %v4060 = vpop.f32.mrb[0].mxu0
    %v4061 = vadd.f32 0.0, %v4060
    %v4062 = vpop.f32.mrb[0].mxu0
    %4063 = vmatprep.mubr.f32.mxu0 0.0
    %4064 = vmatmul.mubr.f32.gmra.mrb[0].mxu0 %v3631
    %v4065 = vpop.f32.mrb[0].mxu0
    %v4066 = vadd.f32 0.0, %v4065
    %v4067 = vpop.f32.mrb[0].mxu0
    %4068 = vmatprep.mubr.f32.mxu0 0.0
    %4069 = vmatmul.mubr.f32.gmra.mrb[0].mxu0 %v3636
    %v4070 = vpop.f32.mrb[0].mxu0
    %v4071 = vadd.f32 0.0, %v4070
    %v4072 = vpop.f32.mrb[0].mxu0
    %4073 = vmatprep.mubr.f32.mxu0 0.0
    %4074 = vmatmul.mubr.f32.gmra.mrb[0].mxu0 %v3641
    %v4075 = vpop.f32.mrb[0].mxu0
    %v4076 = vadd.f32 0.0, %v4075
    %v4077 = vpop.f32.mrb[0].mxu0
    %4078 = vmatprep.mubr.f32.mxu0 0.0
    %4079 = vmatmul.mubr.f32.gmra.mrb[0].mxu0 %v3646
    %v4080 = vpop.f32.mrb[0].mxu0
    %v4081 = vadd.f32 0.0, %v4080
    %v4082 = vpop.f32.mrb[0].mxu0
    %4083 = vmatprep.mubr.f32.mxu0 0.0
    %4084 = vmatmul.mubr.f32.gmra.mrb[0].mxu0 %v3651
    %v4085 = vpop.f32.mrb[0].mxu0
    %v4086 = vadd.f32 0.0, %v4085
    %v4087 = vpop.f32.mrb[0].mxu0
    %4088 = vmatprep.mubr.f32.mxu0 0.0
    %4089 = vmatmul.mubr.f32.gmra.mrb[0].mxu0 %v3656
    %v4090 = vpop.f32.mrb[0].mxu0
    %v4091 = vadd.f32 0.0, %v4090
    %v4092 = vpop.f32.mrb[0].mxu0
    %4093 = vmatprep.mubr.f32.mxu0 0.0
    %4094 = vmatmul.mubr.f32.gmra.mrb[0].mxu0 %v3661
    %v4095 = vpop.f32.mrb[0].mxu0
    %v4096 = vadd.f32 0.0, %v4095
    %v4097 = vpop.f32.mrb[0].mxu0
    %4098 = vmatprep.mubr.f32.mxu0 0.0
    %4099 = vmatmul.mubr.f32.gmra.mrb[0].mxu0 %v3666
    %v4100 = vpop.f32.mrb[0].mxu0
    %v4101 = vadd.f32 0.0, %v4100
    %v4102 = vpop.f32.mrb[0].mxu0
    %4103 = vmatprep.mubr.f32.mxu0 0.0
    %4104 = vmatmul.mubr.f32.gmra.mrb[0].mxu0 %v3671
    %v4105 = vpop.f32.mrb[0].mxu0
    %v4106 = vadd.f32 0.0, %v4105
    %v4107 = vpop.f32.mrb[0].mxu0
    %4108 = vmatprep.mubr.f32.mxu0 0.0
    %4109 = vmatmul.mubr.f32.gmra.mrb[0].mxu0 %v3676
    %v4110 = vpop.f32.mrb[0].mxu0
    %v4111 = vadd.f32 0.0, %v4110
    %v4112 = vpop.f32.mrb[0].mxu0
    %4113 = vmatprep.mubr.f32.mxu0 0.0
    %4114 = vmatmul.mubr.f32.gmra.mrb[0].mxu0 %v3681
    %v4115 = vpop.f32.mrb[0].mxu0
    %v4116 = vadd.f32 0.0, %v4115
    %v4117 = vpop.f32.mrb[0].mxu0
    %4118 = vmatprep.mubr.f32.mxu0 0.0
    %4119 = vmatmul.mubr.f32.gmra.mrb[0].mxu0 %v3686
    %v4120 = vpop.f32.mrb[0].mxu0
    %v4121 = vadd.f32 0.0, %v4120
    %v4122 = vpop.f32.mrb[0].mxu0
    %4123 = vdwg.mxu0
    %4124 = vmatprep.subr.mxu0 0.0
    %4125 = vmatpush1.msra.mxu0 %v4046
    %4126 = vmatprep.subr.mxu0 0.0
    %4127 = vmatpush1.msra.mxu0 %v4051
    %4128 = vmatprep.subr.mxu0 0.0
    %4129 = vmatpush1.msra.mxu0 %v4056
    %4130 = vmatprep.subr.mxu0 0.0
    %4131 = vmatpush1.msra.mxu0 %v4061
    %4132 = vmatprep.subr.mxu0 0.0
    %4133 = vmatpush1.msra.mxu0 %v4066
    %4134 = vmatprep.subr.mxu0 0.0
    %4135 = vmatpush1.msra.mxu0 %v4071
    %4136 = vmatprep.subr.mxu0 0.0
    %4137 = vmatpush1.msra.mxu0 %v4076
    %4138 = vmatprep.subr.mxu0 0.0
    %4139 = vmatpush1.msra.mxu0 %v4081
    %4140 = vmatprep.subr.mxu0 0.0
    %4141 = vmatpush1.msra.mxu0 %v4086
    %4142 = vmatprep.subr.mxu0 0.0
    %4143 = vmatpush1.msra.mxu0 %v4091
    %4144 = vmatprep.subr.mxu0 0.0
    %4145 = vmatpush1.msra.mxu0 %v4096
    %4146 = vmatprep.subr.mxu0 0.0
    %4147 = vmatpush1.msra.mxu0 %v4101
    %4148 = vmatprep.subr.mxu0 0.0
    %4149 = vmatpush1.msra.mxu0 %v4106
    %4150 = vmatprep.subr.mxu0 0.0
    %4151 = vmatpush1.msra.mxu0 %v4111
    %4152 = vmatprep.subr.mxu0 0.0
    %4153 = vmatpush1.msra.mxu0 %v4116
    %4154 = vmatprep.subr.mxu0 0.0
    %4155 = vmatpush1.msra.mxu0 %v4121
    %4156 = vmatprep.subr.mxu0 0.0
    %4157 = vmatpush1.msra.mxu0 0.0
    %4158 = vmatprep.subr.mxu0 0.0
    %4159 = vmatpush1.msra.mxu0 0.0
    %4160 = vmatprep.subr.mxu0 0.0
    %4161 = vmatpush1.msra.mxu0 0.0
    %4162 = vmatprep.subr.mxu0 0.0
    %4163 = vmatpush1.msra.mxu0 0.0
    %4164 = vmatprep.subr.mxu0 0.0
    %4165 = vmatpush1.msra.mxu0 0.0
    %4166 = vmatprep.subr.mxu0 0.0
    %4167 = vmatpush1.msra.mxu0 0.0
    %4168 = vmatprep.subr.mxu0 0.0
    %4169 = vmatpush1.msra.mxu0 0.0
    %4170 = vmatprep.subr.mxu0 0.0
    %4171 = vmatpush1.msra.mxu0 0.0
    %4172 = vmatprep.subr.mxu0 0.0
    %4173 = vmatpush1.msra.mxu0 0.0
    %4174 = vmatprep.subr.mxu0 0.0
    %4175 = vmatpush1.msra.mxu0 0.0
    %4176 = vmatprep.subr.mxu0 0.0
    %4177 = vmatpush1.msra.mxu0 0.0
    %4178 = vmatprep.subr.mxu0 0.0
    %4179 = vmatpush1.msra.mxu0 0.0
    %4180 = vmatprep.subr.mxu0 0.0
    %4181 = vmatpush1.msra.mxu0 0.0
    %4182 = vmatprep.subr.mxu0 0.0
    %4183 = vmatpush1.msra.mxu0 0.0
    %4184 = vmatprep.subr.mxu0 0.0
    %4185 = vmatpush1.msra.mxu0 0.0
    %4186 = vmatprep.subr.mxu0 0.0
    %4187 = vmatpush1.msra.mxu0 0.0
    %4188 = vmatprep.mubr.f32.mxu0 0.0
    %4189 = vmatmul.mubr.f32.gmra.mrb[0].mxu0 %v2829
    %v4190 = vpop.f32.mrb[0].mxu0
    %v4191 = vadd.f32 0.0, %v4190
    %v4192 = vpop.f32.mrb[0].mxu0
    %4193 = vdwg.mxu0
    %s4194 = scalar_lea.vmem %s3, 16
    %4195 = vst [vmem:[%s4194] sm:$0xff] %v4191
    // Predicated region
    $region18: #{ode_solve.1} parent=1 // pred_check
      _
    $region19: #{ode_solve.1} parent=1 // pred_check_branch
      %4197 = sbr.rel (0) target = $region21
    $region20: #{ode_solve.1} parent=1 // pred_region
      _
    $region21: #{ode_solve.1} parent=1 // pred_fallthru
      _
    // Predicated region
    $region22: #{ode_solve.1} parent=1 // pred_check
      _
    $region23: #{ode_solve.1} parent=1 // pred_check_branch
      %4199 = sbr.rel (0) target = $region25
    $region24: #{ode_solve.1} parent=1 // pred_region
      _
    $region25: #{ode_solve.1} parent=1 // pred_fallthru
      _
    %4200 = vsyncpa [#allocation3], 1

</llo_original>
